<compile_context>
chip_gen: v6e
topology: v6e:2x2x1
jax: 0.10.0
libtpu: 0.0.40
codegen_flags: <defaults>
</compile_context>

<pallas_src>
import functools

import numpy as np
import jax
import jax.numpy as jnp
from jax import lax
from jax.experimental import pallas as pl
from jax.experimental.pallas import tpu as pltpu

EPS = 1e-5  # PyTorch BatchNorm2d default eps


def _round_up(v, m):
    return ((v + m - 1) // m) * m


def _cout_pad(cout):
    # v6e's MXU is 256 lanes wide: pad wide layers to 256, narrow ones to 128.
    return _round_up(cout, 256) if cout > 128 else _round_up(cout, 128)


@functools.lru_cache(maxsize=1)
def _vmem_limit_bytes():
    # ~3/4 of physical VMEM, capped at 96 MiB: aggressive on v5e/v6e (128 MiB),
    # conservative on v7x (64 MiB per TensorCore).
    try:
        cap = int(pltpu.get_tpu_info().vmem_capacity_bytes)
    except Exception:
        cap = 64 * 1024 * 1024
    return int(min(96 * 1024 * 1024, (cap * 3) // 4))


# ----------------------------- Pallas kernels ------------------------------ #

def _conv_stats_kernel(x_ref, w_ref, y_ref, s_ref, *, kh, kw, stride, hq, oh, ow):
    """Pass 1 (per image): direct conv via an unrolled tap loop.

    x_ref: (1, s*s*Hq, Wq, Cin) bf16  phase-split padded image
    w_ref: (kh*kw, Cin, Cp)     bf16  per-tap weights (Cout zero-padded to Cp)
    y_ref: (1, OH*OW, Cp)       bf16  activations (pre-BN)
    s_ref: (1, 2, Cp)           f32   per-image column sum / sum-of-squares
    """
    acc = None
    for t in range(kh * kw):
        di, dj = t // kw, t % kw
        r0 = ((di % stride) * stride + (dj % stride)) * hq + di // stride
        c0 = dj // stride
        xt = x_ref[0, r0:r0 + oh, c0:c0 + ow, :]            # (OH, OW, Cin) bf16
        xt = xt.reshape(oh * ow, xt.shape[-1])
        part = jnp.dot(xt, w_ref[t], preferred_element_type=jnp.float32)
        acc = part if acc is None else acc + part
    y_ref[0] = acc.astype(y_ref.dtype)                      # bf16 writeback
    # Stats computed from the f32 accumulator (exact), rows written directly.
    s_ref[0, 0:1, :] = jnp.sum(acc, axis=0, keepdims=True)
    s_ref[0, 1:2, :] = jnp.sum(acc * acc, axis=0, keepdims=True)


def _bn_scale_shift(stats_ref, gb_ref, count):
    """Cross-tile BN reduce + per-channel affine, computed in-kernel (f32)."""
    inv_n = 1.0 / count
    mean = jnp.sum(stats_ref[:, 0, :], axis=0, keepdims=True) * inv_n   # (1, Cp)
    ex2 = jnp.sum(stats_ref[:, 1, :], axis=0, keepdims=True) * inv_n    # (1, Cp)
    var = jnp.maximum(ex2 - mean * mean, 0.0)
    scale = gb_ref[0:1, :] * lax.rsqrt(var + EPS)
    shift = gb_ref[1:2, :] - mean * scale
    return scale, shift


def _bn_apply_kernel(stats_ref, gb_ref, y_ref, o_ref, *, count, apply_relu):
    """Pass 2: y*scale + shift (+ ReLU). Output aliases y (bf16 intermediate)."""
    scale, shift = _bn_scale_shift(stats_ref, gb_ref, count)
    out = y_ref[0].astype(jnp.float32) * scale + shift
    if apply_relu:
        out = jnp.maximum(out, 0.0)
    o_ref[0] = out.astype(o_ref.dtype)


def _bn_apply_res_relu_kernel(stats_ref, gb_ref, y_ref, r_ref, o_ref, *, count):
    """Pass 2 with fused residual add + final ReLU (f32 output)."""
    scale, shift = _bn_scale_shift(stats_ref, gb_ref, count)
    out = y_ref[0].astype(jnp.float32) * scale + shift
    out = out + r_ref[0].astype(jnp.float32)
    o_ref[0] = jnp.maximum(out, 0.0).astype(o_ref.dtype)


# --------------------------- conv + BN wrapper ------------------------------ #

def _conv_bn(x_nhwc, w_oihw, gamma, beta, *, stride, pad, residual=None,
             apply_relu=True):
    """Direct (tap-fused) conv + BatchNorm(batch stats) [+ residual] [+ ReLU].

    x_nhwc:   (N, H, W, Cin)
    residual: optional (N, OH*OW, Cp) (channel-padded); fused with final ReLU.
    Returns ((N, OH*OW, Cp), (OH, OW)); padded output channels are exact zeros.
    Output dtype is bf16 for intermediates, f32 when the residual is fused.
    """
    N, H, W, Cin = x_nhwc.shape
    Cout, Cin_w, kh, kw = w_oihw.shape
    assert Cin_w == Cin
    OH = (H + 2 * pad - kh) // stride + 1
    OW = (W + 2 * pad - kw) // stride + 1
    Mt = OH * OW
    ntaps = kh * kw
    Cp = _cout_pad(Cout)
    s = stride

    # --- phase-split input (pure relayout, 1x data, no im2col expansion) ---
    xb = x_nhwc.astype(jnp.bfloat16)
    if pad:
        xb = jnp.pad(xb, ((0, 0), (pad, pad), (pad, pad), (0, 0)))
    Hp, Wp = H + 2 * pad, W + 2 * pad
    Hq, Wq = -(-Hp // s), -(-Wp // s)
    if Hq * s != Hp or Wq * s != Wp:
        xb = jnp.pad(xb, ((0, 0), (0, Hq * s - Hp), (0, Wq * s - Wp), (0, 0)))
    # phase (p, q) image lives at rows [(p*s + q)*Hq, (p*s + q + 1)*Hq)
    xph = xb.reshape(N, Hq, s, Wq, s, Cin).transpose(0, 2, 4, 1, 3, 5)
    xph = xph.reshape(N, s * s * Hq, Wq, Cin)

    # --- weights: (taps, Cin, Cp) bf16; padded output channels are zero ---
    wt = jnp.transpose(w_oihw, (2, 3, 1, 0)).reshape(ntaps, Cin, Cout)
    wt = jnp.pad(wt.astype(jnp.bfloat16), ((0, 0), (0, 0), (0, Cp - Cout)))

    cparams = pltpu.CompilerParams(
        dimension_semantics=("parallel",),
        vmem_limit_bytes=_vmem_limit_bytes(),
    )

    # ---- pass 1: direct conv + per-image partial BN stats ----
    y, stats = pl.pallas_call(
        functools.partial(_conv_stats_kernel, kh=kh, kw=kw, stride=s,
                          hq=Hq, oh=OH, ow=OW),
        out_shape=(jax.ShapeDtypeStruct((N, Mt, Cp), jnp.bfloat16),
                   jax.ShapeDtypeStruct((N, 2, Cp), jnp.float32)),
        grid=(N,),
        in_specs=[
            pl.BlockSpec((1, s * s * Hq, Wq, Cin), lambda n: (n, 0, 0, 0)),
            pl.BlockSpec((ntaps, Cin, Cp), lambda n: (0, 0, 0)),
        ],
        out_specs=(
            pl.BlockSpec((1, Mt, Cp), lambda n: (n, 0, 0)),
            pl.BlockSpec((1, 2, Cp), lambda n: (n, 0, 0)),
        ),
        compiler_params=cparams,
    )(xph, wt)

    # gamma/beta padded with zeros -> padded channels get scale=0, shift=0.
    gb = jnp.stack([jnp.pad(gamma.astype(jnp.float32), (0, Cp - Cout)),
                    jnp.pad(beta.astype(jnp.float32), (0, Cp - Cout))])

    count = float(N * Mt)
    in_specs = [
        pl.BlockSpec((N, 2, Cp), lambda n: (0, 0, 0)),
        pl.BlockSpec((2, Cp), lambda n: (0, 0)),
        pl.BlockSpec((1, Mt, Cp), lambda n: (n, 0, 0)),
    ]
    args = [stats, gb, y]
    if residual is None:
        kernel = functools.partial(_bn_apply_kernel, count=count,
                                   apply_relu=apply_relu)
        out_dtype = jnp.bfloat16
        aliases = {2: 0}  # write normalized result in place of y (same shape/dtype)
    else:
        assert residual.shape == (N, Mt, Cp)
        in_specs.append(pl.BlockSpec((1, Mt, Cp), lambda n: (n, 0, 0)))
        args.append(residual)
        kernel = functools.partial(_bn_apply_res_relu_kernel, count=count)
        out_dtype = jnp.float32  # final ResBlock output stays f32
        aliases = {}

    out = pl.pallas_call(
        kernel,
        out_shape=jax.ShapeDtypeStruct((N, Mt, Cp), out_dtype),
        grid=(N,),
        in_specs=in_specs,
        out_specs=pl.BlockSpec((1, Mt, Cp), lambda n: (n, 0, 0)),
        input_output_aliases=aliases,
        compiler_params=cparams,
    )(*args)
    return out, (OH, OW)


# ------------------------------ forward pass -------------------------------- #

def init_resblock_params(key, in_ch, out_ch, ex_channel):
    ks = jax.random.split(key, 9)

    def conv_w(k, cout, cin, kh, kw):
        fan_in = cin * kh * kw
        return jax.random.normal(k, (cout, cin, kh, kw), jnp.float32) / np.sqrt(fan_in)

    p = {
        "w1": conv_w(ks[0], out_ch, in_ch, 3, 3),
        "g1": 1.0 + 0.1 * jax.random.normal(ks[1], (out_ch,), jnp.float32),
        "b1": 0.1 * jax.random.normal(ks[2], (out_ch,), jnp.float32),
        "w2": conv_w(ks[3], out_ch, out_ch, 3, 3),
        "g2": 1.0 + 0.1 * jax.random.normal(ks[4], (out_ch,), jnp.float32),
        "b2": 0.1 * jax.random.normal(ks[5], (out_ch,), jnp.float32),
    }
    if ex_channel:
        p["wp"] = conv_w(ks[6], out_ch, in_ch, 1, 1)
        p["gp"] = 1.0 + 0.1 * jax.random.normal(ks[7], (out_ch,), jnp.float32)
        p["bp"] = 0.1 * jax.random.normal(ks[8], (out_ch,), jnp.float32)
    return p


def resblock_forward(x_nchw, params, *, ex_channel):
    """Pallas implementation of ResBlock.forward. Input/output are NCHW f32."""
    x = jnp.transpose(x_nchw, (0, 2, 3, 1)).astype(jnp.float32)  # NCHW -> NHWC
    N, H, W, Cin = x.shape
    c1 = params["w1"].shape[0]
    c2 = params["w2"].shape[0]
    cp2 = _cout_pad(c2)

    if ex_channel:
        # conv_with: 3x3 s2 -> BN -> ReLU -> 3x3 s1 -> BN ; + projection ; ReLU
        h1, (oh1, ow1) = _conv_bn(x, params["w1"], params["g1"], params["b1"],
                                  stride=2, pad=1, apply_relu=True)
        h1_img = h1[:, :, :c1].reshape(N, oh1, ow1, c1)           # bf16 NHWC

        # 1x1 stride-2 projection == 1x1 stride-1 conv on the subsampled input.
        x_sub = x[:, ::2, ::2, :]
        proj, _ = _conv_bn(x_sub, params["wp"], params["gp"], params["bp"],
                           stride=1, pad=0, apply_relu=False)     # bf16 residual

        out, (oh2, ow2) = _conv_bn(h1_img, params["w2"], params["g2"],
                                   params["b2"], stride=1, pad=1, residual=proj)
    else:
        # conv_non: 3x3 s1 -> BN -> ReLU -> 3x3 s1 -> BN ; + identity ; ReLU
        assert Cin == c2, "identity skip requires in_ch == out_ch (stride 1)"
        h1, (oh1, ow1) = _conv_bn(x, params["w1"], params["g1"], params["b1"],
                                  stride=1, pad=1, apply_relu=True)
        h1_img = h1[:, :, :c1].reshape(N, oh1, ow1, c1)

        identity = jnp.pad(x.reshape(N, H * W, Cin),
                           ((0, 0), (0, 0), (0, cp2 - Cin)))       # f32 residual
        out, (oh2, ow2) = _conv_bn(h1_img, params["w2"], params["g2"],
                                   params["b2"], stride=1, pad=1,
                                   residual=identity)

    out = out[:, :, :c2].reshape(N, oh2, ow2, c2)
    return jnp.transpose(out, (0, 3, 1, 2))                        # NHWC -> NCHW


# ------------------------- Pure-JAX reference ------------------------------ #

def _ref_conv(x, w, stride, pad):
    return lax.conv_general_dilated(
        x, w, (stride, stride), [(pad, pad), (pad, pad)],
        dimension_numbers=("NCHW", "OIHW", "NCHW"),
        precision=lax.Precision.HIGHEST,
    )


def _ref_bn(y, g, b):
    mean = y.mean(axis=(0, 2, 3), keepdims=True)
    var = ((y - mean) ** 2).mean(axis=(0, 2, 3), keepdims=True)
    return (y - mean) / jnp.sqrt(var + EPS) * g.reshape(1, -1, 1, 1) + b.reshape(1, -1, 1, 1)


def resblock_ref(x, params, *, ex_channel):
    if ex_channel:
        h = jnp.maximum(_ref_bn(_ref_conv(x, params["w1"], 2, 1), params["g1"], params["b1"]), 0.0)
        h = _ref_bn(_ref_conv(h, params["w2"], 1, 1), params["g2"], params["b2"])
        proj = _ref_bn(_ref_conv(x, params["wp"], 2, 0), params["gp"], params["bp"])
        return jnp.maximum(h + proj, 0.0)
    h = jnp.maximum(_ref_bn(_ref_conv(x, params["w1"], 1, 1), params["g1"], params["b1"]), 0.0)
    h = _ref_bn(_ref_conv(h, params["w2"], 1, 1), params["g2"], params["b2"])
    return jnp.maximum(h + x, 0.0)


# --------------------------------- main ------------------------------------ #

if __name__ == "__main__":
    key = jax.random.PRNGKey(0)
    kx, kp1, kp2 = jax.random.split(key, 3)

    # NCHW input, matching the PyTorch module's convention.
    x = jax.random.normal(kx, (2, 4, 16, 16), jnp.float32)

    # Tolerances reflect bf16 MXU inputs + bf16 intermediates vs f32 reference.
    TOL = dict(rtol=3e-2, atol=3e-2)

    # Path 1: ex_channel=False (identity skip; in_ch == out_ch)
    params_id = init_resblock_params(kp1, 4, 4, ex_channel=False)
    fwd_id = jax.jit(functools.partial(resblock_forward, ex_channel=False))
    out_id = fwd_id(x, params_id)
    jax.block_until_ready(out_id)
    assert out_id.shape == (2, 4, 16, 16)
    np.testing.assert_allclose(
        np.asarray(out_id),
        np.asarray(resblock_ref(x, params_id, ex_channel=False)),
        **TOL,
    )

    # Path 2: ex_channel=True (stride-2 + 1x1 projection skip; channels 4 -> 8)
    params_ex = init_resblock_params(kp2, 4, 8, ex_channel=True)
    fwd_ex = jax.jit(functools.partial(resblock_forward, ex_channel=True))
    out_ex = fwd_ex(x, params_ex)
    jax.block_until_ready(out_ex)
    assert out_ex.shape == (2, 8, 8, 8)
    np.testing.assert_allclose(
        np.asarray(out_ex),
        np.asarray(resblock_ref(x, params_ex, ex_channel=True)),
        **TOL,
    )

    print("KERNEL_OK")
</pallas_src>

<mosaic_0001>
module attributes {stable_mosaic.version = 11 : i64} {
  func.func @_conv_stats_kernel(%arg0: i32, %arg1: memref<1x18x18x4xbf16, #tpu.memory_space<vmem>>, %arg2: memref<9x4x128xbf16, #tpu.memory_space<vmem>>, %arg3: memref<1x256x128xbf16, #tpu.memory_space<vmem>>, %arg4: memref<1x2x128xf32, #tpu.memory_space<vmem>>) attributes {dimension_semantics = [#tpu.dimension_semantics<parallel>], iteration_bounds = array<i64: 2>, scalar_prefetch = 0 : i64, scratch_operands = 0 : i64, tpu.core_type = #tpu.core_type<tc>, window_params = [{transform_indices = @transform_0, window_bounds = array<i64: 1, 18, 18, 4>}, {pipeline_mode = #tpu.pipeline_mode<synchronous>, transform_indices = @transform_1, window_bounds = array<i64: 9, 4, 128>}, {transform_indices = @transform_2, window_bounds = array<i64: 1, 256, 128>}, {transform_indices = @transform_3, window_bounds = array<i64: 1, 2, 128>}]} {
    %c0 = arith.constant 0 : index
    %c0_0 = arith.constant 0 : index
    %c0_1 = arith.constant 0 : index
    %c0_2 = arith.constant 0 : index
    %0 = vector.load %arg1[%c0, %c0_0, %c0_1, %c0_2] : memref<1x18x18x4xbf16, #tpu.memory_space<vmem>>, vector<1x16x16x4xbf16>
    %1 = vector.shape_cast %0 : vector<1x16x16x4xbf16> to vector<16x16x4xbf16>
    %2 = vector.shape_cast %1 : vector<16x16x4xbf16> to vector<256x4xbf16>
    %c0_3 = arith.constant 0 : index
    %c0_4 = arith.constant 0 : index
    %c0_5 = arith.constant 0 : index
    %3 = vector.load %arg2[%c0_3, %c0_4, %c0_5] : memref<9x4x128xbf16, #tpu.memory_space<vmem>>, vector<1x4x128xbf16>
    %4 = vector.shape_cast %3 : vector<1x4x128xbf16> to vector<4x128xbf16>
    %cst = arith.constant dense<0.000000e+00> : vector<256x128xf32>
    %5 = tpu.matmul %2, %4, %cst {dimension_numbers = #tpu.dot_dimension_numbers<[1], [0], [0], [1], [0, 0, 1, 1], [], []>} : vector<256x4xbf16>, vector<4x128xbf16>, vector<256x128xf32> -> vector<256x128xf32>
    %c0_6 = arith.constant 0 : index
    %c0_7 = arith.constant 0 : index
    %c1 = arith.constant 1 : index
    %c0_8 = arith.constant 0 : index
    %6 = vector.load %arg1[%c0_6, %c0_7, %c1, %c0_8] : memref<1x18x18x4xbf16, #tpu.memory_space<vmem>>, vector<1x16x16x4xbf16>
    %7 = vector.shape_cast %6 : vector<1x16x16x4xbf16> to vector<16x16x4xbf16>
    %8 = vector.shape_cast %7 : vector<16x16x4xbf16> to vector<256x4xbf16>
    %c1_9 = arith.constant 1 : index
    %c0_10 = arith.constant 0 : index
    %c0_11 = arith.constant 0 : index
    %9 = vector.load %arg2[%c1_9, %c0_10, %c0_11] : memref<9x4x128xbf16, #tpu.memory_space<vmem>>, vector<1x4x128xbf16>
    %10 = vector.shape_cast %9 : vector<1x4x128xbf16> to vector<4x128xbf16>
    %cst_12 = arith.constant dense<0.000000e+00> : vector<256x128xf32>
    %11 = tpu.matmul %8, %10, %cst_12 {dimension_numbers = #tpu.dot_dimension_numbers<[1], [0], [0], [1], [0, 0, 1, 1], [], []>} : vector<256x4xbf16>, vector<4x128xbf16>, vector<256x128xf32> -> vector<256x128xf32>
    %12 = arith.addf %5, %11 : vector<256x128xf32>
    %c0_13 = arith.constant 0 : index
    %c0_14 = arith.constant 0 : index
    %c2 = arith.constant 2 : index
    %c0_15 = arith.constant 0 : index
    %13 = vector.load %arg1[%c0_13, %c0_14, %c2, %c0_15] : memref<1x18x18x4xbf16, #tpu.memory_space<vmem>>, vector<1x16x16x4xbf16>
    %14 = vector.shape_cast %13 : vector<1x16x16x4xbf16> to vector<16x16x4xbf16>
    %15 = vector.shape_cast %14 : vector<16x16x4xbf16> to vector<256x4xbf16>
    %c2_16 = arith.constant 2 : index
    %c0_17 = arith.constant 0 : index
    %c0_18 = arith.constant 0 : index
    %16 = vector.load %arg2[%c2_16, %c0_17, %c0_18] : memref<9x4x128xbf16, #tpu.memory_space<vmem>>, vector<1x4x128xbf16>
    %17 = vector.shape_cast %16 : vector<1x4x128xbf16> to vector<4x128xbf16>
    %cst_19 = arith.constant dense<0.000000e+00> : vector<256x128xf32>
    %18 = tpu.matmul %15, %17, %cst_19 {dimension_numbers = #tpu.dot_dimension_numbers<[1], [0], [0], [1], [0, 0, 1, 1], [], []>} : vector<256x4xbf16>, vector<4x128xbf16>, vector<256x128xf32> -> vector<256x128xf32>
    %19 = arith.addf %12, %18 : vector<256x128xf32>
    %c0_20 = arith.constant 0 : index
    %c1_21 = arith.constant 1 : index
    %c0_22 = arith.constant 0 : index
    %c0_23 = arith.constant 0 : index
    %20 = vector.load %arg1[%c0_20, %c1_21, %c0_22, %c0_23] : memref<1x18x18x4xbf16, #tpu.memory_space<vmem>>, vector<1x16x16x4xbf16>
    %21 = vector.shape_cast %20 : vector<1x16x16x4xbf16> to vector<16x16x4xbf16>
    %22 = vector.shape_cast %21 : vector<16x16x4xbf16> to vector<256x4xbf16>
    %c3 = arith.constant 3 : index
    %c0_24 = arith.constant 0 : index
    %c0_25 = arith.constant 0 : index
    %23 = vector.load %arg2[%c3, %c0_24, %c0_25] : memref<9x4x128xbf16, #tpu.memory_space<vmem>>, vector<1x4x128xbf16>
    %24 = vector.shape_cast %23 : vector<1x4x128xbf16> to vector<4x128xbf16>
    %cst_26 = arith.constant dense<0.000000e+00> : vector<256x128xf32>
    %25 = tpu.matmul %22, %24, %cst_26 {dimension_numbers = #tpu.dot_dimension_numbers<[1], [0], [0], [1], [0, 0, 1, 1], [], []>} : vector<256x4xbf16>, vector<4x128xbf16>, vector<256x128xf32> -> vector<256x128xf32>
    %26 = arith.addf %19, %25 : vector<256x128xf32>
    %c0_27 = arith.constant 0 : index
    %c1_28 = arith.constant 1 : index
    %c1_29 = arith.constant 1 : index
    %c0_30 = arith.constant 0 : index
    %27 = vector.load %arg1[%c0_27, %c1_28, %c1_29, %c0_30] : memref<1x18x18x4xbf16, #tpu.memory_space<vmem>>, vector<1x16x16x4xbf16>
    %28 = vector.shape_cast %27 : vector<1x16x16x4xbf16> to vector<16x16x4xbf16>
    %29 = vector.shape_cast %28 : vector<16x16x4xbf16> to vector<256x4xbf16>
    %c4 = arith.constant 4 : index
    %c0_31 = arith.constant 0 : index
    %c0_32 = arith.constant 0 : index
    %30 = vector.load %arg2[%c4, %c0_31, %c0_32] : memref<9x4x128xbf16, #tpu.memory_space<vmem>>, vector<1x4x128xbf16>
    %31 = vector.shape_cast %30 : vector<1x4x128xbf16> to vector<4x128xbf16>
    %cst_33 = arith.constant dense<0.000000e+00> : vector<256x128xf32>
    %32 = tpu.matmul %29, %31, %cst_33 {dimension_numbers = #tpu.dot_dimension_numbers<[1], [0], [0], [1], [0, 0, 1, 1], [], []>} : vector<256x4xbf16>, vector<4x128xbf16>, vector<256x128xf32> -> vector<256x128xf32>
    %33 = arith.addf %26, %32 : vector<256x128xf32>
    %c0_34 = arith.constant 0 : index
    %c1_35 = arith.constant 1 : index
    %c2_36 = arith.constant 2 : index
    %c0_37 = arith.constant 0 : index
    %34 = vector.load %arg1[%c0_34, %c1_35, %c2_36, %c0_37] : memref<1x18x18x4xbf16, #tpu.memory_space<vmem>>, vector<1x16x16x4xbf16>
    %35 = vector.shape_cast %34 : vector<1x16x16x4xbf16> to vector<16x16x4xbf16>
    %36 = vector.shape_cast %35 : vector<16x16x4xbf16> to vector<256x4xbf16>
    %c5 = arith.constant 5 : index
    %c0_38 = arith.constant 0 : index
    %c0_39 = arith.constant 0 : index
    %37 = vector.load %arg2[%c5, %c0_38, %c0_39] : memref<9x4x128xbf16, #tpu.memory_space<vmem>>, vector<1x4x128xbf16>
    %38 = vector.shape_cast %37 : vector<1x4x128xbf16> to vector<4x128xbf16>
    %cst_40 = arith.constant dense<0.000000e+00> : vector<256x128xf32>
    %39 = tpu.matmul %36, %38, %cst_40 {dimension_numbers = #tpu.dot_dimension_numbers<[1], [0], [0], [1], [0, 0, 1, 1], [], []>} : vector<256x4xbf16>, vector<4x128xbf16>, vector<256x128xf32> -> vector<256x128xf32>
    %40 = arith.addf %33, %39 : vector<256x128xf32>
    %c0_41 = arith.constant 0 : index
    %c2_42 = arith.constant 2 : index
    %c0_43 = arith.constant 0 : index
    %c0_44 = arith.constant 0 : index
    %41 = vector.load %arg1[%c0_41, %c2_42, %c0_43, %c0_44] : memref<1x18x18x4xbf16, #tpu.memory_space<vmem>>, vector<1x16x16x4xbf16>
    %42 = vector.shape_cast %41 : vector<1x16x16x4xbf16> to vector<16x16x4xbf16>
    %43 = vector.shape_cast %42 : vector<16x16x4xbf16> to vector<256x4xbf16>
    %c6 = arith.constant 6 : index
    %c0_45 = arith.constant 0 : index
    %c0_46 = arith.constant 0 : index
    %44 = vector.load %arg2[%c6, %c0_45, %c0_46] : memref<9x4x128xbf16, #tpu.memory_space<vmem>>, vector<1x4x128xbf16>
    %45 = vector.shape_cast %44 : vector<1x4x128xbf16> to vector<4x128xbf16>
    %cst_47 = arith.constant dense<0.000000e+00> : vector<256x128xf32>
    %46 = tpu.matmul %43, %45, %cst_47 {dimension_numbers = #tpu.dot_dimension_numbers<[1], [0], [0], [1], [0, 0, 1, 1], [], []>} : vector<256x4xbf16>, vector<4x128xbf16>, vector<256x128xf32> -> vector<256x128xf32>
    %47 = arith.addf %40, %46 : vector<256x128xf32>
    %c0_48 = arith.constant 0 : index
    %c2_49 = arith.constant 2 : index
    %c1_50 = arith.constant 1 : index
    %c0_51 = arith.constant 0 : index
    %48 = vector.load %arg1[%c0_48, %c2_49, %c1_50, %c0_51] : memref<1x18x18x4xbf16, #tpu.memory_space<vmem>>, vector<1x16x16x4xbf16>
    %49 = vector.shape_cast %48 : vector<1x16x16x4xbf16> to vector<16x16x4xbf16>
    %50 = vector.shape_cast %49 : vector<16x16x4xbf16> to vector<256x4xbf16>
    %c7 = arith.constant 7 : index
    %c0_52 = arith.constant 0 : index
    %c0_53 = arith.constant 0 : index
    %51 = vector.load %arg2[%c7, %c0_52, %c0_53] : memref<9x4x128xbf16, #tpu.memory_space<vmem>>, vector<1x4x128xbf16>
    %52 = vector.shape_cast %51 : vector<1x4x128xbf16> to vector<4x128xbf16>
    %cst_54 = arith.constant dense<0.000000e+00> : vector<256x128xf32>
    %53 = tpu.matmul %50, %52, %cst_54 {dimension_numbers = #tpu.dot_dimension_numbers<[1], [0], [0], [1], [0, 0, 1, 1], [], []>} : vector<256x4xbf16>, vector<4x128xbf16>, vector<256x128xf32> -> vector<256x128xf32>
    %54 = arith.addf %47, %53 : vector<256x128xf32>
    %c0_55 = arith.constant 0 : index
    %c2_56 = arith.constant 2 : index
    %c2_57 = arith.constant 2 : index
    %c0_58 = arith.constant 0 : index
    %55 = vector.load %arg1[%c0_55, %c2_56, %c2_57, %c0_58] : memref<1x18x18x4xbf16, #tpu.memory_space<vmem>>, vector<1x16x16x4xbf16>
    %56 = vector.shape_cast %55 : vector<1x16x16x4xbf16> to vector<16x16x4xbf16>
    %57 = vector.shape_cast %56 : vector<16x16x4xbf16> to vector<256x4xbf16>
    %c8 = arith.constant 8 : index
    %c0_59 = arith.constant 0 : index
    %c0_60 = arith.constant 0 : index
    %58 = vector.load %arg2[%c8, %c0_59, %c0_60] : memref<9x4x128xbf16, #tpu.memory_space<vmem>>, vector<1x4x128xbf16>
    %59 = vector.shape_cast %58 : vector<1x4x128xbf16> to vector<4x128xbf16>
    %cst_61 = arith.constant dense<0.000000e+00> : vector<256x128xf32>
    %60 = tpu.matmul %57, %59, %cst_61 {dimension_numbers = #tpu.dot_dimension_numbers<[1], [0], [0], [1], [0, 0, 1, 1], [], []>} : vector<256x4xbf16>, vector<4x128xbf16>, vector<256x128xf32> -> vector<256x128xf32>
    %61 = arith.addf %54, %60 : vector<256x128xf32>
    %62 = arith.truncf %61 : vector<256x128xf32> to vector<256x128xbf16>
    %c0_62 = arith.constant 0 : index
    %c0_63 = arith.constant 0 : index
    %c0_64 = arith.constant 0 : index
    %63 = vector.load %arg3[%c0_62, %c0_63, %c0_64] : memref<1x256x128xbf16, #tpu.memory_space<vmem>>, vector<1x256x128xbf16>
    %64 = vector.shape_cast %63 : vector<1x256x128xbf16> to vector<256x128xbf16>
    %65 = vector.shape_cast %62 : vector<256x128xbf16> to vector<1x256x128xbf16>
    tpu.vector_store %arg3[%c0_62, %c0_63, %c0_64], %65 {strides = array<i32>} : memref<1x256x128xbf16, #tpu.memory_space<vmem>>, vector<1x256x128xbf16>,
    %cst_65 = arith.constant dense<0.000000e+00> : vector<128xf32>
    %66 = vector.multi_reduction <add>, %61, %cst_65 [0] : vector<256x128xf32> to vector<128xf32>
    %67 = vector.shape_cast %66 : vector<128xf32> to vector<1x128xf32>
    %c0_66 = arith.constant 0 : index
    %c0_67 = arith.constant 0 : index
    %c0_68 = arith.constant 0 : index
    %68 = vector.load %arg4[%c0_66, %c0_67, %c0_68] : memref<1x2x128xf32, #tpu.memory_space<vmem>>, vector<1x1x128xf32>
    %69 = vector.shape_cast %68 : vector<1x1x128xf32> to vector<1x128xf32>
    %70 = vector.shape_cast %67 : vector<1x128xf32> to vector<1x1x128xf32>
    tpu.vector_store %arg4[%c0_66, %c0_67, %c0_68], %70 {strides = array<i32>} : memref<1x2x128xf32, #tpu.memory_space<vmem>>, vector<1x1x128xf32>,
    %71 = arith.mulf %61, %61 : vector<256x128xf32>
    %cst_69 = arith.constant dense<0.000000e+00> : vector<128xf32>
    %72 = vector.multi_reduction <add>, %71, %cst_69 [0] : vector<256x128xf32> to vector<128xf32>
    %73 = vector.shape_cast %72 : vector<128xf32> to vector<1x128xf32>
    %c0_70 = arith.constant 0 : index
    %c1_71 = arith.constant 1 : index
    %c0_72 = arith.constant 0 : index
    %74 = vector.load %arg4[%c0_70, %c1_71, %c0_72] : memref<1x2x128xf32, #tpu.memory_space<vmem>>, vector<1x1x128xf32>
    %75 = vector.shape_cast %74 : vector<1x1x128xf32> to vector<1x128xf32>
    %76 = vector.shape_cast %73 : vector<1x128xf32> to vector<1x1x128xf32>
    tpu.vector_store %arg4[%c0_70, %c1_71, %c0_72], %76 {strides = array<i32>} : memref<1x2x128xf32, #tpu.memory_space<vmem>>, vector<1x1x128xf32>,
    return
  }
  func.func @transform_0(%arg0: i32) -> (i32, i32, i32, i32) {
    %c0_i32 = arith.constant 0 : i32
    %c0_i32_0 = arith.constant 0 : i32
    %c0_i32_1 = arith.constant 0 : i32
    %c0_i32_2 = arith.constant 0 : i32
    return %arg0, %c0_i32, %c0_i32_0, %c0_i32_1 : i32, i32, i32, i32
  }
  func.func @transform_1(%arg0: i32) -> (i32, i32, i32) {
    %c0_i32 = arith.constant 0 : i32
    %c0_i32_0 = arith.constant 0 : i32
    %c0_i32_1 = arith.constant 0 : i32
    %c0_i32_2 = arith.constant 0 : i32
    return %c0_i32, %c0_i32_0, %c0_i32_1 : i32, i32, i32
  }
  func.func @transform_2(%arg0: i32) -> (i32, i32, i32) {
    %c0_i32 = arith.constant 0 : i32
    %c0_i32_0 = arith.constant 0 : i32
    %c0_i32_1 = arith.constant 0 : i32
    return %arg0, %c0_i32, %c0_i32_0 : i32, i32, i32
  }
  func.func @transform_3(%arg0: i32) -> (i32, i32, i32) {
    %c0_i32 = arith.constant 0 : i32
    %c0_i32_0 = arith.constant 0 : i32
    %c0_i32_1 = arith.constant 0 : i32
    return %arg0, %c0_i32, %c0_i32_0 : i32, i32, i32
  }
}

module attributes {stable_mosaic.version = 11 : i64} {
  func.func @_bn_apply_kernel(%arg0: i32, %arg1: memref<2x2x128xf32, #tpu.memory_space<vmem>>, %arg2: memref<2x128xf32, #tpu.memory_space<vmem>>, %arg3: memref<1x256x128xbf16, #tpu.memory_space<vmem>>, %arg4: memref<1x256x128xbf16, #tpu.memory_space<vmem>>) attributes {dimension_semantics = [#tpu.dimension_semantics<parallel>], iteration_bounds = array<i64: 2>, scalar_prefetch = 0 : i64, scratch_operands = 0 : i64, tpu.core_type = #tpu.core_type<tc>, window_params = [{pipeline_mode = #tpu.pipeline_mode<synchronous>, transform_indices = @transform_0, window_bounds = array<i64: 2, 2, 128>}, {pipeline_mode = #tpu.pipeline_mode<synchronous>, transform_indices = @transform_1, window_bounds = array<i64: 2, 128>}, {transform_indices = @transform_2, window_bounds = array<i64: 1, 256, 128>}, {transform_indices = @transform_3, window_bounds = array<i64: 1, 256, 128>}]} {
    %c0 = arith.constant 0 : index
    %c0_0 = arith.constant 0 : index
    %c0_1 = arith.constant 0 : index
    %0 = vector.load %arg1[%c0, %c0_0, %c0_1] : memref<2x2x128xf32, #tpu.memory_space<vmem>>, vector<2x1x128xf32>
    %1 = vector.shape_cast %0 : vector<2x1x128xf32> to vector<2x128xf32>
    %cst = arith.constant dense<0.000000e+00> : vector<128xf32>
    %2 = vector.multi_reduction <add>, %1, %cst [0] : vector<2x128xf32> to vector<128xf32>
    %3 = vector.shape_cast %2 : vector<128xf32> to vector<1x128xf32>
    %cst_2 = arith.constant 0.001953125 : f32
    %4 = vector.broadcast %cst_2 : f32 to vector<1x128xf32>
    %5 = arith.mulf %3, %4 : vector<1x128xf32>
    %c0_3 = arith.constant 0 : index
    %c1 = arith.constant 1 : index
    %c0_4 = arith.constant 0 : index
    %6 = vector.load %arg1[%c0_3, %c1, %c0_4] : memref<2x2x128xf32, #tpu.memory_space<vmem>>, vector<2x1x128xf32>
    %7 = vector.shape_cast %6 : vector<2x1x128xf32> to vector<2x128xf32>
    %cst_5 = arith.constant dense<0.000000e+00> : vector<128xf32>
    %8 = vector.multi_reduction <add>, %7, %cst_5 [0] : vector<2x128xf32> to vector<128xf32>
    %9 = vector.shape_cast %8 : vector<128xf32> to vector<1x128xf32>
    %cst_6 = arith.constant 0.001953125 : f32
    %10 = vector.broadcast %cst_6 : f32 to vector<1x128xf32>
    %11 = arith.mulf %9, %10 : vector<1x128xf32>
    %12 = arith.mulf %5, %5 : vector<1x128xf32>
    %13 = arith.subf %11, %12 : vector<1x128xf32>
    %cst_7 = arith.constant 0.000000e+00 : f32
    %14 = vector.broadcast %cst_7 : f32 to vector<1x128xf32>
    %15 = arith.maximumf %13, %14 : vector<1x128xf32>
    %c0_8 = arith.constant 0 : index
    %c0_9 = arith.constant 0 : index
    %16 = vector.load %arg2[%c0_8, %c0_9] : memref<2x128xf32, #tpu.memory_space<vmem>>, vector<1x128xf32>
    %cst_10 = arith.constant 9.99999974E-6 : f32
    %17 = vector.broadcast %cst_10 : f32 to vector<1x128xf32>
    %18 = arith.addf %15, %17 : vector<1x128xf32>
    %19 = math.rsqrt %18 : vector<1x128xf32>
    %20 = arith.mulf %16, %19 : vector<1x128xf32>
    %c1_11 = arith.constant 1 : index
    %c0_12 = arith.constant 0 : index
    %21 = vector.load %arg2[%c1_11, %c0_12] : memref<2x128xf32, #tpu.memory_space<vmem>>, vector<1x128xf32>
    %22 = arith.mulf %5, %20 : vector<1x128xf32>
    %23 = arith.subf %21, %22 : vector<1x128xf32>
    %c0_13 = arith.constant 0 : index
    %c0_14 = arith.constant 0 : index
    %c0_15 = arith.constant 0 : index
    %24 = vector.load %arg3[%c0_13, %c0_14, %c0_15] : memref<1x256x128xbf16, #tpu.memory_space<vmem>>, vector<1x256x128xbf16>
    %25 = vector.shape_cast %24 : vector<1x256x128xbf16> to vector<256x128xbf16>
    %26 = arith.extf %25 : vector<256x128xbf16> to vector<256x128xf32>
    %27 = vector.broadcast %20 : vector<1x128xf32> to vector<256x128xf32>
    %28 = arith.mulf %26, %27 : vector<256x128xf32>
    %29 = vector.broadcast %23 : vector<1x128xf32> to vector<256x128xf32>
    %30 = arith.addf %28, %29 : vector<256x128xf32>
    %cst_16 = arith.constant 0.000000e+00 : f32
    %31 = vector.broadcast %cst_16 : f32 to vector<256x128xf32>
    %32 = arith.maximumf %30, %31 : vector<256x128xf32>
    %33 = arith.truncf %32 : vector<256x128xf32> to vector<256x128xbf16>
    %c0_17 = arith.constant 0 : index
    %c0_18 = arith.constant 0 : index
    %c0_19 = arith.constant 0 : index
    %34 = vector.load %arg4[%c0_17, %c0_18, %c0_19] : memref<1x256x128xbf16, #tpu.memory_space<vmem>>, vector<1x256x128xbf16>
    %35 = vector.shape_cast %34 : vector<1x256x128xbf16> to vector<256x128xbf16>
    %36 = vector.shape_cast %33 : vector<256x128xbf16> to vector<1x256x128xbf16>
    tpu.vector_store %arg4[%c0_17, %c0_18, %c0_19], %36 {strides = array<i32>} : memref<1x256x128xbf16, #tpu.memory_space<vmem>>, vector<1x256x128xbf16>,
    return
  }
  func.func @transform_0(%arg0: i32) -> (i32, i32, i32) {
    %c0_i32 = arith.constant 0 : i32
    %c0_i32_0 = arith.constant 0 : i32
    %c0_i32_1 = arith.constant 0 : i32
    %c0_i32_2 = arith.constant 0 : i32
    return %c0_i32, %c0_i32_0, %c0_i32_1 : i32, i32, i32
  }
  func.func @transform_1(%arg0: i32) -> (i32, i32) {
    %c0_i32 = arith.constant 0 : i32
    %c0_i32_0 = arith.constant 0 : i32
    %c0_i32_1 = arith.constant 0 : i32
    return %c0_i32, %c0_i32_0 : i32, i32
  }
  func.func @transform_2(%arg0: i32) -> (i32, i32, i32) {
    %c0_i32 = arith.constant 0 : i32
    %c0_i32_0 = arith.constant 0 : i32
    %c0_i32_1 = arith.constant 0 : i32
    return %arg0, %c0_i32, %c0_i32_0 : i32, i32, i32
  }
  func.func @transform_3(%arg0: i32) -> (i32, i32, i32) {
    %c0_i32 = arith.constant 0 : i32
    %c0_i32_0 = arith.constant 0 : i32
    %c0_i32_1 = arith.constant 0 : i32
    return %arg0, %c0_i32, %c0_i32_0 : i32, i32, i32
  }
}

module attributes {stable_mosaic.version = 11 : i64} {
  func.func @_bn_apply_res_relu_kernel(%arg0: i32, %arg1: memref<2x2x128xf32, #tpu.memory_space<vmem>>, %arg2: memref<2x128xf32, #tpu.memory_space<vmem>>, %arg3: memref<1x256x128xbf16, #tpu.memory_space<vmem>>, %arg4: memref<1x256x128xf32, #tpu.memory_space<vmem>>, %arg5: memref<1x256x128xf32, #tpu.memory_space<vmem>>) attributes {dimension_semantics = [#tpu.dimension_semantics<parallel>], iteration_bounds = array<i64: 2>, scalar_prefetch = 0 : i64, scratch_operands = 0 : i64, tpu.core_type = #tpu.core_type<tc>, window_params = [{pipeline_mode = #tpu.pipeline_mode<synchronous>, transform_indices = @transform_0, window_bounds = array<i64: 2, 2, 128>}, {pipeline_mode = #tpu.pipeline_mode<synchronous>, transform_indices = @transform_1, window_bounds = array<i64: 2, 128>}, {transform_indices = @transform_2, window_bounds = array<i64: 1, 256, 128>}, {transform_indices = @transform_3, window_bounds = array<i64: 1, 256, 128>}, {transform_indices = @transform_4, window_bounds = array<i64: 1, 256, 128>}]} {
    %c0 = arith.constant 0 : index
    %c0_0 = arith.constant 0 : index
    %c0_1 = arith.constant 0 : index
    %0 = vector.load %arg1[%c0, %c0_0, %c0_1] : memref<2x2x128xf32, #tpu.memory_space<vmem>>, vector<2x1x128xf32>
    %1 = vector.shape_cast %0 : vector<2x1x128xf32> to vector<2x128xf32>
    %cst = arith.constant dense<0.000000e+00> : vector<128xf32>
    %2 = vector.multi_reduction <add>, %1, %cst [0] : vector<2x128xf32> to vector<128xf32>
    %3 = vector.shape_cast %2 : vector<128xf32> to vector<1x128xf32>
    %cst_2 = arith.constant 0.001953125 : f32
    %4 = vector.broadcast %cst_2 : f32 to vector<1x128xf32>
    %5 = arith.mulf %3, %4 : vector<1x128xf32>
    %c0_3 = arith.constant 0 : index
    %c1 = arith.constant 1 : index
    %c0_4 = arith.constant 0 : index
    %6 = vector.load %arg1[%c0_3, %c1, %c0_4] : memref<2x2x128xf32, #tpu.memory_space<vmem>>, vector<2x1x128xf32>
    %7 = vector.shape_cast %6 : vector<2x1x128xf32> to vector<2x128xf32>
    %cst_5 = arith.constant dense<0.000000e+00> : vector<128xf32>
    %8 = vector.multi_reduction <add>, %7, %cst_5 [0] : vector<2x128xf32> to vector<128xf32>
    %9 = vector.shape_cast %8 : vector<128xf32> to vector<1x128xf32>
    %cst_6 = arith.constant 0.001953125 : f32
    %10 = vector.broadcast %cst_6 : f32 to vector<1x128xf32>
    %11 = arith.mulf %9, %10 : vector<1x128xf32>
    %12 = arith.mulf %5, %5 : vector<1x128xf32>
    %13 = arith.subf %11, %12 : vector<1x128xf32>
    %cst_7 = arith.constant 0.000000e+00 : f32
    %14 = vector.broadcast %cst_7 : f32 to vector<1x128xf32>
    %15 = arith.maximumf %13, %14 : vector<1x128xf32>
    %c0_8 = arith.constant 0 : index
    %c0_9 = arith.constant 0 : index
    %16 = vector.load %arg2[%c0_8, %c0_9] : memref<2x128xf32, #tpu.memory_space<vmem>>, vector<1x128xf32>
    %cst_10 = arith.constant 9.99999974E-6 : f32
    %17 = vector.broadcast %cst_10 : f32 to vector<1x128xf32>
    %18 = arith.addf %15, %17 : vector<1x128xf32>
    %19 = math.rsqrt %18 : vector<1x128xf32>
    %20 = arith.mulf %16, %19 : vector<1x128xf32>
    %c1_11 = arith.constant 1 : index
    %c0_12 = arith.constant 0 : index
    %21 = vector.load %arg2[%c1_11, %c0_12] : memref<2x128xf32, #tpu.memory_space<vmem>>, vector<1x128xf32>
    %22 = arith.mulf %5, %20 : vector<1x128xf32>
    %23 = arith.subf %21, %22 : vector<1x128xf32>
    %c0_13 = arith.constant 0 : index
    %c0_14 = arith.constant 0 : index
    %c0_15 = arith.constant 0 : index
    %24 = vector.load %arg3[%c0_13, %c0_14, %c0_15] : memref<1x256x128xbf16, #tpu.memory_space<vmem>>, vector<1x256x128xbf16>
    %25 = vector.shape_cast %24 : vector<1x256x128xbf16> to vector<256x128xbf16>
    %26 = arith.extf %25 : vector<256x128xbf16> to vector<256x128xf32>
    %27 = vector.broadcast %20 : vector<1x128xf32> to vector<256x128xf32>
    %28 = arith.mulf %26, %27 : vector<256x128xf32>
    %29 = vector.broadcast %23 : vector<1x128xf32> to vector<256x128xf32>
    %30 = arith.addf %28, %29 : vector<256x128xf32>
    %c0_16 = arith.constant 0 : index
    %c0_17 = arith.constant 0 : index
    %c0_18 = arith.constant 0 : index
    %31 = vector.load %arg4[%c0_16, %c0_17, %c0_18] : memref<1x256x128xf32, #tpu.memory_space<vmem>>, vector<1x256x128xf32>
    %32 = vector.shape_cast %31 : vector<1x256x128xf32> to vector<256x128xf32>
    %33 = arith.addf %30, %32 : vector<256x128xf32>
    %cst_19 = arith.constant 0.000000e+00 : f32
    %34 = vector.broadcast %cst_19 : f32 to vector<256x128xf32>
    %35 = arith.maximumf %33, %34 : vector<256x128xf32>
    %c0_20 = arith.constant 0 : index
    %c0_21 = arith.constant 0 : index
    %c0_22 = arith.constant 0 : index
    %36 = vector.load %arg5[%c0_20, %c0_21, %c0_22] : memref<1x256x128xf32, #tpu.memory_space<vmem>>, vector<1x256x128xf32>
    %37 = vector.shape_cast %36 : vector<1x256x128xf32> to vector<256x128xf32>
    %38 = vector.shape_cast %35 : vector<256x128xf32> to vector<1x256x128xf32>
    tpu.vector_store %arg5[%c0_20, %c0_21, %c0_22], %38 {strides = array<i32>} : memref<1x256x128xf32, #tpu.memory_space<vmem>>, vector<1x256x128xf32>,
    return
  }
  func.func @transform_0(%arg0: i32) -> (i32, i32, i32) {
    %c0_i32 = arith.constant 0 : i32
    %c0_i32_0 = arith.constant 0 : i32
    %c0_i32_1 = arith.constant 0 : i32
    %c0_i32_2 = arith.constant 0 : i32
    return %c0_i32, %c0_i32_0, %c0_i32_1 : i32, i32, i32
  }
  func.func @transform_1(%arg0: i32) -> (i32, i32) {
    %c0_i32 = arith.constant 0 : i32
    %c0_i32_0 = arith.constant 0 : i32
    %c0_i32_1 = arith.constant 0 : i32
    return %c0_i32, %c0_i32_0 : i32, i32
  }
  func.func @transform_2(%arg0: i32) -> (i32, i32, i32) {
    %c0_i32 = arith.constant 0 : i32
    %c0_i32_0 = arith.constant 0 : i32
    %c0_i32_1 = arith.constant 0 : i32
    return %arg0, %c0_i32, %c0_i32_0 : i32, i32, i32
  }
  func.func @transform_3(%arg0: i32) -> (i32, i32, i32) {
    %c0_i32 = arith.constant 0 : i32
    %c0_i32_0 = arith.constant 0 : i32
    %c0_i32_1 = arith.constant 0 : i32
    return %arg0, %c0_i32, %c0_i32_0 : i32, i32, i32
  }
  func.func @transform_4(%arg0: i32) -> (i32, i32, i32) {
    %c0_i32 = arith.constant 0 : i32
    %c0_i32_0 = arith.constant 0 : i32
    %c0_i32_1 = arith.constant 0 : i32
    return %arg0, %c0_i32, %c0_i32_0 : i32, i32, i32
  }
}

</mosaic_0001>

<llo_original>
// kernel: resblock_forward.5
$region0: #{resblock_forward.5}
  #allocation0 [shape = 'u32[]', space=smem, size = 0x4, offset = 0x4, fixed_abs, tag = 'smem constant byte address 0x4 - core index']
  #allocation1 [shape = 'u32[144,128]{1,0:T(1,128)}', space=vmem, size = 0x12000, scoped, tag = 'internal scratch']
  %s0 = inlined_call_operand.vmem [shape: f32[2,2,128], index: 0, kind: input, shape index: {}]
  %s1 = inlined_call_operand.vmem [shape: f32[2,128], index: 1, kind: input, shape index: {}]
  %s2 = inlined_call_operand.vmem [shape: bf16[2,256,128], index: 2, kind: input, shape index: {}, may-alias: {2,3}]
  %s3 = inlined_call_operand.vmem [shape: bf16[2,256,128], index: 3, kind: output, shape index: {}, may-alias: {2,3}]
  %s4 = sld [smem:[#allocation0]]
  $region45: #{resblock_forward.5} parent=0
    _
  %s6 = ssub.s32 1, %s4
  %s7 = scalar_select 0, %s6, %s4
  loop: start=0, step=1, limit=4
  $region2: #{resblock_forward.5} parent=0 // loop_pre_header
    _
  $region3: #{resblock_forward.5} parent=0 // loop_header
    %s9 = sphi 0, %s13
    %p10 = scmp.ge.s32.totalorder %s9, 4
    %s17 = sphi 0, %s17
    %s19 = sphi 0, %s17
    %s20 = sphi 0, %s19
    %s34 = sphi 0, %s20
    %s38 = sphi 0, %s38
    %s40 = sphi 0, %s38
    %s41 = sphi 0, %s40
    %s55 = sphi 0, %s41
    %s61 = sphi 0, %s63
    %s64 = sphi 0, %s61
    %s65 = sphi 0, %s64
    %s81 = sphi 0, %s65
    %s87 = sphi 0, %s89
    %s90 = sphi 0, %s87
    %s91 = sphi 0, %s90
    %s107 = sphi 0, %s91
  $region4: #{resblock_forward.5} parent=0 // loop_header_branch
    %12 = sbr.rel (%p10) target = $region8
  $region5: #{resblock_forward.5} parent=0 // loop_body
    %s14 = ssub.s32 %s9, 1
    %s15 = ssub.s32 %s9, 2
    %s16 = sadd.s32 %s9, 1
    %s18 = sadd.s32 %s17, 1
    %p21 = scmp.eq.s32.totalorder %s9, 1
    %p22 = scmp.ne.s32.totalorder %s17, %s19
    %p23 = scmp.eq.s32.totalorder %s9, 0
    %p24 = por %p22, %p23
    %p25 = scmp.ne.s32.totalorder %s17, %s19
    %p26 = scmp.eq.s32.totalorder %s14, 1
    %p27 = por %p25, %p26
    %p28 = scmp.ne.s32.totalorder %s19, %s20
    %p29 = scmp.eq.s32.totalorder %s14, 0
    %p30 = por %p28, %p29
    %p31 = scmp.ne.s32.totalorder %s19, %s20
    %p32 = scmp.eq.s32.totalorder %s15, 1
    %p33 = por %p31, %p32
    %p35 = scmp.ne.s32.totalorder %s20, %s34
    %p36 = scmp.eq.s32.totalorder %s15, 0
    %p37 = por %p35, %p36
    %s39 = sadd.s32 %s38, 1
    %p42 = scmp.eq.s32.totalorder %s9, 1
    %p43 = scmp.ne.s32.totalorder %s38, %s40
    %p44 = scmp.eq.s32.totalorder %s9, 0
    %p45 = por %p43, %p44
    %p46 = scmp.ne.s32.totalorder %s38, %s40
    %p47 = scmp.eq.s32.totalorder %s14, 1
    %p48 = por %p46, %p47
    %p49 = scmp.ne.s32.totalorder %s40, %s41
    %p50 = scmp.eq.s32.totalorder %s14, 0
    %p51 = por %p49, %p50
    %p52 = scmp.ne.s32.totalorder %s40, %s41
    %p53 = scmp.eq.s32.totalorder %s15, 1
    %p54 = por %p52, %p53
    %p56 = scmp.ne.s32.totalorder %s41, %s55
    %p57 = scmp.eq.s32.totalorder %s15, 0
    %p58 = por %p56, %p57
    %s59 = ssub.s32 %s9, %s16
    %p60 = scmp.eq.s32.totalorder %s59, 0
    %s62 = sadd.s32 %s61, 1
    %s63 = scalar_select %p60, %s61, %s62
    %p66 = pneg %p60
    %p67 = scmp.eq.s32.totalorder %s9, 1
    %p68 = por %p66, %p67
    %p69 = scmp.ne.s32.totalorder %s61, %s64
    %p70 = scmp.eq.s32.totalorder %s9, 0
    %p71 = por %p69, %p70
    %p72 = scmp.ne.s32.totalorder %s61, %s64
    %p73 = scmp.eq.s32.totalorder %s14, 1
    %p74 = por %p72, %p73
    %p75 = scmp.ne.s32.totalorder %s64, %s65
    %p76 = scmp.eq.s32.totalorder %s14, 0
    %p77 = por %p75, %p76
    %p78 = scmp.ne.s32.totalorder %s64, %s65
    %p79 = scmp.eq.s32.totalorder %s15, 1
    %p80 = por %p78, %p79
    %p82 = scmp.ne.s32.totalorder %s65, %s81
    %p83 = scmp.eq.s32.totalorder %s15, 0
    %p84 = por %p82, %p83
    %s85 = ssub.s32 %s9, %s16
    %p86 = scmp.eq.s32.totalorder %s85, 0
    %s88 = sadd.s32 %s87, 1
    %s89 = scalar_select %p86, %s87, %s88
    %p92 = pneg %p86
    %p93 = scmp.eq.s32.totalorder %s9, 1
    %p94 = por %p92, %p93
    %p95 = scmp.ne.s32.totalorder %s87, %s90
    %p96 = scmp.eq.s32.totalorder %s9, 0
    %p97 = por %p95, %p96
    %p98 = scmp.ne.s32.totalorder %s87, %s90
    %p99 = scmp.eq.s32.totalorder %s14, 1
    %p100 = por %p98, %p99
    %p101 = scmp.ne.s32.totalorder %s90, %s91
    %p102 = scmp.eq.s32.totalorder %s14, 0
    %p103 = por %p101, %p102
    %p104 = scmp.ne.s32.totalorder %s90, %s91
    %p105 = scmp.eq.s32.totalorder %s15, 1
    %p106 = por %p104, %p105
    %p108 = scmp.ne.s32.totalorder %s91, %s107
    %p109 = scmp.eq.s32.totalorder %s15, 0
    %p110 = por %p108, %p109
    %p111 = scmp.le.s32.totalorder 1, %s9
    %p112 = scmp.lt.s32.totalorder %s9, 3
    %p113 = pnand %p111, %p112
    %p114 = pneg %p113
    // Predicated region
    $region9: #{resblock_forward.5} parent=5 // pred_check
      _
    $region10: #{resblock_forward.5} parent=5 // pred_check_branch
      %116 = sbr.rel (%p113) target = $region12
    $region11: #{resblock_forward.5} parent=5 // pred_region
      %s117 = ssub.s32 %s9, 1
      // Predicated region
      $region13: #{resblock_forward.5} parent=11 // pred_check
        %p118 = pneg %p30
      $region14: #{resblock_forward.5} parent=11 // pred_check_branch
        %120 = sbr.rel (%p118) target = $region16
      $region15: #{resblock_forward.5} parent=11 // pred_region
        _
      $region16: #{resblock_forward.5} parent=11 // pred_fallthru
        _
      // Predicated region
      $region17: #{resblock_forward.5} parent=11 // pred_check
        %p121 = pneg %p51
      $region18: #{resblock_forward.5} parent=11 // pred_check_branch
        %123 = sbr.rel (%p121) target = $region20
      $region19: #{resblock_forward.5} parent=11 // pred_region
        _
      $region20: #{resblock_forward.5} parent=11 // pred_fallthru
        _
    $region12: #{resblock_forward.5} parent=5 // pred_fallthru
      _
    %p124 = scmp.lt.s32.totalorder %s9, 2
    // Predicated region
    $region21: #{resblock_forward.5} parent=5 // pred_check
      %p125 = pneg %p124
    $region22: #{resblock_forward.5} parent=5 // pred_check_branch
      %127 = sbr.rel (%p125) target = $region24
    $region23: #{resblock_forward.5} parent=5 // pred_region
      // Predicated region
      $region25: #{resblock_forward.5} parent=23 // pred_check
        %p128 = pneg %p71
      $region26: #{resblock_forward.5} parent=23 // pred_check_branch
        %130 = sbr.rel (%p128) target = $region28
      $region27: #{resblock_forward.5} parent=23 // pred_region
        %p131 = scmp.lt.s32.totalorder %s9, 1
        %s132 = scalar_select %p131, %s9, 1
        %s133 = smul.addr %s132, 32
        %s134 = smul.addr %s133, 4
        %s135 = scalar_lea.vmem %s2, %s134
      $region28: #{resblock_forward.5} parent=23 // pred_fallthru
        _
    $region24: #{resblock_forward.5} parent=5 // pred_fallthru
      _
    %p136 = scmp.le.s32.totalorder 1, %s9
    %p137 = scmp.lt.s32.totalorder %s9, 3
    %p138 = pnand %p136, %p137
    %p139 = pneg %p138
    // Predicated region
    $region29: #{resblock_forward.5} parent=5 // pred_check
      _
    $region30: #{resblock_forward.5} parent=5 // pred_check_branch
      %141 = sbr.rel (%p138) target = $region32
    $region31: #{resblock_forward.5} parent=5 // pred_region
      %s142 = ssub.s32 %s9, 1
      %p143 = pneg %p30
      %p144 = pneg %p27
      %p145 = pneg %p51
      %p146 = pneg %p48
      %p147 = scmp.lt.s32.totalorder %s14, 1
      %s148 = scalar_select %p147, %s14, 1
      %s149 = smul.addr %s148, 32
      %s150 = smul.addr %s149, 4
      %s151 = scalar_lea.vmem %s2, %s150
      %p152 = pneg %p77
      %p153 = pneg %p74
      %p154 = pneg %p103
      %p155 = pneg %p100
      %p156 = scmp.lt.s32.totalorder %s14, 1
      %s157 = scalar_select %p156, %s14, 1
      %s158 = smul.addr %s157, 32
      %s159 = smul.addr %s158, 4
      %s160 = scalar_lea.vmem %s3, %s159
      %p161 = scmp.lt.s32.totalorder %s14, 1
      %s162 = scalar_select %p161, %s14, 1
      %s163 = smul.addr %s162, 32
      %s164 = smul.addr %s163, 4
      %s165 = scalar_lea.vmem %s2, %s164
      %p166 = scmp.lt.s32.totalorder %s14, 1
      %s167 = scalar_select %p166, %s14, 1
      %s168 = smul.addr %s167, 32
      %s169 = smul.addr %s168, 4
      %s170 = scalar_lea.vmem %s3, %s169
      %v171 = vld [vmem:[%s0] sm:$0x1]
      %v172 = vld [vmem:[%s0 + $0x2] sm:$0x1]
      %v175 = vrot.slane %v172, 7
      %vm176 = vcmask 1041409
      %v177 = vsel %vm176, %v175, %v171
      %vm179 = vcmask 1041408
      %v180 = vsel %vm179, %v177, 0.0
      %v181 = vrot.slane %v180, 4
      %v182 = vadd.f32 %v180, %v181
      %v183 = vrot.slane %v182, 2
      %v184 = vadd.f32 %v182, %v183
      %v185 = vrot.slane %v184, 1
      %v186 = vadd.f32 %v184, %v185
      %v187 = vmul.f32 %v186, 0.001953125
      %v188 = vld [vmem:[%s0 + $0x1] sm:$0x1]
      %v189 = vld [vmem:[%s0 + $0x3] sm:$0x1]
      %v192 = vrot.slane %v189, 7
      %v193 = vsel %vm176, %v192, %v188
      %v195 = vsel %vm179, %v193, 0.0
      %v196 = vrot.slane %v195, 4
      %v197 = vadd.f32 %v195, %v196
      %v198 = vrot.slane %v197, 2
      %v199 = vadd.f32 %v197, %v198
      %v200 = vrot.slane %v199, 1
      %v201 = vadd.f32 %v199, %v200
      %v202 = vmul.f32 %v201, 0.001953125
      %v203 = vmul.f32 %v187, %v187
      %v204 = vsub.f32 %v202, %v203
      %v205 = vmax.f32 %v204, 0.0
      %v206 = vld [vmem:[%s1] sm:$0x1]
      %v207 = vadd.f32 %v205, 1e-05
      %v208 = vrsqrt.pop %v207
      %v209 = vmul.f32 %v206, %v208
      %v210 = vld [vmem:[%s1 + $0x1] sm:$0x1]
      %v211 = vmul.f32 %v187, %v209
      %v212 = vsub.f32 %v210, %v211
      %v213 = vld [vmem:[%s165] sm:$0xf]
      %v214 = vld [vmem:[%s165 + $0x4] sm:$0xf]
      %v215 = vld [vmem:[%s165 + $0x8] sm:$0xf]
      %v216 = vld [vmem:[%s165 + $0xc] sm:$0xf]
      %v217 = vld [vmem:[%s165 + $0x10] sm:$0xf]
      %v218 = vld [vmem:[%s165 + $0x14] sm:$0xf]
      %v219 = vld [vmem:[%s165 + $0x18] sm:$0xf]
      %v220 = vld [vmem:[%s165 + $0x1c] sm:$0xf]
      %v221 = vld [vmem:[%s165 + $0x20] sm:$0xf]
      %v222 = vld [vmem:[%s165 + $0x24] sm:$0xf]
      %v223 = vld [vmem:[%s165 + $0x28] sm:$0xf]
      %v224 = vld [vmem:[%s165 + $0x2c] sm:$0xf]
      %v225 = vld [vmem:[%s165 + $0x30] sm:$0xf]
      %v226 = vld [vmem:[%s165 + $0x34] sm:$0xf]
      %v227 = vld [vmem:[%s165 + $0x38] sm:$0xf]
      %v228 = vld [vmem:[%s165 + $0x3c] sm:$0xf]
      %v229 = vld [vmem:[%s165 + $0x40] sm:$0xf]
      %v230 = vld [vmem:[%s165 + $0x44] sm:$0xf]
      %v231 = vld [vmem:[%s165 + $0x48] sm:$0xf]
      %v232 = vld [vmem:[%s165 + $0x4c] sm:$0xf]
      %v233 = vld [vmem:[%s165 + $0x50] sm:$0xf]
      %v234 = vld [vmem:[%s165 + $0x54] sm:$0xf]
      %v235 = vld [vmem:[%s165 + $0x58] sm:$0xf]
      %v236 = vld [vmem:[%s165 + $0x5c] sm:$0xf]
      %v237 = vld [vmem:[%s165 + $0x60] sm:$0xf]
      %v238 = vld [vmem:[%s165 + $0x64] sm:$0xf]
      %v239 = vld [vmem:[%s165 + $0x68] sm:$0xf]
      %v240 = vld [vmem:[%s165 + $0x6c] sm:$0xf]
      %v241 = vld [vmem:[%s165 + $0x70] sm:$0xf]
      %v242 = vld [vmem:[%s165 + $0x74] sm:$0xf]
      %v243 = vld [vmem:[%s165 + $0x78] sm:$0xf]
      %v244 = vld [vmem:[%s165 + $0x7c] sm:$0xf]
      %v245 = vunpack.c.l.bf16 %v213
      %v246 = vunpack.c.l.bf16 %v214
      %v247 = vunpack.c.l.bf16 %v215
      %v248 = vunpack.c.l.bf16 %v216
      %v249 = vunpack.c.l.bf16 %v217
      %v250 = vunpack.c.l.bf16 %v218
      %v251 = vunpack.c.l.bf16 %v219
      %v252 = vunpack.c.l.bf16 %v220
      %v253 = vunpack.c.l.bf16 %v221
      %v254 = vunpack.c.l.bf16 %v222
      %v255 = vunpack.c.l.bf16 %v223
      %v256 = vunpack.c.l.bf16 %v224
      %v257 = vunpack.c.l.bf16 %v225
      %v258 = vunpack.c.l.bf16 %v226
      %v259 = vunpack.c.l.bf16 %v227
      %v260 = vunpack.c.l.bf16 %v228
      %v261 = vunpack.c.l.bf16 %v229
      %v262 = vunpack.c.l.bf16 %v230
      %v263 = vunpack.c.l.bf16 %v231
      %v264 = vunpack.c.l.bf16 %v232
      %v265 = vunpack.c.l.bf16 %v233
      %v266 = vunpack.c.l.bf16 %v234
      %v267 = vunpack.c.l.bf16 %v235
      %v268 = vunpack.c.l.bf16 %v236
      %v269 = vunpack.c.l.bf16 %v237
      %v270 = vunpack.c.l.bf16 %v238
      %v271 = vunpack.c.l.bf16 %v239
      %v272 = vunpack.c.l.bf16 %v240
      %v273 = vunpack.c.l.bf16 %v241
      %v274 = vunpack.c.l.bf16 %v242
      %v275 = vunpack.c.l.bf16 %v243
      %v276 = vunpack.c.l.bf16 %v244
      %v277 = vlaneseq
      %v278 = vshrl.u32 %v277, 7
      %v279 = vsub.s32 0, %v278
      %v280 = vrot.slane %v209, %v279
      %v281 = vmul.f32 %v245, %v280
      %v282 = vmul.f32 %v246, %v280
      %v283 = vmul.f32 %v247, %v280
      %v284 = vmul.f32 %v248, %v280
      %v285 = vmul.f32 %v249, %v280
      %v286 = vmul.f32 %v250, %v280
      %v287 = vmul.f32 %v251, %v280
      %v288 = vmul.f32 %v252, %v280
      %v289 = vmul.f32 %v253, %v280
      %v290 = vmul.f32 %v254, %v280
      %v291 = vmul.f32 %v255, %v280
      %v292 = vmul.f32 %v256, %v280
      %v293 = vmul.f32 %v257, %v280
      %v294 = vmul.f32 %v258, %v280
      %v295 = vmul.f32 %v259, %v280
      %v296 = vmul.f32 %v260, %v280
      %v297 = vmul.f32 %v261, %v280
      %v298 = vmul.f32 %v262, %v280
      %v299 = vmul.f32 %v263, %v280
      %v300 = vmul.f32 %v264, %v280
      %v301 = vmul.f32 %v265, %v280
      %v302 = vmul.f32 %v266, %v280
      %v303 = vmul.f32 %v267, %v280
      %v304 = vmul.f32 %v268, %v280
      %v305 = vmul.f32 %v269, %v280
      %v306 = vmul.f32 %v270, %v280
      %v307 = vmul.f32 %v271, %v280
      %v308 = vmul.f32 %v272, %v280
      %v309 = vmul.f32 %v273, %v280
      %v310 = vmul.f32 %v274, %v280
      %v311 = vmul.f32 %v275, %v280
      %v312 = vmul.f32 %v276, %v280
      %v313 = vlaneseq
      %v314 = vshrl.u32 %v313, 7
      %v315 = vsub.s32 0, %v314
      %v316 = vrot.slane %v212, %v315
      %v317 = vadd.f32 %v281, %v316
      %v318 = vadd.f32 %v282, %v316
      %v319 = vadd.f32 %v283, %v316
      %v320 = vadd.f32 %v284, %v316
      %v321 = vadd.f32 %v285, %v316
      %v322 = vadd.f32 %v286, %v316
      %v323 = vadd.f32 %v287, %v316
      %v324 = vadd.f32 %v288, %v316
      %v325 = vadd.f32 %v289, %v316
      %v326 = vadd.f32 %v290, %v316
      %v327 = vadd.f32 %v291, %v316
      %v328 = vadd.f32 %v292, %v316
      %v329 = vadd.f32 %v293, %v316
      %v330 = vadd.f32 %v294, %v316
      %v331 = vadd.f32 %v295, %v316
      %v332 = vadd.f32 %v296, %v316
      %v333 = vadd.f32 %v297, %v316
      %v334 = vadd.f32 %v298, %v316
      %v335 = vadd.f32 %v299, %v316
      %v336 = vadd.f32 %v300, %v316
      %v337 = vadd.f32 %v301, %v316
      %v338 = vadd.f32 %v302, %v316
      %v339 = vadd.f32 %v303, %v316
      %v340 = vadd.f32 %v304, %v316
      %v341 = vadd.f32 %v305, %v316
      %v342 = vadd.f32 %v306, %v316
      %v343 = vadd.f32 %v307, %v316
      %v344 = vadd.f32 %v308, %v316
      %v345 = vadd.f32 %v309, %v316
      %v346 = vadd.f32 %v310, %v316
      %v347 = vadd.f32 %v311, %v316
      %v348 = vadd.f32 %v312, %v316
      %v349 = vmax.f32 %v317, 0.0
      %v350 = vmax.f32 %v318, 0.0
      %v351 = vmax.f32 %v319, 0.0
      %v352 = vmax.f32 %v320, 0.0
      %v353 = vmax.f32 %v321, 0.0
      %v354 = vmax.f32 %v322, 0.0
      %v355 = vmax.f32 %v323, 0.0
      %v356 = vmax.f32 %v324, 0.0
      %v357 = vmax.f32 %v325, 0.0
      %v358 = vmax.f32 %v326, 0.0
      %v359 = vmax.f32 %v327, 0.0
      %v360 = vmax.f32 %v328, 0.0
      %v361 = vmax.f32 %v329, 0.0
      %v362 = vmax.f32 %v330, 0.0
      %v363 = vmax.f32 %v331, 0.0
      %v364 = vmax.f32 %v332, 0.0
      %v365 = vmax.f32 %v333, 0.0
      %v366 = vmax.f32 %v334, 0.0
      %v367 = vmax.f32 %v335, 0.0
      %v368 = vmax.f32 %v336, 0.0
      %v369 = vmax.f32 %v337, 0.0
      %v370 = vmax.f32 %v338, 0.0
      %v371 = vmax.f32 %v339, 0.0
      %v372 = vmax.f32 %v340, 0.0
      %v373 = vmax.f32 %v341, 0.0
      %v374 = vmax.f32 %v342, 0.0
      %v375 = vmax.f32 %v343, 0.0
      %v376 = vmax.f32 %v344, 0.0
      %v377 = vmax.f32 %v345, 0.0
      %v378 = vmax.f32 %v346, 0.0
      %v379 = vmax.f32 %v347, 0.0
      %v380 = vmax.f32 %v348, 0.0
      %v381 = vpack.c.bf16 %v350, %v349
      %v382 = vpack.c.bf16 %v352, %v351
      %v383 = vpack.c.bf16 %v354, %v353
      %v384 = vpack.c.bf16 %v356, %v355
      %v385 = vpack.c.bf16 %v358, %v357
      %v386 = vpack.c.bf16 %v360, %v359
      %v387 = vpack.c.bf16 %v362, %v361
      %v388 = vpack.c.bf16 %v364, %v363
      %v389 = vpack.c.bf16 %v366, %v365
      %v390 = vpack.c.bf16 %v368, %v367
      %v391 = vpack.c.bf16 %v370, %v369
      %v392 = vpack.c.bf16 %v372, %v371
      %v393 = vpack.c.bf16 %v374, %v373
      %v394 = vpack.c.bf16 %v376, %v375
      %v395 = vpack.c.bf16 %v378, %v377
      %v396 = vpack.c.bf16 %v380, %v379
      %v413 = vunpack.c.l.b16 %v381
      %v414 = vunpack.c.h.b16 %v381
      %v415 = vunpack.c.l.b16 %v382
      %v416 = vunpack.c.h.b16 %v382
      %v417 = vunpack.c.l.b16 %v383
      %v418 = vunpack.c.h.b16 %v383
      %v419 = vunpack.c.l.b16 %v384
      %v420 = vunpack.c.h.b16 %v384
      %v421 = vunpack.c.l.b16 %v385
      %v422 = vunpack.c.h.b16 %v385
      %v423 = vunpack.c.l.b16 %v386
      %v424 = vunpack.c.h.b16 %v386
      %v425 = vunpack.c.l.b16 %v387
      %v426 = vunpack.c.h.b16 %v387
      %v427 = vunpack.c.l.b16 %v388
      %v428 = vunpack.c.h.b16 %v388
      %v429 = vunpack.c.l.b16 %v389
      %v430 = vunpack.c.h.b16 %v389
      %v431 = vunpack.c.l.b16 %v390
      %v432 = vunpack.c.h.b16 %v390
      %v433 = vunpack.c.l.b16 %v391
      %v434 = vunpack.c.h.b16 %v391
      %v435 = vunpack.c.l.b16 %v392
      %v436 = vunpack.c.h.b16 %v392
      %v437 = vunpack.c.l.b16 %v393
      %v438 = vunpack.c.h.b16 %v393
      %v439 = vunpack.c.l.b16 %v394
      %v440 = vunpack.c.h.b16 %v394
      %v441 = vunpack.c.l.b16 %v395
      %v442 = vunpack.c.h.b16 %v395
      %v443 = vunpack.c.l.b16 %v396
      %v444 = vunpack.c.h.b16 %v396
      %v445 = vpack.c.b16 %v413, %v413
      %v446 = vpack.c.b16 %v414, %v414
      %v447 = vpack.c.b16 %v415, %v415
      %v448 = vpack.c.b16 %v416, %v416
      %v449 = vpack.c.b16 %v417, %v417
      %v450 = vpack.c.b16 %v418, %v418
      %v451 = vpack.c.b16 %v419, %v419
      %v452 = vpack.c.b16 %v420, %v420
      %v453 = vpack.c.b16 %v421, %v421
      %v454 = vpack.c.b16 %v422, %v422
      %v455 = vpack.c.b16 %v423, %v423
      %v456 = vpack.c.b16 %v424, %v424
      %v457 = vpack.c.b16 %v425, %v425
      %v458 = vpack.c.b16 %v426, %v426
      %v459 = vpack.c.b16 %v427, %v427
      %v460 = vpack.c.b16 %v428, %v428
      %v461 = vpack.c.b16 %v429, %v429
      %v462 = vpack.c.b16 %v430, %v430
      %v463 = vpack.c.b16 %v431, %v431
      %v464 = vpack.c.b16 %v432, %v432
      %v465 = vpack.c.b16 %v433, %v433
      %v466 = vpack.c.b16 %v434, %v434
      %v467 = vpack.c.b16 %v435, %v435
      %v468 = vpack.c.b16 %v436, %v436
      %v469 = vpack.c.b16 %v437, %v437
      %v470 = vpack.c.b16 %v438, %v438
      %v471 = vpack.c.b16 %v439, %v439
      %v472 = vpack.c.b16 %v440, %v440
      %v473 = vpack.c.b16 %v441, %v441
      %v474 = vpack.c.b16 %v442, %v442
      %v475 = vpack.c.b16 %v443, %v443
      %v476 = vpack.c.b16 %v444, %v444
      %509 = vst [vmem:[%s170] sm:$0xf] %v445
      %510 = vst [vmem:[%s170 + $0x4] sm:$0xf] %v446
      %511 = vst [vmem:[%s170 + $0x8] sm:$0xf] %v447
      %512 = vst [vmem:[%s170 + $0xc] sm:$0xf] %v448
      %513 = vst [vmem:[%s170 + $0x10] sm:$0xf] %v449
      %514 = vst [vmem:[%s170 + $0x14] sm:$0xf] %v450
      %515 = vst [vmem:[%s170 + $0x18] sm:$0xf] %v451
      %516 = vst [vmem:[%s170 + $0x1c] sm:$0xf] %v452
      %517 = vst [vmem:[%s170 + $0x20] sm:$0xf] %v453
      %518 = vst [vmem:[%s170 + $0x24] sm:$0xf] %v454
      %519 = vst [vmem:[%s170 + $0x28] sm:$0xf] %v455
      %520 = vst [vmem:[%s170 + $0x2c] sm:$0xf] %v456
      %521 = vst [vmem:[%s170 + $0x30] sm:$0xf] %v457
      %522 = vst [vmem:[%s170 + $0x34] sm:$0xf] %v458
      %523 = vst [vmem:[%s170 + $0x38] sm:$0xf] %v459
      %524 = vst [vmem:[%s170 + $0x3c] sm:$0xf] %v460
      %525 = vst [vmem:[%s170 + $0x40] sm:$0xf] %v461
      %526 = vst [vmem:[%s170 + $0x44] sm:$0xf] %v462
      %527 = vst [vmem:[%s170 + $0x48] sm:$0xf] %v463
      %528 = vst [vmem:[%s170 + $0x4c] sm:$0xf] %v464
      %529 = vst [vmem:[%s170 + $0x50] sm:$0xf] %v465
      %530 = vst [vmem:[%s170 + $0x54] sm:$0xf] %v466
      %531 = vst [vmem:[%s170 + $0x58] sm:$0xf] %v467
      %532 = vst [vmem:[%s170 + $0x5c] sm:$0xf] %v468
      %533 = vst [vmem:[%s170 + $0x60] sm:$0xf] %v469
      %534 = vst [vmem:[%s170 + $0x64] sm:$0xf] %v470
      %535 = vst [vmem:[%s170 + $0x68] sm:$0xf] %v471
      %536 = vst [vmem:[%s170 + $0x6c] sm:$0xf] %v472
      %537 = vst [vmem:[%s170 + $0x70] sm:$0xf] %v473
      %538 = vst [vmem:[%s170 + $0x74] sm:$0xf] %v474
      %539 = vst [vmem:[%s170 + $0x78] sm:$0xf] %v475
      %540 = vst [vmem:[%s170 + $0x7c] sm:$0xf] %v476
      %p541 = scmp.lt.s32.totalorder %s14, 1
      %s542 = scalar_select %p541, %s14, 1
      %s543 = smul.addr %s542, 32
      %s544 = smul.addr %s543, 4
      %s545 = scalar_lea.vmem %s3, %s544
      // Predicated region
      $region33: #{resblock_forward.5} parent=31 // pred_check
        %p546 = pneg %p100
      $region34: #{resblock_forward.5} parent=31 // pred_check_branch
        %548 = sbr.rel (%p546) target = $region36
      $region35: #{resblock_forward.5} parent=31 // pred_region
        _
      $region36: #{resblock_forward.5} parent=31 // pred_fallthru
        _
    $region32: #{resblock_forward.5} parent=5 // pred_fallthru
      _
    %p549 = scmp.le.s32.totalorder 2, %s9
    // Predicated region
    $region37: #{resblock_forward.5} parent=5 // pred_check
      %p550 = pneg %p549
    $region38: #{resblock_forward.5} parent=5 // pred_check_branch
      %552 = sbr.rel (%p550) target = $region40
    $region39: #{resblock_forward.5} parent=5 // pred_region
      %s553 = ssub.s32 %s9, 2
      // Predicated region
      $region41: #{resblock_forward.5} parent=39 // pred_check
        %p554 = pneg %p106
      $region42: #{resblock_forward.5} parent=39 // pred_check_branch
        %556 = sbr.rel (%p554) target = $region44
      $region43: #{resblock_forward.5} parent=39 // pred_region
        %p557 = scmp.lt.s32.totalorder %s15, 1
        %s558 = scalar_select %p557, %s15, 1
        %s559 = smul.addr %s558, 32
        %s560 = smul.addr %s559, 4
        %s561 = scalar_lea.vmem %s3, %s560
      $region44: #{resblock_forward.5} parent=39 // pred_fallthru
        _
    $region40: #{resblock_forward.5} parent=5 // pred_fallthru
      _
  $region6: #{resblock_forward.5} parent=0 // loop_footer
    %s13 = sadd.s32 1, %s9
  $region7: #{resblock_forward.5} parent=0 // loop_footer_branch
    %8 = sbr.rel target = $region3
  $region8: #{resblock_forward.5} parent=0 // loop_exit
    _

// kernel: resblock_forward.7
$region0: #{resblock_forward.7}
  #allocation0 [shape = 'u32[]', space=smem, size = 0x4, offset = 0x4, fixed_abs, tag = 'smem constant byte address 0x4 - core index']
  #allocation1 [shape = 'u32[144,128]{1,0:T(1,128)}', space=vmem, size = 0x12000, scoped, tag = 'internal scratch']
  %s0 = inlined_call_operand.vmem [shape: f32[2,2,128], index: 0, kind: input, shape index: {}]
  %s1 = inlined_call_operand.vmem [shape: f32[2,128], index: 1, kind: input, shape index: {}]
  %s2 = inlined_call_operand.vmem [shape: bf16[2,256,128], index: 2, kind: input, shape index: {}]
  %s3 = inlined_call_operand.vmem [shape: f32[2,256,128], index: 3, kind: input, shape index: {}]
  %s4 = inlined_call_operand.vmem [shape: f32[2,256,128], index: 4, kind: output, shape index: {}]
  %s5 = sld [smem:[#allocation0]]
  $region49: #{resblock_forward.7} parent=0
    _
  %s7 = ssub.s32 1, %s5
  %s8 = scalar_select 0, %s7, %s5
  loop: start=0, step=1, limit=4
  $region2: #{resblock_forward.7} parent=0 // loop_pre_header
    _
  $region3: #{resblock_forward.7} parent=0 // loop_header
    %s10 = sphi 0, %s14
    %p11 = scmp.ge.s32.totalorder %s10, 4
    %s18 = sphi 0, %s18
    %s20 = sphi 0, %s18
    %s21 = sphi 0, %s20
    %s35 = sphi 0, %s21
    %s39 = sphi 0, %s39
    %s41 = sphi 0, %s39
    %s42 = sphi 0, %s41
    %s56 = sphi 0, %s42
    %s62 = sphi 0, %s64
    %s65 = sphi 0, %s62
    %s66 = sphi 0, %s65
    %s82 = sphi 0, %s66
    %s88 = sphi 0, %s90
    %s91 = sphi 0, %s88
    %s92 = sphi 0, %s91
    %s108 = sphi 0, %s92
    %s114 = sphi 0, %s116
    %s117 = sphi 0, %s114
    %s118 = sphi 0, %s117
    %s134 = sphi 0, %s118
  $region4: #{resblock_forward.7} parent=0 // loop_header_branch
    %13 = sbr.rel (%p11) target = $region8
  $region5: #{resblock_forward.7} parent=0 // loop_body
    %s15 = ssub.s32 %s10, 1
    %s16 = ssub.s32 %s10, 2
    %s17 = sadd.s32 %s10, 1
    %s19 = sadd.s32 %s18, 1
    %p22 = scmp.eq.s32.totalorder %s10, 1
    %p23 = scmp.ne.s32.totalorder %s18, %s20
    %p24 = scmp.eq.s32.totalorder %s10, 0
    %p25 = por %p23, %p24
    %p26 = scmp.ne.s32.totalorder %s18, %s20
    %p27 = scmp.eq.s32.totalorder %s15, 1
    %p28 = por %p26, %p27
    %p29 = scmp.ne.s32.totalorder %s20, %s21
    %p30 = scmp.eq.s32.totalorder %s15, 0
    %p31 = por %p29, %p30
    %p32 = scmp.ne.s32.totalorder %s20, %s21
    %p33 = scmp.eq.s32.totalorder %s16, 1
    %p34 = por %p32, %p33
    %p36 = scmp.ne.s32.totalorder %s21, %s35
    %p37 = scmp.eq.s32.totalorder %s16, 0
    %p38 = por %p36, %p37
    %s40 = sadd.s32 %s39, 1
    %p43 = scmp.eq.s32.totalorder %s10, 1
    %p44 = scmp.ne.s32.totalorder %s39, %s41
    %p45 = scmp.eq.s32.totalorder %s10, 0
    %p46 = por %p44, %p45
    %p47 = scmp.ne.s32.totalorder %s39, %s41
    %p48 = scmp.eq.s32.totalorder %s15, 1
    %p49 = por %p47, %p48
    %p50 = scmp.ne.s32.totalorder %s41, %s42
    %p51 = scmp.eq.s32.totalorder %s15, 0
    %p52 = por %p50, %p51
    %p53 = scmp.ne.s32.totalorder %s41, %s42
    %p54 = scmp.eq.s32.totalorder %s16, 1
    %p55 = por %p53, %p54
    %p57 = scmp.ne.s32.totalorder %s42, %s56
    %p58 = scmp.eq.s32.totalorder %s16, 0
    %p59 = por %p57, %p58
    %s60 = ssub.s32 %s10, %s17
    %p61 = scmp.eq.s32.totalorder %s60, 0
    %s63 = sadd.s32 %s62, 1
    %s64 = scalar_select %p61, %s62, %s63
    %p67 = pneg %p61
    %p68 = scmp.eq.s32.totalorder %s10, 1
    %p69 = por %p67, %p68
    %p70 = scmp.ne.s32.totalorder %s62, %s65
    %p71 = scmp.eq.s32.totalorder %s10, 0
    %p72 = por %p70, %p71
    %p73 = scmp.ne.s32.totalorder %s62, %s65
    %p74 = scmp.eq.s32.totalorder %s15, 1
    %p75 = por %p73, %p74
    %p76 = scmp.ne.s32.totalorder %s65, %s66
    %p77 = scmp.eq.s32.totalorder %s15, 0
    %p78 = por %p76, %p77
    %p79 = scmp.ne.s32.totalorder %s65, %s66
    %p80 = scmp.eq.s32.totalorder %s16, 1
    %p81 = por %p79, %p80
    %p83 = scmp.ne.s32.totalorder %s66, %s82
    %p84 = scmp.eq.s32.totalorder %s16, 0
    %p85 = por %p83, %p84
    %s86 = ssub.s32 %s10, %s17
    %p87 = scmp.eq.s32.totalorder %s86, 0
    %s89 = sadd.s32 %s88, 1
    %s90 = scalar_select %p87, %s88, %s89
    %p93 = pneg %p87
    %p94 = scmp.eq.s32.totalorder %s10, 1
    %p95 = por %p93, %p94
    %p96 = scmp.ne.s32.totalorder %s88, %s91
    %p97 = scmp.eq.s32.totalorder %s10, 0
    %p98 = por %p96, %p97
    %p99 = scmp.ne.s32.totalorder %s88, %s91
    %p100 = scmp.eq.s32.totalorder %s15, 1
    %p101 = por %p99, %p100
    %p102 = scmp.ne.s32.totalorder %s91, %s92
    %p103 = scmp.eq.s32.totalorder %s15, 0
    %p104 = por %p102, %p103
    %p105 = scmp.ne.s32.totalorder %s91, %s92
    %p106 = scmp.eq.s32.totalorder %s16, 1
    %p107 = por %p105, %p106
    %p109 = scmp.ne.s32.totalorder %s92, %s108
    %p110 = scmp.eq.s32.totalorder %s16, 0
    %p111 = por %p109, %p110
    %s112 = ssub.s32 %s10, %s17
    %p113 = scmp.eq.s32.totalorder %s112, 0
    %s115 = sadd.s32 %s114, 1
    %s116 = scalar_select %p113, %s114, %s115
    %p119 = pneg %p113
    %p120 = scmp.eq.s32.totalorder %s10, 1
    %p121 = por %p119, %p120
    %p122 = scmp.ne.s32.totalorder %s114, %s117
    %p123 = scmp.eq.s32.totalorder %s10, 0
    %p124 = por %p122, %p123
    %p125 = scmp.ne.s32.totalorder %s114, %s117
    %p126 = scmp.eq.s32.totalorder %s15, 1
    %p127 = por %p125, %p126
    %p128 = scmp.ne.s32.totalorder %s117, %s118
    %p129 = scmp.eq.s32.totalorder %s15, 0
    %p130 = por %p128, %p129
    %p131 = scmp.ne.s32.totalorder %s117, %s118
    %p132 = scmp.eq.s32.totalorder %s16, 1
    %p133 = por %p131, %p132
    %p135 = scmp.ne.s32.totalorder %s118, %s134
    %p136 = scmp.eq.s32.totalorder %s16, 0
    %p137 = por %p135, %p136
    %p138 = scmp.le.s32.totalorder 1, %s10
    %p139 = scmp.lt.s32.totalorder %s10, 3
    %p140 = pnand %p138, %p139
    %p141 = pneg %p140
    // Predicated region
    $region9: #{resblock_forward.7} parent=5 // pred_check
      _
    $region10: #{resblock_forward.7} parent=5 // pred_check_branch
      %143 = sbr.rel (%p140) target = $region12
    $region11: #{resblock_forward.7} parent=5 // pred_region
      %s144 = ssub.s32 %s10, 1
      // Predicated region
      $region13: #{resblock_forward.7} parent=11 // pred_check
        %p145 = pneg %p31
      $region14: #{resblock_forward.7} parent=11 // pred_check_branch
        %147 = sbr.rel (%p145) target = $region16
      $region15: #{resblock_forward.7} parent=11 // pred_region
        _
      $region16: #{resblock_forward.7} parent=11 // pred_fallthru
        _
      // Predicated region
      $region17: #{resblock_forward.7} parent=11 // pred_check
        %p148 = pneg %p52
      $region18: #{resblock_forward.7} parent=11 // pred_check_branch
        %150 = sbr.rel (%p148) target = $region20
      $region19: #{resblock_forward.7} parent=11 // pred_region
        _
      $region20: #{resblock_forward.7} parent=11 // pred_fallthru
        _
    $region12: #{resblock_forward.7} parent=5 // pred_fallthru
      _
    %p151 = scmp.lt.s32.totalorder %s10, 2
    // Predicated region
    $region21: #{resblock_forward.7} parent=5 // pred_check
      %p152 = pneg %p151
    $region22: #{resblock_forward.7} parent=5 // pred_check_branch
      %154 = sbr.rel (%p152) target = $region24
    $region23: #{resblock_forward.7} parent=5 // pred_region
      // Predicated region
      $region25: #{resblock_forward.7} parent=23 // pred_check
        %p155 = pneg %p72
      $region26: #{resblock_forward.7} parent=23 // pred_check_branch
        %157 = sbr.rel (%p155) target = $region28
      $region27: #{resblock_forward.7} parent=23 // pred_region
        %p158 = scmp.lt.s32.totalorder %s10, 1
        %s159 = scalar_select %p158, %s10, 1
        %s160 = smul.addr %s159, 32
        %s161 = smul.addr %s160, 4
        %s162 = scalar_lea.vmem %s2, %s161
      $region28: #{resblock_forward.7} parent=23 // pred_fallthru
        _
      // Predicated region
      $region29: #{resblock_forward.7} parent=23 // pred_check
        %p163 = pneg %p98
      $region30: #{resblock_forward.7} parent=23 // pred_check_branch
        %165 = sbr.rel (%p163) target = $region32
      $region31: #{resblock_forward.7} parent=23 // pred_region
        %p166 = scmp.lt.s32.totalorder %s10, 1
        %s167 = scalar_select %p166, %s10, 1
        %s168 = smul.addr %s167, 32
        %s169 = smul.addr %s168, 8
        %s170 = scalar_lea.vmem %s3, %s169
      $region32: #{resblock_forward.7} parent=23 // pred_fallthru
        _
    $region24: #{resblock_forward.7} parent=5 // pred_fallthru
      _
    %p171 = scmp.le.s32.totalorder 1, %s10
    %p172 = scmp.lt.s32.totalorder %s10, 3
    %p173 = pnand %p171, %p172
    %p174 = pneg %p173
    // Predicated region
    $region33: #{resblock_forward.7} parent=5 // pred_check
      _
    $region34: #{resblock_forward.7} parent=5 // pred_check_branch
      %176 = sbr.rel (%p173) target = $region36
    $region35: #{resblock_forward.7} parent=5 // pred_region
      %s177 = ssub.s32 %s10, 1
      %p178 = pneg %p31
      %p179 = pneg %p28
      %p180 = pneg %p52
      %p181 = pneg %p49
      %p182 = scmp.lt.s32.totalorder %s15, 1
      %s183 = scalar_select %p182, %s15, 1
      %s184 = smul.addr %s183, 32
      %s185 = smul.addr %s184, 4
      %s186 = scalar_lea.vmem %s2, %s185
      %p187 = pneg %p78
      %p188 = pneg %p75
      %p189 = scmp.lt.s32.totalorder %s15, 1
      %s190 = scalar_select %p189, %s15, 1
      %s191 = smul.addr %s190, 32
      %s192 = smul.addr %s191, 8
      %s193 = scalar_lea.vmem %s3, %s192
      %p194 = pneg %p104
      %p195 = pneg %p101
      %p196 = pneg %p130
      %p197 = pneg %p127
      %p198 = scmp.lt.s32.totalorder %s15, 1
      %s199 = scalar_select %p198, %s15, 1
      %s200 = smul.addr %s199, 32
      %s201 = smul.addr %s200, 8
      %s202 = scalar_lea.vmem %s4, %s201
      %p203 = scmp.lt.s32.totalorder %s15, 1
      %s204 = scalar_select %p203, %s15, 1
      %s205 = smul.addr %s204, 32
      %s206 = smul.addr %s205, 4
      %s207 = scalar_lea.vmem %s2, %s206
      %p208 = scmp.lt.s32.totalorder %s15, 1
      %s209 = scalar_select %p208, %s15, 1
      %s210 = smul.addr %s209, 32
      %s211 = smul.addr %s210, 8
      %s212 = scalar_lea.vmem %s3, %s211
      %p213 = scmp.lt.s32.totalorder %s15, 1
      %s214 = scalar_select %p213, %s15, 1
      %s215 = smul.addr %s214, 32
      %s216 = smul.addr %s215, 8
      %s217 = scalar_lea.vmem %s4, %s216
      %v218 = vld [vmem:[%s0] sm:$0x1]
      %v219 = vld [vmem:[%s0 + $0x2] sm:$0x1]
      %v222 = vrot.slane %v219, 7
      %vm223 = vcmask 1041409
      %v224 = vsel %vm223, %v222, %v218
      %vm226 = vcmask 1041408
      %v227 = vsel %vm226, %v224, 0.0
      %v228 = vrot.slane %v227, 4
      %v229 = vadd.f32 %v227, %v228
      %v230 = vrot.slane %v229, 2
      %v231 = vadd.f32 %v229, %v230
      %v232 = vrot.slane %v231, 1
      %v233 = vadd.f32 %v231, %v232
      %v234 = vmul.f32 %v233, 0.001953125
      %v235 = vld [vmem:[%s0 + $0x1] sm:$0x1]
      %v236 = vld [vmem:[%s0 + $0x3] sm:$0x1]
      %v239 = vrot.slane %v236, 7
      %v240 = vsel %vm223, %v239, %v235
      %v242 = vsel %vm226, %v240, 0.0
      %v243 = vrot.slane %v242, 4
      %v244 = vadd.f32 %v242, %v243
      %v245 = vrot.slane %v244, 2
      %v246 = vadd.f32 %v244, %v245
      %v247 = vrot.slane %v246, 1
      %v248 = vadd.f32 %v246, %v247
      %v249 = vmul.f32 %v248, 0.001953125
      %v250 = vmul.f32 %v234, %v234
      %v251 = vsub.f32 %v249, %v250
      %v252 = vmax.f32 %v251, 0.0
      %v253 = vld [vmem:[%s1] sm:$0x1]
      %v254 = vadd.f32 %v252, 1e-05
      %v255 = vrsqrt.pop %v254
      %v256 = vmul.f32 %v253, %v255
      %v257 = vld [vmem:[%s1 + $0x1] sm:$0x1]
      %v258 = vmul.f32 %v234, %v256
      %v259 = vsub.f32 %v257, %v258
      %v260 = vld [vmem:[%s207] sm:$0xf]
      %v261 = vld [vmem:[%s207 + $0x4] sm:$0xf]
      %v262 = vld [vmem:[%s207 + $0x8] sm:$0xf]
      %v263 = vld [vmem:[%s207 + $0xc] sm:$0xf]
      %v264 = vld [vmem:[%s207 + $0x10] sm:$0xf]
      %v265 = vld [vmem:[%s207 + $0x14] sm:$0xf]
      %v266 = vld [vmem:[%s207 + $0x18] sm:$0xf]
      %v267 = vld [vmem:[%s207 + $0x1c] sm:$0xf]
      %v268 = vld [vmem:[%s207 + $0x20] sm:$0xf]
      %v269 = vld [vmem:[%s207 + $0x24] sm:$0xf]
      %v270 = vld [vmem:[%s207 + $0x28] sm:$0xf]
      %v271 = vld [vmem:[%s207 + $0x2c] sm:$0xf]
      %v272 = vld [vmem:[%s207 + $0x30] sm:$0xf]
      %v273 = vld [vmem:[%s207 + $0x34] sm:$0xf]
      %v274 = vld [vmem:[%s207 + $0x38] sm:$0xf]
      %v275 = vld [vmem:[%s207 + $0x3c] sm:$0xf]
      %v276 = vld [vmem:[%s207 + $0x40] sm:$0xf]
      %v277 = vld [vmem:[%s207 + $0x44] sm:$0xf]
      %v278 = vld [vmem:[%s207 + $0x48] sm:$0xf]
      %v279 = vld [vmem:[%s207 + $0x4c] sm:$0xf]
      %v280 = vld [vmem:[%s207 + $0x50] sm:$0xf]
      %v281 = vld [vmem:[%s207 + $0x54] sm:$0xf]
      %v282 = vld [vmem:[%s207 + $0x58] sm:$0xf]
      %v283 = vld [vmem:[%s207 + $0x5c] sm:$0xf]
      %v284 = vld [vmem:[%s207 + $0x60] sm:$0xf]
      %v285 = vld [vmem:[%s207 + $0x64] sm:$0xf]
      %v286 = vld [vmem:[%s207 + $0x68] sm:$0xf]
      %v287 = vld [vmem:[%s207 + $0x6c] sm:$0xf]
      %v288 = vld [vmem:[%s207 + $0x70] sm:$0xf]
      %v289 = vld [vmem:[%s207 + $0x74] sm:$0xf]
      %v290 = vld [vmem:[%s207 + $0x78] sm:$0xf]
      %v291 = vld [vmem:[%s207 + $0x7c] sm:$0xf]
      %v292 = vunpack.c.l.bf16 %v260
      %v293 = vunpack.c.l.bf16 %v261
      %v294 = vunpack.c.l.bf16 %v262
      %v295 = vunpack.c.l.bf16 %v263
      %v296 = vunpack.c.l.bf16 %v264
      %v297 = vunpack.c.l.bf16 %v265
      %v298 = vunpack.c.l.bf16 %v266
      %v299 = vunpack.c.l.bf16 %v267
      %v300 = vunpack.c.l.bf16 %v268
      %v301 = vunpack.c.l.bf16 %v269
      %v302 = vunpack.c.l.bf16 %v270
      %v303 = vunpack.c.l.bf16 %v271
      %v304 = vunpack.c.l.bf16 %v272
      %v305 = vunpack.c.l.bf16 %v273
      %v306 = vunpack.c.l.bf16 %v274
      %v307 = vunpack.c.l.bf16 %v275
      %v308 = vunpack.c.l.bf16 %v276
      %v309 = vunpack.c.l.bf16 %v277
      %v310 = vunpack.c.l.bf16 %v278
      %v311 = vunpack.c.l.bf16 %v279
      %v312 = vunpack.c.l.bf16 %v280
      %v313 = vunpack.c.l.bf16 %v281
      %v314 = vunpack.c.l.bf16 %v282
      %v315 = vunpack.c.l.bf16 %v283
      %v316 = vunpack.c.l.bf16 %v284
      %v317 = vunpack.c.l.bf16 %v285
      %v318 = vunpack.c.l.bf16 %v286
      %v319 = vunpack.c.l.bf16 %v287
      %v320 = vunpack.c.l.bf16 %v288
      %v321 = vunpack.c.l.bf16 %v289
      %v322 = vunpack.c.l.bf16 %v290
      %v323 = vunpack.c.l.bf16 %v291
      %v324 = vlaneseq
      %v325 = vshrl.u32 %v324, 7
      %v326 = vsub.s32 0, %v325
      %v327 = vrot.slane %v256, %v326
      %v328 = vmul.f32 %v292, %v327
      %v329 = vmul.f32 %v293, %v327
      %v330 = vmul.f32 %v294, %v327
      %v331 = vmul.f32 %v295, %v327
      %v332 = vmul.f32 %v296, %v327
      %v333 = vmul.f32 %v297, %v327
      %v334 = vmul.f32 %v298, %v327
      %v335 = vmul.f32 %v299, %v327
      %v336 = vmul.f32 %v300, %v327
      %v337 = vmul.f32 %v301, %v327
      %v338 = vmul.f32 %v302, %v327
      %v339 = vmul.f32 %v303, %v327
      %v340 = vmul.f32 %v304, %v327
      %v341 = vmul.f32 %v305, %v327
      %v342 = vmul.f32 %v306, %v327
      %v343 = vmul.f32 %v307, %v327
      %v344 = vmul.f32 %v308, %v327
      %v345 = vmul.f32 %v309, %v327
      %v346 = vmul.f32 %v310, %v327
      %v347 = vmul.f32 %v311, %v327
      %v348 = vmul.f32 %v312, %v327
      %v349 = vmul.f32 %v313, %v327
      %v350 = vmul.f32 %v314, %v327
      %v351 = vmul.f32 %v315, %v327
      %v352 = vmul.f32 %v316, %v327
      %v353 = vmul.f32 %v317, %v327
      %v354 = vmul.f32 %v318, %v327
      %v355 = vmul.f32 %v319, %v327
      %v356 = vmul.f32 %v320, %v327
      %v357 = vmul.f32 %v321, %v327
      %v358 = vmul.f32 %v322, %v327
      %v359 = vmul.f32 %v323, %v327
      %v360 = vlaneseq
      %v361 = vshrl.u32 %v360, 7
      %v362 = vsub.s32 0, %v361
      %v363 = vrot.slane %v259, %v362
      %v364 = vadd.f32 %v328, %v363
      %v365 = vadd.f32 %v329, %v363
      %v366 = vadd.f32 %v330, %v363
      %v367 = vadd.f32 %v331, %v363
      %v368 = vadd.f32 %v332, %v363
      %v369 = vadd.f32 %v333, %v363
      %v370 = vadd.f32 %v334, %v363
      %v371 = vadd.f32 %v335, %v363
      %v372 = vadd.f32 %v336, %v363
      %v373 = vadd.f32 %v337, %v363
      %v374 = vadd.f32 %v338, %v363
      %v375 = vadd.f32 %v339, %v363
      %v376 = vadd.f32 %v340, %v363
      %v377 = vadd.f32 %v341, %v363
      %v378 = vadd.f32 %v342, %v363
      %v379 = vadd.f32 %v343, %v363
      %v380 = vadd.f32 %v344, %v363
      %v381 = vadd.f32 %v345, %v363
      %v382 = vadd.f32 %v346, %v363
      %v383 = vadd.f32 %v347, %v363
      %v384 = vadd.f32 %v348, %v363
      %v385 = vadd.f32 %v349, %v363
      %v386 = vadd.f32 %v350, %v363
      %v387 = vadd.f32 %v351, %v363
      %v388 = vadd.f32 %v352, %v363
      %v389 = vadd.f32 %v353, %v363
      %v390 = vadd.f32 %v354, %v363
      %v391 = vadd.f32 %v355, %v363
      %v392 = vadd.f32 %v356, %v363
      %v393 = vadd.f32 %v357, %v363
      %v394 = vadd.f32 %v358, %v363
      %v395 = vadd.f32 %v359, %v363
      %v396 = vld [vmem:[%s212] sm:$0xff]
      %v397 = vld [vmem:[%s212 + $0x8] sm:$0xff]
      %v398 = vld [vmem:[%s212 + $0x10] sm:$0xff]
      %v399 = vld [vmem:[%s212 + $0x18] sm:$0xff]
      %v400 = vld [vmem:[%s212 + $0x20] sm:$0xff]
      %v401 = vld [vmem:[%s212 + $0x28] sm:$0xff]
      %v402 = vld [vmem:[%s212 + $0x30] sm:$0xff]
      %v403 = vld [vmem:[%s212 + $0x38] sm:$0xff]
      %v404 = vld [vmem:[%s212 + $0x40] sm:$0xff]
      %v405 = vld [vmem:[%s212 + $0x48] sm:$0xff]
      %v406 = vld [vmem:[%s212 + $0x50] sm:$0xff]
      %v407 = vld [vmem:[%s212 + $0x58] sm:$0xff]
      %v408 = vld [vmem:[%s212 + $0x60] sm:$0xff]
      %v409 = vld [vmem:[%s212 + $0x68] sm:$0xff]
      %v410 = vld [vmem:[%s212 + $0x70] sm:$0xff]
      %v411 = vld [vmem:[%s212 + $0x78] sm:$0xff]
      %v412 = vld [vmem:[%s212 + $0x80] sm:$0xff]
      %v413 = vld [vmem:[%s212 + $0x88] sm:$0xff]
      %v414 = vld [vmem:[%s212 + $0x90] sm:$0xff]
      %v415 = vld [vmem:[%s212 + $0x98] sm:$0xff]
      %v416 = vld [vmem:[%s212 + $0xa0] sm:$0xff]
      %v417 = vld [vmem:[%s212 + $0xa8] sm:$0xff]
      %v418 = vld [vmem:[%s212 + $0xb0] sm:$0xff]
      %v419 = vld [vmem:[%s212 + $0xb8] sm:$0xff]
      %v420 = vld [vmem:[%s212 + $0xc0] sm:$0xff]
      %v421 = vld [vmem:[%s212 + $0xc8] sm:$0xff]
      %v422 = vld [vmem:[%s212 + $0xd0] sm:$0xff]
      %v423 = vld [vmem:[%s212 + $0xd8] sm:$0xff]
      %v424 = vld [vmem:[%s212 + $0xe0] sm:$0xff]
      %v425 = vld [vmem:[%s212 + $0xe8] sm:$0xff]
      %v426 = vld [vmem:[%s212 + $0xf0] sm:$0xff]
      %v427 = vld [vmem:[%s212 + $0xf8] sm:$0xff]
      %v428 = vadd.f32 %v364, %v396
      %v429 = vadd.f32 %v365, %v397
      %v430 = vadd.f32 %v366, %v398
      %v431 = vadd.f32 %v367, %v399
      %v432 = vadd.f32 %v368, %v400
      %v433 = vadd.f32 %v369, %v401
      %v434 = vadd.f32 %v370, %v402
      %v435 = vadd.f32 %v371, %v403
      %v436 = vadd.f32 %v372, %v404
      %v437 = vadd.f32 %v373, %v405
      %v438 = vadd.f32 %v374, %v406
      %v439 = vadd.f32 %v375, %v407
      %v440 = vadd.f32 %v376, %v408
      %v441 = vadd.f32 %v377, %v409
      %v442 = vadd.f32 %v378, %v410
      %v443 = vadd.f32 %v379, %v411
      %v444 = vadd.f32 %v380, %v412
      %v445 = vadd.f32 %v381, %v413
      %v446 = vadd.f32 %v382, %v414
      %v447 = vadd.f32 %v383, %v415
      %v448 = vadd.f32 %v384, %v416
      %v449 = vadd.f32 %v385, %v417
      %v450 = vadd.f32 %v386, %v418
      %v451 = vadd.f32 %v387, %v419
      %v452 = vadd.f32 %v388, %v420
      %v453 = vadd.f32 %v389, %v421
      %v454 = vadd.f32 %v390, %v422
      %v455 = vadd.f32 %v391, %v423
      %v456 = vadd.f32 %v392, %v424
      %v457 = vadd.f32 %v393, %v425
      %v458 = vadd.f32 %v394, %v426
      %v459 = vadd.f32 %v395, %v427
      %v460 = vmax.f32 %v428, 0.0
      %v461 = vmax.f32 %v429, 0.0
      %v462 = vmax.f32 %v430, 0.0
      %v463 = vmax.f32 %v431, 0.0
      %v464 = vmax.f32 %v432, 0.0
      %v465 = vmax.f32 %v433, 0.0
      %v466 = vmax.f32 %v434, 0.0
      %v467 = vmax.f32 %v435, 0.0
      %v468 = vmax.f32 %v436, 0.0
      %v469 = vmax.f32 %v437, 0.0
      %v470 = vmax.f32 %v438, 0.0
      %v471 = vmax.f32 %v439, 0.0
      %v472 = vmax.f32 %v440, 0.0
      %v473 = vmax.f32 %v441, 0.0
      %v474 = vmax.f32 %v442, 0.0
      %v475 = vmax.f32 %v443, 0.0
      %v476 = vmax.f32 %v444, 0.0
      %v477 = vmax.f32 %v445, 0.0
      %v478 = vmax.f32 %v446, 0.0
      %v479 = vmax.f32 %v447, 0.0
      %v480 = vmax.f32 %v448, 0.0
      %v481 = vmax.f32 %v449, 0.0
      %v482 = vmax.f32 %v450, 0.0
      %v483 = vmax.f32 %v451, 0.0
      %v484 = vmax.f32 %v452, 0.0
      %v485 = vmax.f32 %v453, 0.0
      %v486 = vmax.f32 %v454, 0.0
      %v487 = vmax.f32 %v455, 0.0
      %v488 = vmax.f32 %v456, 0.0
      %v489 = vmax.f32 %v457, 0.0
      %v490 = vmax.f32 %v458, 0.0
      %v491 = vmax.f32 %v459, 0.0
      %492 = vst [vmem:[%s217] sm:$0xff] %v460
      %493 = vst [vmem:[%s217 + $0x8] sm:$0xff] %v461
      %494 = vst [vmem:[%s217 + $0x10] sm:$0xff] %v462
      %495 = vst [vmem:[%s217 + $0x18] sm:$0xff] %v463
      %496 = vst [vmem:[%s217 + $0x20] sm:$0xff] %v464
      %497 = vst [vmem:[%s217 + $0x28] sm:$0xff] %v465
      %498 = vst [vmem:[%s217 + $0x30] sm:$0xff] %v466
      %499 = vst [vmem:[%s217 + $0x38] sm:$0xff] %v467
      %500 = vst [vmem:[%s217 + $0x40] sm:$0xff] %v468
      %501 = vst [vmem:[%s217 + $0x48] sm:$0xff] %v469
      %502 = vst [vmem:[%s217 + $0x50] sm:$0xff] %v470
      %503 = vst [vmem:[%s217 + $0x58] sm:$0xff] %v471
      %504 = vst [vmem:[%s217 + $0x60] sm:$0xff] %v472
      %505 = vst [vmem:[%s217 + $0x68] sm:$0xff] %v473
      %506 = vst [vmem:[%s217 + $0x70] sm:$0xff] %v474
      %507 = vst [vmem:[%s217 + $0x78] sm:$0xff] %v475
      %508 = vst [vmem:[%s217 + $0x80] sm:$0xff] %v476
      %509 = vst [vmem:[%s217 + $0x88] sm:$0xff] %v477
      %510 = vst [vmem:[%s217 + $0x90] sm:$0xff] %v478
      %511 = vst [vmem:[%s217 + $0x98] sm:$0xff] %v479
      %512 = vst [vmem:[%s217 + $0xa0] sm:$0xff] %v480
      %513 = vst [vmem:[%s217 + $0xa8] sm:$0xff] %v481
      %514 = vst [vmem:[%s217 + $0xb0] sm:$0xff] %v482
      %515 = vst [vmem:[%s217 + $0xb8] sm:$0xff] %v483
      %516 = vst [vmem:[%s217 + $0xc0] sm:$0xff] %v484
      %517 = vst [vmem:[%s217 + $0xc8] sm:$0xff] %v485
      %518 = vst [vmem:[%s217 + $0xd0] sm:$0xff] %v486
      %519 = vst [vmem:[%s217 + $0xd8] sm:$0xff] %v487
      %520 = vst [vmem:[%s217 + $0xe0] sm:$0xff] %v488
      %521 = vst [vmem:[%s217 + $0xe8] sm:$0xff] %v489
      %522 = vst [vmem:[%s217 + $0xf0] sm:$0xff] %v490
      %523 = vst [vmem:[%s217 + $0xf8] sm:$0xff] %v491
      %p524 = scmp.lt.s32.totalorder %s15, 1
      %s525 = scalar_select %p524, %s15, 1
      %s526 = smul.addr %s525, 32
      %s527 = smul.addr %s526, 8
      %s528 = scalar_lea.vmem %s4, %s527
      // Predicated region
      $region37: #{resblock_forward.7} parent=35 // pred_check
        %p529 = pneg %p127
      $region38: #{resblock_forward.7} parent=35 // pred_check_branch
        %531 = sbr.rel (%p529) target = $region40
      $region39: #{resblock_forward.7} parent=35 // pred_region
        _
      $region40: #{resblock_forward.7} parent=35 // pred_fallthru
        _
    $region36: #{resblock_forward.7} parent=5 // pred_fallthru
      _
    %p532 = scmp.le.s32.totalorder 2, %s10
    // Predicated region
    $region41: #{resblock_forward.7} parent=5 // pred_check
      %p533 = pneg %p532
    $region42: #{resblock_forward.7} parent=5 // pred_check_branch
      %535 = sbr.rel (%p533) target = $region44
    $region43: #{resblock_forward.7} parent=5 // pred_region
      %s536 = ssub.s32 %s10, 2
      // Predicated region
      $region45: #{resblock_forward.7} parent=43 // pred_check
        %p537 = pneg %p133
      $region46: #{resblock_forward.7} parent=43 // pred_check_branch
        %539 = sbr.rel (%p537) target = $region48
      $region47: #{resblock_forward.7} parent=43 // pred_region
        %p540 = scmp.lt.s32.totalorder %s16, 1
        %s541 = scalar_select %p540, %s16, 1
        %s542 = smul.addr %s541, 32
        %s543 = smul.addr %s542, 8
        %s544 = scalar_lea.vmem %s4, %s543
      $region48: #{resblock_forward.7} parent=43 // pred_fallthru
        _
    $region44: #{resblock_forward.7} parent=5 // pred_fallthru
      _
  $region6: #{resblock_forward.7} parent=0 // loop_footer
    %s14 = sadd.s32 1, %s10
  $region7: #{resblock_forward.7} parent=0 // loop_footer_branch
    %9 = sbr.rel target = $region3
  $region8: #{resblock_forward.7} parent=0 // loop_exit
    _

// kernel: resblock_forward.4
$region0: #{resblock_forward.4}
  #allocation0 [shape = 'u32[]', space=smem, size = 0x4, offset = 0x4, fixed_abs, tag = 'smem constant byte address 0x4 - core index']
  #allocation1 [shape = 'u32[144,128]{1,0:T(1,128)}', space=vmem, size = 0x12000, scoped, tag = 'internal scratch']
  %s0 = inlined_call_operand.vmem [shape: bf16[2,18,18,4], index: 0, kind: input, shape index: {}]
  %s1 = inlined_call_operand.vmem [shape: bf16[9,4,128], index: 1, kind: input, shape index: {}]
  %s2 = inlined_call_operand.vmem [shape: bf16[2,256,128], index: 2, kind: output, shape index: {0}]
  %s3 = inlined_call_operand.vmem [shape: f32[2,2,128], index: 3, kind: output, shape index: {1}]
  %4 = xla_tuple %s2, %s3
  %s5 = sld [smem:[#allocation0]]
  $region49: #{resblock_forward.4} parent=0
    _
  %s7 = ssub.s32 1, %s5
  %s8 = scalar_select 0, %s7, %s5
  loop: start=0, step=1, limit=4
  $region2: #{resblock_forward.4} parent=0 // loop_pre_header
    _
  $region3: #{resblock_forward.4} parent=0 // loop_header
    %s10 = sphi 0, %s14
    %p11 = scmp.ge.s32.totalorder %s10, 4
    %s20 = sphi 0, %s22
    %s23 = sphi 0, %s20
    %s24 = sphi 0, %s23
    %s40 = sphi 0, %s24
    %s44 = sphi 0, %s44
    %s46 = sphi 0, %s44
    %s47 = sphi 0, %s46
    %s61 = sphi 0, %s47
    %s67 = sphi 0, %s69
    %s70 = sphi 0, %s67
    %s71 = sphi 0, %s70
    %s87 = sphi 0, %s71
    %s93 = sphi 0, %s95
    %s96 = sphi 0, %s93
    %s97 = sphi 0, %s96
    %s113 = sphi 0, %s97
  $region4: #{resblock_forward.4} parent=0 // loop_header_branch
    %13 = sbr.rel (%p11) target = $region8
  $region5: #{resblock_forward.4} parent=0 // loop_body
    %s15 = ssub.s32 %s10, 1
    %s16 = ssub.s32 %s10, 2
    %s17 = sadd.s32 %s10, 1
    %s18 = ssub.s32 %s10, %s17
    %p19 = scmp.eq.s32.totalorder %s18, 0
    %s21 = sadd.s32 %s20, 1
    %s22 = scalar_select %p19, %s20, %s21
    %p25 = pneg %p19
    %p26 = scmp.eq.s32.totalorder %s10, 1
    %p27 = por %p25, %p26
    %p28 = scmp.ne.s32.totalorder %s20, %s23
    %p29 = scmp.eq.s32.totalorder %s10, 0
    %p30 = por %p28, %p29
    %p31 = scmp.ne.s32.totalorder %s20, %s23
    %p32 = scmp.eq.s32.totalorder %s15, 1
    %p33 = por %p31, %p32
    %p34 = scmp.ne.s32.totalorder %s23, %s24
    %p35 = scmp.eq.s32.totalorder %s15, 0
    %p36 = por %p34, %p35
    %p37 = scmp.ne.s32.totalorder %s23, %s24
    %p38 = scmp.eq.s32.totalorder %s16, 1
    %p39 = por %p37, %p38
    %p41 = scmp.ne.s32.totalorder %s24, %s40
    %p42 = scmp.eq.s32.totalorder %s16, 0
    %p43 = por %p41, %p42
    %s45 = sadd.s32 %s44, 1
    %p48 = scmp.eq.s32.totalorder %s10, 1
    %p49 = scmp.ne.s32.totalorder %s44, %s46
    %p50 = scmp.eq.s32.totalorder %s10, 0
    %p51 = por %p49, %p50
    %p52 = scmp.ne.s32.totalorder %s44, %s46
    %p53 = scmp.eq.s32.totalorder %s15, 1
    %p54 = por %p52, %p53
    %p55 = scmp.ne.s32.totalorder %s46, %s47
    %p56 = scmp.eq.s32.totalorder %s15, 0
    %p57 = por %p55, %p56
    %p58 = scmp.ne.s32.totalorder %s46, %s47
    %p59 = scmp.eq.s32.totalorder %s16, 1
    %p60 = por %p58, %p59
    %p62 = scmp.ne.s32.totalorder %s47, %s61
    %p63 = scmp.eq.s32.totalorder %s16, 0
    %p64 = por %p62, %p63
    %s65 = ssub.s32 %s10, %s17
    %p66 = scmp.eq.s32.totalorder %s65, 0
    %s68 = sadd.s32 %s67, 1
    %s69 = scalar_select %p66, %s67, %s68
    %p72 = pneg %p66
    %p73 = scmp.eq.s32.totalorder %s10, 1
    %p74 = por %p72, %p73
    %p75 = scmp.ne.s32.totalorder %s67, %s70
    %p76 = scmp.eq.s32.totalorder %s10, 0
    %p77 = por %p75, %p76
    %p78 = scmp.ne.s32.totalorder %s67, %s70
    %p79 = scmp.eq.s32.totalorder %s15, 1
    %p80 = por %p78, %p79
    %p81 = scmp.ne.s32.totalorder %s70, %s71
    %p82 = scmp.eq.s32.totalorder %s15, 0
    %p83 = por %p81, %p82
    %p84 = scmp.ne.s32.totalorder %s70, %s71
    %p85 = scmp.eq.s32.totalorder %s16, 1
    %p86 = por %p84, %p85
    %p88 = scmp.ne.s32.totalorder %s71, %s87
    %p89 = scmp.eq.s32.totalorder %s16, 0
    %p90 = por %p88, %p89
    %s91 = ssub.s32 %s10, %s17
    %p92 = scmp.eq.s32.totalorder %s91, 0
    %s94 = sadd.s32 %s93, 1
    %s95 = scalar_select %p92, %s93, %s94
    %p98 = pneg %p92
    %p99 = scmp.eq.s32.totalorder %s10, 1
    %p100 = por %p98, %p99
    %p101 = scmp.ne.s32.totalorder %s93, %s96
    %p102 = scmp.eq.s32.totalorder %s10, 0
    %p103 = por %p101, %p102
    %p104 = scmp.ne.s32.totalorder %s93, %s96
    %p105 = scmp.eq.s32.totalorder %s15, 1
    %p106 = por %p104, %p105
    %p107 = scmp.ne.s32.totalorder %s96, %s97
    %p108 = scmp.eq.s32.totalorder %s15, 0
    %p109 = por %p107, %p108
    %p110 = scmp.ne.s32.totalorder %s96, %s97
    %p111 = scmp.eq.s32.totalorder %s16, 1
    %p112 = por %p110, %p111
    %p114 = scmp.ne.s32.totalorder %s97, %s113
    %p115 = scmp.eq.s32.totalorder %s16, 0
    %p116 = por %p114, %p115
    %p117 = scmp.le.s32.totalorder 1, %s10
    %p118 = scmp.lt.s32.totalorder %s10, 3
    %p119 = pnand %p117, %p118
    %p120 = pneg %p119
    // Predicated region
    $region9: #{resblock_forward.4} parent=5 // pred_check
      _
    $region10: #{resblock_forward.4} parent=5 // pred_check_branch
      %122 = sbr.rel (%p119) target = $region12
    $region11: #{resblock_forward.4} parent=5 // pred_region
      %s123 = ssub.s32 %s10, 1
      // Predicated region
      $region13: #{resblock_forward.4} parent=11 // pred_check
        %p124 = pneg %p57
      $region14: #{resblock_forward.4} parent=11 // pred_check_branch
        %126 = sbr.rel (%p124) target = $region16
      $region15: #{resblock_forward.4} parent=11 // pred_region
        _
      $region16: #{resblock_forward.4} parent=11 // pred_fallthru
        _
    $region12: #{resblock_forward.4} parent=5 // pred_fallthru
      _
    %p127 = scmp.lt.s32.totalorder %s10, 2
    // Predicated region
    $region17: #{resblock_forward.4} parent=5 // pred_check
      %p128 = pneg %p127
    $region18: #{resblock_forward.4} parent=5 // pred_check_branch
      %130 = sbr.rel (%p128) target = $region20
    $region19: #{resblock_forward.4} parent=5 // pred_region
      // Predicated region
      $region21: #{resblock_forward.4} parent=19 // pred_check
        %p131 = pneg %p30
      $region22: #{resblock_forward.4} parent=19 // pred_check_branch
        %133 = sbr.rel (%p131) target = $region24
      $region23: #{resblock_forward.4} parent=19 // pred_region
        %p134 = scmp.lt.s32.totalorder %s10, 1
        %s135 = scalar_select %p134, %s10, 1
        %s136 = smul.addr %s135, 54
        %s137 = smul.addr %s136, 4
        %s138 = scalar_lea.vmem %s0, %s137
      $region24: #{resblock_forward.4} parent=19 // pred_fallthru
        _
    $region20: #{resblock_forward.4} parent=5 // pred_fallthru
      _
    %p139 = scmp.le.s32.totalorder 1, %s10
    %p140 = scmp.lt.s32.totalorder %s10, 3
    %p141 = pnand %p139, %p140
    %p142 = pneg %p141
    // Predicated region
    $region25: #{resblock_forward.4} parent=5 // pred_check
      _
    $region26: #{resblock_forward.4} parent=5 // pred_check_branch
      %144 = sbr.rel (%p141) target = $region28
    $region27: #{resblock_forward.4} parent=5 // pred_region
      %s145 = ssub.s32 %s10, 1
      %p146 = scmp.lt.s32.totalorder %s15, 1
      %s147 = scalar_select %p146, %s15, 1
      %s148 = smul.addr %s147, 54
      %s149 = smul.addr %s148, 4
      %s150 = scalar_lea.vmem %s0, %s149
      %p151 = pneg %p36
      %p152 = pneg %p33
      %p153 = pneg %p57
      %p154 = pneg %p54
      %p155 = pneg %p83
      %p156 = pneg %p80
      %p157 = scmp.lt.s32.totalorder %s15, 1
      %s158 = scalar_select %p157, %s15, 1
      %s159 = smul.addr %s158, 32
      %s160 = smul.addr %s159, 4
      %s161 = scalar_lea.vmem %s2, %s160
      %p162 = pneg %p109
      %p163 = pneg %p106
      %p164 = scmp.lt.s32.totalorder %s15, 1
      %s165 = scalar_select %p164, %s15, 1
      %s166 = smul.addr %s165, 2
      %s167 = scalar_lea.vmem %s3, %s166
      %p168 = scmp.lt.s32.totalorder %s15, 1
      %s169 = scalar_select %p168, %s15, 1
      %s170 = smul.addr %s169, 54
      %s171 = smul.addr %s170, 4
      %s172 = scalar_lea.vmem %s0, %s171
      %p173 = scmp.lt.s32.totalorder %s15, 1
      %s174 = scalar_select %p173, %s15, 1
      %s175 = smul.addr %s174, 32
      %s176 = smul.addr %s175, 4
      %s177 = scalar_lea.vmem %s2, %s176
      %p178 = scmp.lt.s32.totalorder %s15, 1
      %s179 = scalar_select %p178, %s15, 1
      %s180 = smul.addr %s179, 2
      %s181 = scalar_lea.vmem %s3, %s180
      %v183 = vld [vmem:[%s172] sm:$0xf]
      %v184 = vld [vmem:[%s172 + $0x4] sm:$0xf]
      %v185 = vld [vmem:[%s172 + $0xc] sm:$0xf]
      %v186 = vld [vmem:[%s172 + $0x10] sm:$0xf]
      %v187 = vld [vmem:[%s172 + $0x18] sm:$0xf]
      %v188 = vld [vmem:[%s172 + $0x1c] sm:$0xf]
      %v189 = vld [vmem:[%s172 + $0x24] sm:$0xf]
      %v190 = vld [vmem:[%s172 + $0x28] sm:$0xf]
      %v191 = vld [vmem:[%s172 + $0x30] sm:$0xf]
      %v192 = vld [vmem:[%s172 + $0x34] sm:$0xf]
      %v193 = vld [vmem:[%s172 + $0x3c] sm:$0xf]
      %v194 = vld [vmem:[%s172 + $0x40] sm:$0xf]
      %v195 = vld [vmem:[%s172 + $0x48] sm:$0xf]
      %v196 = vld [vmem:[%s172 + $0x4c] sm:$0xf]
      %v197 = vld [vmem:[%s172 + $0x54] sm:$0xf]
      %v198 = vld [vmem:[%s172 + $0x58] sm:$0xf]
      %v199 = vld [vmem:[%s172 + $0x60] sm:$0xf]
      %v200 = vld [vmem:[%s172 + $0x64] sm:$0xf]
      %v201 = vld [vmem:[%s172 + $0x6c] sm:$0xf]
      %v202 = vld [vmem:[%s172 + $0x70] sm:$0xf]
      %v203 = vld [vmem:[%s172 + $0x78] sm:$0xf]
      %v204 = vld [vmem:[%s172 + $0x7c] sm:$0xf]
      %v205 = vld [vmem:[%s172 + $0x84] sm:$0xf]
      %v206 = vld [vmem:[%s172 + $0x88] sm:$0xf]
      %v207 = vld [vmem:[%s172 + $0x90] sm:$0xf]
      %v208 = vld [vmem:[%s172 + $0x94] sm:$0xf]
      %v209 = vld [vmem:[%s172 + $0x9c] sm:$0xf]
      %v210 = vld [vmem:[%s172 + $0xa0] sm:$0xf]
      %v211 = vld [vmem:[%s172 + $0xa8] sm:$0xf]
      %v212 = vld [vmem:[%s172 + $0xac] sm:$0xf]
      %v213 = vld [vmem:[%s172 + $0xb4] sm:$0xf]
      %v214 = vld [vmem:[%s172 + $0xb8] sm:$0xf]
      %v215 = vld [vmem:[%s1] sm:$0x3]
      %v216 = vld [vmem:[%s172 + $0x8] sm:$0x1]
      %v217 = vld [vmem:[%s172 + $0x14] sm:$0x1]
      %v218 = vld [vmem:[%s172 + $0x20] sm:$0x1]
      %v219 = vld [vmem:[%s172 + $0x2c] sm:$0x1]
      %v220 = vld [vmem:[%s172 + $0x38] sm:$0x1]
      %v221 = vld [vmem:[%s172 + $0x44] sm:$0x1]
      %v222 = vld [vmem:[%s172 + $0x50] sm:$0x1]
      %v223 = vld [vmem:[%s172 + $0x5c] sm:$0x1]
      %v224 = vld [vmem:[%s172 + $0x68] sm:$0x1]
      %v225 = vld [vmem:[%s172 + $0x74] sm:$0x1]
      %v226 = vld [vmem:[%s172 + $0x80] sm:$0x1]
      %v227 = vld [vmem:[%s172 + $0x8c] sm:$0x1]
      %v228 = vld [vmem:[%s172 + $0x98] sm:$0x1]
      %v229 = vld [vmem:[%s172 + $0xa4] sm:$0x1]
      %v230 = vld [vmem:[%s172 + $0xb0] sm:$0x1]
      %v231 = vld [vmem:[%s172 + $0xbc] sm:$0x1]
      %vm232 = vsmask.f32 3328
      %vm233 = vsmask.f32 7440
      %vm234 = vmor %vm232, %vm233
      %v236 = vshrl.u32 %v183, 16
      %v238 = vrot.slane %v236, 4
      %v239 = vshll.u32 %v183, 16
      %v241 = vrot.slane %v239, 5
      %v242 = vor.u32 %v238, %v241
      %v243 = vrot.slane %v242, 4
      %v245 = vshll.u32 %v184, 16
      %v247 = vrot.slane %v245, 5
      %v248 = vsel %vm234, %v243, %v247
      %v249 = vshrl.u32 %v184, 16
      %v251 = vrot.slane %v249, 4
      %v252 = vor.u32 %v251, %v247
      %v253 = vrot.slane %v252, 4
      %v255 = vshll.u32 %v216, 16
      %v257 = vrot.slane %v255, 5
      %v258 = vsel %vm234, %v253, %v257
      %v260 = vshrl.u32 %v185, 16
      %v262 = vrot.slane %v260, 4
      %v263 = vshll.u32 %v185, 16
      %v265 = vrot.slane %v263, 5
      %v266 = vor.u32 %v262, %v265
      %v267 = vrot.slane %v266, 4
      %v269 = vshll.u32 %v186, 16
      %v271 = vrot.slane %v269, 5
      %v272 = vsel %vm234, %v267, %v271
      %v273 = vshrl.u32 %v186, 16
      %v275 = vrot.slane %v273, 4
      %v276 = vor.u32 %v275, %v271
      %v277 = vrot.slane %v276, 4
      %v279 = vshll.u32 %v217, 16
      %v281 = vrot.slane %v279, 5
      %v282 = vsel %vm234, %v277, %v281
      %v284 = vshrl.u32 %v187, 16
      %v286 = vrot.slane %v284, 4
      %v287 = vshll.u32 %v187, 16
      %v289 = vrot.slane %v287, 5
      %v290 = vor.u32 %v286, %v289
      %v291 = vrot.slane %v290, 4
      %v293 = vshll.u32 %v188, 16
      %v295 = vrot.slane %v293, 5
      %v296 = vsel %vm234, %v291, %v295
      %v297 = vshrl.u32 %v188, 16
      %v299 = vrot.slane %v297, 4
      %v300 = vor.u32 %v299, %v295
      %v301 = vrot.slane %v300, 4
      %v303 = vshll.u32 %v218, 16
      %v305 = vrot.slane %v303, 5
      %v306 = vsel %vm234, %v301, %v305
      %v308 = vshrl.u32 %v189, 16
      %v310 = vrot.slane %v308, 4
      %v311 = vshll.u32 %v189, 16
      %v313 = vrot.slane %v311, 5
      %v314 = vor.u32 %v310, %v313
      %v315 = vrot.slane %v314, 4
      %v317 = vshll.u32 %v190, 16
      %v319 = vrot.slane %v317, 5
      %v320 = vsel %vm234, %v315, %v319
      %v321 = vshrl.u32 %v190, 16
      %v323 = vrot.slane %v321, 4
      %v324 = vor.u32 %v323, %v319
      %v325 = vrot.slane %v324, 4
      %v327 = vshll.u32 %v219, 16
      %v329 = vrot.slane %v327, 5
      %v330 = vsel %vm234, %v325, %v329
      %v332 = vshrl.u32 %v191, 16
      %v334 = vrot.slane %v332, 4
      %v335 = vshll.u32 %v191, 16
      %v337 = vrot.slane %v335, 5
      %v338 = vor.u32 %v334, %v337
      %v339 = vrot.slane %v338, 4
      %v341 = vshll.u32 %v192, 16
      %v343 = vrot.slane %v341, 5
      %v344 = vsel %vm234, %v339, %v343
      %v345 = vshrl.u32 %v192, 16
      %v347 = vrot.slane %v345, 4
      %v348 = vor.u32 %v347, %v343
      %v349 = vrot.slane %v348, 4
      %v351 = vshll.u32 %v220, 16
      %v353 = vrot.slane %v351, 5
      %v354 = vsel %vm234, %v349, %v353
      %v356 = vshrl.u32 %v193, 16
      %v358 = vrot.slane %v356, 4
      %v359 = vshll.u32 %v193, 16
      %v361 = vrot.slane %v359, 5
      %v362 = vor.u32 %v358, %v361
      %v363 = vrot.slane %v362, 4
      %v365 = vshll.u32 %v194, 16
      %v367 = vrot.slane %v365, 5
      %v368 = vsel %vm234, %v363, %v367
      %v369 = vshrl.u32 %v194, 16
      %v371 = vrot.slane %v369, 4
      %v372 = vor.u32 %v371, %v367
      %v373 = vrot.slane %v372, 4
      %v375 = vshll.u32 %v221, 16
      %v377 = vrot.slane %v375, 5
      %v378 = vsel %vm234, %v373, %v377
      %v380 = vshrl.u32 %v195, 16
      %v382 = vrot.slane %v380, 4
      %v383 = vshll.u32 %v195, 16
      %v385 = vrot.slane %v383, 5
      %v386 = vor.u32 %v382, %v385
      %v387 = vrot.slane %v386, 4
      %v389 = vshll.u32 %v196, 16
      %v391 = vrot.slane %v389, 5
      %v392 = vsel %vm234, %v387, %v391
      %v393 = vshrl.u32 %v196, 16
      %v395 = vrot.slane %v393, 4
      %v396 = vor.u32 %v395, %v391
      %v397 = vrot.slane %v396, 4
      %v399 = vshll.u32 %v222, 16
      %v401 = vrot.slane %v399, 5
      %v402 = vsel %vm234, %v397, %v401
      %v404 = vshrl.u32 %v197, 16
      %v406 = vrot.slane %v404, 4
      %v407 = vshll.u32 %v197, 16
      %v409 = vrot.slane %v407, 5
      %v410 = vor.u32 %v406, %v409
      %v411 = vrot.slane %v410, 4
      %v413 = vshll.u32 %v198, 16
      %v415 = vrot.slane %v413, 5
      %v416 = vsel %vm234, %v411, %v415
      %v417 = vshrl.u32 %v198, 16
      %v419 = vrot.slane %v417, 4
      %v420 = vor.u32 %v419, %v415
      %v421 = vrot.slane %v420, 4
      %v423 = vshll.u32 %v223, 16
      %v425 = vrot.slane %v423, 5
      %v426 = vsel %vm234, %v421, %v425
      %v428 = vshrl.u32 %v199, 16
      %v430 = vrot.slane %v428, 4
      %v431 = vshll.u32 %v199, 16
      %v433 = vrot.slane %v431, 5
      %v434 = vor.u32 %v430, %v433
      %v435 = vrot.slane %v434, 4
      %v437 = vshll.u32 %v200, 16
      %v439 = vrot.slane %v437, 5
      %v440 = vsel %vm234, %v435, %v439
      %v441 = vshrl.u32 %v200, 16
      %v443 = vrot.slane %v441, 4
      %v444 = vor.u32 %v443, %v439
      %v445 = vrot.slane %v444, 4
      %v447 = vshll.u32 %v224, 16
      %v449 = vrot.slane %v447, 5
      %v450 = vsel %vm234, %v445, %v449
      %v452 = vshrl.u32 %v201, 16
      %v454 = vrot.slane %v452, 4
      %v455 = vshll.u32 %v201, 16
      %v457 = vrot.slane %v455, 5
      %v458 = vor.u32 %v454, %v457
      %v459 = vrot.slane %v458, 4
      %v461 = vshll.u32 %v202, 16
      %v463 = vrot.slane %v461, 5
      %v464 = vsel %vm234, %v459, %v463
      %v465 = vshrl.u32 %v202, 16
      %v467 = vrot.slane %v465, 4
      %v468 = vor.u32 %v467, %v463
      %v469 = vrot.slane %v468, 4
      %v471 = vshll.u32 %v225, 16
      %v473 = vrot.slane %v471, 5
      %v474 = vsel %vm234, %v469, %v473
      %v476 = vshrl.u32 %v203, 16
      %v478 = vrot.slane %v476, 4
      %v479 = vshll.u32 %v203, 16
      %v481 = vrot.slane %v479, 5
      %v482 = vor.u32 %v478, %v481
      %v483 = vrot.slane %v482, 4
      %v485 = vshll.u32 %v204, 16
      %v487 = vrot.slane %v485, 5
      %v488 = vsel %vm234, %v483, %v487
      %v489 = vshrl.u32 %v204, 16
      %v491 = vrot.slane %v489, 4
      %v492 = vor.u32 %v491, %v487
      %v493 = vrot.slane %v492, 4
      %v495 = vshll.u32 %v226, 16
      %v497 = vrot.slane %v495, 5
      %v498 = vsel %vm234, %v493, %v497
      %v500 = vshrl.u32 %v205, 16
      %v502 = vrot.slane %v500, 4
      %v503 = vshll.u32 %v205, 16
      %v505 = vrot.slane %v503, 5
      %v506 = vor.u32 %v502, %v505
      %v507 = vrot.slane %v506, 4
      %v509 = vshll.u32 %v206, 16
      %v511 = vrot.slane %v509, 5
      %v512 = vsel %vm234, %v507, %v511
      %v513 = vshrl.u32 %v206, 16
      %v515 = vrot.slane %v513, 4
      %v516 = vor.u32 %v515, %v511
      %v517 = vrot.slane %v516, 4
      %v519 = vshll.u32 %v227, 16
      %v521 = vrot.slane %v519, 5
      %v522 = vsel %vm234, %v517, %v521
      %v524 = vshrl.u32 %v207, 16
      %v526 = vrot.slane %v524, 4
      %v527 = vshll.u32 %v207, 16
      %v529 = vrot.slane %v527, 5
      %v530 = vor.u32 %v526, %v529
      %v531 = vrot.slane %v530, 4
      %v533 = vshll.u32 %v208, 16
      %v535 = vrot.slane %v533, 5
      %v536 = vsel %vm234, %v531, %v535
      %v537 = vshrl.u32 %v208, 16
      %v539 = vrot.slane %v537, 4
      %v540 = vor.u32 %v539, %v535
      %v541 = vrot.slane %v540, 4
      %v543 = vshll.u32 %v228, 16
      %v545 = vrot.slane %v543, 5
      %v546 = vsel %vm234, %v541, %v545
      %v548 = vshrl.u32 %v209, 16
      %v550 = vrot.slane %v548, 4
      %v551 = vshll.u32 %v209, 16
      %v553 = vrot.slane %v551, 5
      %v554 = vor.u32 %v550, %v553
      %v555 = vrot.slane %v554, 4
      %v557 = vshll.u32 %v210, 16
      %v559 = vrot.slane %v557, 5
      %v560 = vsel %vm234, %v555, %v559
      %v561 = vshrl.u32 %v210, 16
      %v563 = vrot.slane %v561, 4
      %v564 = vor.u32 %v563, %v559
      %v565 = vrot.slane %v564, 4
      %v567 = vshll.u32 %v229, 16
      %v569 = vrot.slane %v567, 5
      %v570 = vsel %vm234, %v565, %v569
      %v572 = vshrl.u32 %v211, 16
      %v574 = vrot.slane %v572, 4
      %v575 = vshll.u32 %v211, 16
      %v577 = vrot.slane %v575, 5
      %v578 = vor.u32 %v574, %v577
      %v579 = vrot.slane %v578, 4
      %v581 = vshll.u32 %v212, 16
      %v583 = vrot.slane %v581, 5
      %v584 = vsel %vm234, %v579, %v583
      %v585 = vshrl.u32 %v212, 16
      %v587 = vrot.slane %v585, 4
      %v588 = vor.u32 %v587, %v583
      %v589 = vrot.slane %v588, 4
      %v591 = vshll.u32 %v230, 16
      %v593 = vrot.slane %v591, 5
      %v594 = vsel %vm234, %v589, %v593
      %v596 = vshrl.u32 %v213, 16
      %v598 = vrot.slane %v596, 4
      %v599 = vshll.u32 %v213, 16
      %v601 = vrot.slane %v599, 5
      %v602 = vor.u32 %v598, %v601
      %v603 = vrot.slane %v602, 4
      %v605 = vshll.u32 %v214, 16
      %v607 = vrot.slane %v605, 5
      %v608 = vsel %vm234, %v603, %v607
      %v609 = vshrl.u32 %v214, 16
      %v611 = vrot.slane %v609, 4
      %v612 = vor.u32 %v611, %v607
      %v613 = vrot.slane %v612, 4
      %v615 = vshll.u32 %v231, 16
      %v617 = vrot.slane %v615, 5
      %v618 = vsel %vm234, %v613, %v617
      %s619 = scalar_lea.vmem %s1, 2
      %v620 = vld [vmem:[%s619] sm:$0x3]
      %v621 = vunpack.c.l.b16 %v248
      %v622 = vunpack.c.l.b16 %v258
      %v623 = vunpack.c.l.b16 %v272
      %v624 = vunpack.c.l.b16 %v282
      %v625 = vunpack.c.l.b16 %v296
      %v626 = vunpack.c.l.b16 %v306
      %v627 = vunpack.c.l.b16 %v320
      %v628 = vunpack.c.l.b16 %v330
      %v629 = vunpack.c.l.b16 %v344
      %v630 = vunpack.c.l.b16 %v354
      %v631 = vunpack.c.l.b16 %v368
      %v632 = vunpack.c.l.b16 %v378
      %v633 = vunpack.c.l.b16 %v392
      %v634 = vunpack.c.l.b16 %v402
      %v635 = vunpack.c.l.b16 %v416
      %v636 = vunpack.c.l.b16 %v426
      %v637 = vunpack.c.l.b16 %v440
      %v638 = vunpack.c.l.b16 %v450
      %v639 = vunpack.c.l.b16 %v464
      %v640 = vunpack.c.l.b16 %v474
      %v641 = vunpack.c.l.b16 %v488
      %v642 = vunpack.c.l.b16 %v498
      %v643 = vunpack.c.l.b16 %v512
      %v644 = vunpack.c.l.b16 %v522
      %v645 = vunpack.c.l.b16 %v536
      %v646 = vunpack.c.l.b16 %v546
      %v647 = vunpack.c.l.b16 %v560
      %v648 = vunpack.c.l.b16 %v570
      %v649 = vunpack.c.l.b16 %v584
      %v650 = vunpack.c.l.b16 %v594
      %v651 = vunpack.c.l.b16 %v608
      %v652 = vunpack.c.l.b16 %v618
      %v653 = vpack.c.b16 %v622, %v621
      %v654 = vpack.c.b16 %v624, %v623
      %v655 = vpack.c.b16 %v626, %v625
      %v656 = vpack.c.b16 %v628, %v627
      %v657 = vpack.c.b16 %v630, %v629
      %v658 = vpack.c.b16 %v632, %v631
      %v659 = vpack.c.b16 %v634, %v633
      %v660 = vpack.c.b16 %v636, %v635
      %v661 = vpack.c.b16 %v638, %v637
      %v662 = vpack.c.b16 %v640, %v639
      %v663 = vpack.c.b16 %v642, %v641
      %v664 = vpack.c.b16 %v644, %v643
      %v665 = vpack.c.b16 %v646, %v645
      %v666 = vpack.c.b16 %v648, %v647
      %v667 = vpack.c.b16 %v650, %v649
      %v668 = vpack.c.b16 %v652, %v651
      %vm669 = vcmask 31744
      %v671 = vsel %vm669, %v653, 0
      %v674 = vsel %vm669, %v654, 0
      %v677 = vsel %vm669, %v655, 0
      %v680 = vsel %vm669, %v656, 0
      %v683 = vsel %vm669, %v657, 0
      %v686 = vsel %vm669, %v658, 0
      %v689 = vsel %vm669, %v659, 0
      %v692 = vsel %vm669, %v660, 0
      %v695 = vsel %vm669, %v661, 0
      %v698 = vsel %vm669, %v662, 0
      %v701 = vsel %vm669, %v663, 0
      %v704 = vsel %vm669, %v664, 0
      %v707 = vsel %vm669, %v665, 0
      %v710 = vsel %vm669, %v666, 0
      %v713 = vsel %vm669, %v667, 0
      %v716 = vsel %vm669, %v668, 0
      %vm718 = vcmask 1041408
      %v720 = vsel %vm718, %v620, 0
      %722 = vmatprep.subr.bf16.mxu0 0
      %723 = vmatpush1.bf16.msra.mxu0 0
      %724 = vmatprep.subr.bf16.mxu0 0
      %725 = vmatpush1.bf16.msra.mxu0 0
      %726 = vmatprep.subr.bf16.mxu0 0
      %727 = vmatpush1.bf16.msra.mxu0 0
      %728 = vmatprep.subr.bf16.mxu0 0
      %729 = vmatpush1.bf16.msra.mxu0 0
      %730 = vmatprep.subr.bf16.mxu0 0
      %731 = vmatpush1.bf16.msra.mxu0 0
      %732 = vmatprep.subr.bf16.mxu0 0
      %733 = vmatpush1.bf16.msra.mxu0 0
      %734 = vmatprep.subr.bf16.mxu0 0
      %735 = vmatpush1.bf16.msra.mxu0 0
      %736 = vmatprep.subr.bf16.mxu0 0
      %737 = vmatpush1.bf16.msra.mxu0 %v720
      %738 = vmatprep.subr.bf16.mxu0 0
      %739 = vmatpush2.bf16.msra.mxu0 0
      %740 = vmatprep.subr.bf16.mxu0 0
      %741 = vmatpush2.bf16.msra.mxu0 0
      %742 = vmatprep.subr.bf16.mxu0 0
      %743 = vmatpush2.bf16.msra.mxu0 0
      %744 = vmatprep.subr.bf16.mxu0 0
      %745 = vmatpush2.bf16.msra.mxu0 0
      %746 = vmatprep.subr.bf16.mxu0 0
      %747 = vmatpush2.bf16.msra.mxu0 0
      %748 = vmatprep.subr.bf16.mxu0 0
      %749 = vmatpush2.bf16.msra.mxu0 0
      %750 = vmatprep.subr.bf16.mxu0 0
      %751 = vmatpush2.bf16.msra.mxu0 0
      %752 = vmatprep.subr.bf16.mxu0 0
      %753 = vmatpush2.bf16.msra.mxu0 0
      %754 = vmatprep.mubr.bf16.mxu0 0
      %755 = vmatmul.mubr.bf16.gmra.mxu0 %v671
      %v756 = vpop.f32.mrf.mxu0
      %v757 = vadd.f32 0.0, %v756
      %v758 = vpop.f32.mrf.mxu0
      %v759 = vpop.f32.mrf.mxu0
      %v760 = vadd.f32 0.0, %v759
      %v761 = vpop.f32.mrf.mxu0
      %762 = vmatprep.mubr.bf16.mxu0 0
      %763 = vmatmul.mubr.bf16.gmra.mxu0 %v674
      %v764 = vpop.f32.mrf.mxu0
      %v765 = vadd.f32 0.0, %v764
      %v766 = vpop.f32.mrf.mxu0
      %v767 = vpop.f32.mrf.mxu0
      %v768 = vadd.f32 0.0, %v767
      %v769 = vpop.f32.mrf.mxu0
      %770 = vmatprep.mubr.bf16.mxu0 0
      %771 = vmatmul.mubr.bf16.gmra.mxu0 %v677
      %v772 = vpop.f32.mrf.mxu0
      %v773 = vadd.f32 0.0, %v772
      %v774 = vpop.f32.mrf.mxu0
      %v775 = vpop.f32.mrf.mxu0
      %v776 = vadd.f32 0.0, %v775
      %v777 = vpop.f32.mrf.mxu0
      %778 = vmatprep.mubr.bf16.mxu0 0
      %779 = vmatmul.mubr.bf16.gmra.mxu0 %v680
      %v780 = vpop.f32.mrf.mxu0
      %v781 = vadd.f32 0.0, %v780
      %v782 = vpop.f32.mrf.mxu0
      %v783 = vpop.f32.mrf.mxu0
      %v784 = vadd.f32 0.0, %v783
      %v785 = vpop.f32.mrf.mxu0
      %786 = vmatprep.mubr.bf16.mxu0 0
      %787 = vmatmul.mubr.bf16.gmra.mxu0 %v683
      %v788 = vpop.f32.mrf.mxu0
      %v789 = vadd.f32 0.0, %v788
      %v790 = vpop.f32.mrf.mxu0
      %v791 = vpop.f32.mrf.mxu0
      %v792 = vadd.f32 0.0, %v791
      %v793 = vpop.f32.mrf.mxu0
      %794 = vmatprep.mubr.bf16.mxu0 0
      %795 = vmatmul.mubr.bf16.gmra.mxu0 %v686
      %v796 = vpop.f32.mrf.mxu0
      %v797 = vadd.f32 0.0, %v796
      %v798 = vpop.f32.mrf.mxu0
      %v799 = vpop.f32.mrf.mxu0
      %v800 = vadd.f32 0.0, %v799
      %v801 = vpop.f32.mrf.mxu0
      %802 = vmatprep.mubr.bf16.mxu0 0
      %803 = vmatmul.mubr.bf16.gmra.mxu0 %v689
      %v804 = vpop.f32.mrf.mxu0
      %v805 = vadd.f32 0.0, %v804
      %v806 = vpop.f32.mrf.mxu0
      %v807 = vpop.f32.mrf.mxu0
      %v808 = vadd.f32 0.0, %v807
      %v809 = vpop.f32.mrf.mxu0
      %810 = vmatprep.mubr.bf16.mxu0 0
      %811 = vmatmul.mubr.bf16.gmra.mxu0 %v692
      %v812 = vpop.f32.mrf.mxu0
      %v813 = vadd.f32 0.0, %v812
      %v814 = vpop.f32.mrf.mxu0
      %v815 = vpop.f32.mrf.mxu0
      %v816 = vadd.f32 0.0, %v815
      %v817 = vpop.f32.mrf.mxu0
      %818 = vmatprep.mubr.bf16.mxu0 0
      %819 = vmatmul.mubr.bf16.gmra.mxu0 %v695
      %v820 = vpop.f32.mrf.mxu0
      %v821 = vadd.f32 0.0, %v820
      %v822 = vpop.f32.mrf.mxu0
      %v823 = vpop.f32.mrf.mxu0
      %v824 = vadd.f32 0.0, %v823
      %v825 = vpop.f32.mrf.mxu0
      %826 = vmatprep.mubr.bf16.mxu0 0
      %827 = vmatmul.mubr.bf16.gmra.mxu0 %v698
      %v828 = vpop.f32.mrf.mxu0
      %v829 = vadd.f32 0.0, %v828
      %v830 = vpop.f32.mrf.mxu0
      %v831 = vpop.f32.mrf.mxu0
      %v832 = vadd.f32 0.0, %v831
      %v833 = vpop.f32.mrf.mxu0
      %834 = vmatprep.mubr.bf16.mxu0 0
      %835 = vmatmul.mubr.bf16.gmra.mxu0 %v701
      %v836 = vpop.f32.mrf.mxu0
      %v837 = vadd.f32 0.0, %v836
      %v838 = vpop.f32.mrf.mxu0
      %v839 = vpop.f32.mrf.mxu0
      %v840 = vadd.f32 0.0, %v839
      %v841 = vpop.f32.mrf.mxu0
      %842 = vmatprep.mubr.bf16.mxu0 0
      %843 = vmatmul.mubr.bf16.gmra.mxu0 %v704
      %v844 = vpop.f32.mrf.mxu0
      %v845 = vadd.f32 0.0, %v844
      %v846 = vpop.f32.mrf.mxu0
      %v847 = vpop.f32.mrf.mxu0
      %v848 = vadd.f32 0.0, %v847
      %v849 = vpop.f32.mrf.mxu0
      %850 = vmatprep.mubr.bf16.mxu0 0
      %851 = vmatmul.mubr.bf16.gmra.mxu0 %v707
      %v852 = vpop.f32.mrf.mxu0
      %v853 = vadd.f32 0.0, %v852
      %v854 = vpop.f32.mrf.mxu0
      %v855 = vpop.f32.mrf.mxu0
      %v856 = vadd.f32 0.0, %v855
      %v857 = vpop.f32.mrf.mxu0
      %858 = vmatprep.mubr.bf16.mxu0 0
      %859 = vmatmul.mubr.bf16.gmra.mxu0 %v710
      %v860 = vpop.f32.mrf.mxu0
      %v861 = vadd.f32 0.0, %v860
      %v862 = vpop.f32.mrf.mxu0
      %v863 = vpop.f32.mrf.mxu0
      %v864 = vadd.f32 0.0, %v863
      %v865 = vpop.f32.mrf.mxu0
      %866 = vmatprep.mubr.bf16.mxu0 0
      %867 = vmatmul.mubr.bf16.gmra.mxu0 %v713
      %v868 = vpop.f32.mrf.mxu0
      %v869 = vadd.f32 0.0, %v868
      %v870 = vpop.f32.mrf.mxu0
      %v871 = vpop.f32.mrf.mxu0
      %v872 = vadd.f32 0.0, %v871
      %v873 = vpop.f32.mrf.mxu0
      %874 = vmatprep.mubr.bf16.mxu0 0
      %875 = vmatmul.mubr.bf16.gmra.mxu0 %v716
      %v876 = vpop.f32.mrf.mxu0
      %v877 = vadd.f32 0.0, %v876
      %v878 = vpop.f32.mrf.mxu0
      %v879 = vpop.f32.mrf.mxu0
      %v880 = vadd.f32 0.0, %v879
      %v881 = vpop.f32.mrf.mxu0
      %882 = vdwg.mxu0
      %v915 = vunpack.c.l.b16 %v183
      %v916 = vunpack.c.l.b16 %v184
      %v917 = vunpack.c.l.b16 %v185
      %v918 = vunpack.c.l.b16 %v186
      %v919 = vunpack.c.l.b16 %v187
      %v920 = vunpack.c.l.b16 %v188
      %v921 = vunpack.c.l.b16 %v189
      %v922 = vunpack.c.l.b16 %v190
      %v923 = vunpack.c.l.b16 %v191
      %v924 = vunpack.c.l.b16 %v192
      %v925 = vunpack.c.l.b16 %v193
      %v926 = vunpack.c.l.b16 %v194
      %v927 = vunpack.c.l.b16 %v195
      %v928 = vunpack.c.l.b16 %v196
      %v929 = vunpack.c.l.b16 %v197
      %v930 = vunpack.c.l.b16 %v198
      %v931 = vunpack.c.l.b16 %v199
      %v932 = vunpack.c.l.b16 %v200
      %v933 = vunpack.c.l.b16 %v201
      %v934 = vunpack.c.l.b16 %v202
      %v935 = vunpack.c.l.b16 %v203
      %v936 = vunpack.c.l.b16 %v204
      %v937 = vunpack.c.l.b16 %v205
      %v938 = vunpack.c.l.b16 %v206
      %v939 = vunpack.c.l.b16 %v207
      %v940 = vunpack.c.l.b16 %v208
      %v941 = vunpack.c.l.b16 %v209
      %v942 = vunpack.c.l.b16 %v210
      %v943 = vunpack.c.l.b16 %v211
      %v944 = vunpack.c.l.b16 %v212
      %v945 = vunpack.c.l.b16 %v213
      %v946 = vunpack.c.l.b16 %v214
      %v947 = vpack.c.b16 %v916, %v915
      %v948 = vpack.c.b16 %v918, %v917
      %v949 = vpack.c.b16 %v920, %v919
      %v950 = vpack.c.b16 %v922, %v921
      %v951 = vpack.c.b16 %v924, %v923
      %v952 = vpack.c.b16 %v926, %v925
      %v953 = vpack.c.b16 %v928, %v927
      %v954 = vpack.c.b16 %v930, %v929
      %v955 = vpack.c.b16 %v932, %v931
      %v956 = vpack.c.b16 %v934, %v933
      %v957 = vpack.c.b16 %v936, %v935
      %v958 = vpack.c.b16 %v938, %v937
      %v959 = vpack.c.b16 %v940, %v939
      %v960 = vpack.c.b16 %v942, %v941
      %v961 = vpack.c.b16 %v944, %v943
      %v962 = vpack.c.b16 %v946, %v945
      %v964 = vsel %vm669, %v947, 0
      %v967 = vsel %vm669, %v948, 0
      %v970 = vsel %vm669, %v949, 0
      %v973 = vsel %vm669, %v950, 0
      %v976 = vsel %vm669, %v951, 0
      %v979 = vsel %vm669, %v952, 0
      %v982 = vsel %vm669, %v953, 0
      %v985 = vsel %vm669, %v954, 0
      %v988 = vsel %vm669, %v955, 0
      %v991 = vsel %vm669, %v956, 0
      %v994 = vsel %vm669, %v957, 0
      %v997 = vsel %vm669, %v958, 0
      %v1000 = vsel %vm669, %v959, 0
      %v1003 = vsel %vm669, %v960, 0
      %v1006 = vsel %vm669, %v961, 0
      %v1009 = vsel %vm669, %v962, 0
      %v1012 = vsel %vm718, %v215, 0
      %1014 = vmatprep.subr.bf16.mxu0 0
      %1015 = vmatpush1.bf16.msra.mxu0 0
      %1016 = vmatprep.subr.bf16.mxu0 0
      %1017 = vmatpush1.bf16.msra.mxu0 0
      %1018 = vmatprep.subr.bf16.mxu0 0
      %1019 = vmatpush1.bf16.msra.mxu0 0
      %1020 = vmatprep.subr.bf16.mxu0 0
      %1021 = vmatpush1.bf16.msra.mxu0 0
      %1022 = vmatprep.subr.bf16.mxu0 0
      %1023 = vmatpush1.bf16.msra.mxu0 0
      %1024 = vmatprep.subr.bf16.mxu0 0
      %1025 = vmatpush1.bf16.msra.mxu0 0
      %1026 = vmatprep.subr.bf16.mxu0 0
      %1027 = vmatpush1.bf16.msra.mxu0 0
      %1028 = vmatprep.subr.bf16.mxu0 0
      %1029 = vmatpush1.bf16.msra.mxu0 %v1012
      %1030 = vmatprep.subr.bf16.mxu0 0
      %1031 = vmatpush2.bf16.msra.mxu0 0
      %1032 = vmatprep.subr.bf16.mxu0 0
      %1033 = vmatpush2.bf16.msra.mxu0 0
      %1034 = vmatprep.subr.bf16.mxu0 0
      %1035 = vmatpush2.bf16.msra.mxu0 0
      %1036 = vmatprep.subr.bf16.mxu0 0
      %1037 = vmatpush2.bf16.msra.mxu0 0
      %1038 = vmatprep.subr.bf16.mxu0 0
      %1039 = vmatpush2.bf16.msra.mxu0 0
      %1040 = vmatprep.subr.bf16.mxu0 0
      %1041 = vmatpush2.bf16.msra.mxu0 0
      %1042 = vmatprep.subr.bf16.mxu0 0
      %1043 = vmatpush2.bf16.msra.mxu0 0
      %1044 = vmatprep.subr.bf16.mxu0 0
      %1045 = vmatpush2.bf16.msra.mxu0 0
      %1046 = vmatprep.mubr.bf16.mxu0 0
      %1047 = vmatmul.mubr.bf16.gmra.mxu0 %v964
      %v1048 = vpop.f32.mrf.mxu0
      %v1049 = vadd.f32 %v757, %v1048
      %v1050 = vpop.f32.mrf.mxu0
      %v1051 = vpop.f32.mrf.mxu0
      %v1052 = vadd.f32 %v760, %v1051
      %v1053 = vpop.f32.mrf.mxu0
      %1054 = vmatprep.mubr.bf16.mxu0 0
      %1055 = vmatmul.mubr.bf16.gmra.mxu0 %v967
      %v1056 = vpop.f32.mrf.mxu0
      %v1057 = vadd.f32 %v765, %v1056
      %v1058 = vpop.f32.mrf.mxu0
      %v1059 = vpop.f32.mrf.mxu0
      %v1060 = vadd.f32 %v768, %v1059
      %v1061 = vpop.f32.mrf.mxu0
      %1062 = vmatprep.mubr.bf16.mxu0 0
      %1063 = vmatmul.mubr.bf16.gmra.mxu0 %v970
      %v1064 = vpop.f32.mrf.mxu0
      %v1065 = vadd.f32 %v773, %v1064
      %v1066 = vpop.f32.mrf.mxu0
      %v1067 = vpop.f32.mrf.mxu0
      %v1068 = vadd.f32 %v776, %v1067
      %v1069 = vpop.f32.mrf.mxu0
      %1070 = vmatprep.mubr.bf16.mxu0 0
      %1071 = vmatmul.mubr.bf16.gmra.mxu0 %v973
      %v1072 = vpop.f32.mrf.mxu0
      %v1073 = vadd.f32 %v781, %v1072
      %v1074 = vpop.f32.mrf.mxu0
      %v1075 = vpop.f32.mrf.mxu0
      %v1076 = vadd.f32 %v784, %v1075
      %v1077 = vpop.f32.mrf.mxu0
      %1078 = vmatprep.mubr.bf16.mxu0 0
      %1079 = vmatmul.mubr.bf16.gmra.mxu0 %v976
      %v1080 = vpop.f32.mrf.mxu0
      %v1081 = vadd.f32 %v789, %v1080
      %v1082 = vpop.f32.mrf.mxu0
      %v1083 = vpop.f32.mrf.mxu0
      %v1084 = vadd.f32 %v792, %v1083
      %v1085 = vpop.f32.mrf.mxu0
      %1086 = vmatprep.mubr.bf16.mxu0 0
      %1087 = vmatmul.mubr.bf16.gmra.mxu0 %v979
      %v1088 = vpop.f32.mrf.mxu0
      %v1089 = vadd.f32 %v797, %v1088
      %v1090 = vpop.f32.mrf.mxu0
      %v1091 = vpop.f32.mrf.mxu0
      %v1092 = vadd.f32 %v800, %v1091
      %v1093 = vpop.f32.mrf.mxu0
      %1094 = vmatprep.mubr.bf16.mxu0 0
      %1095 = vmatmul.mubr.bf16.gmra.mxu0 %v982
      %v1096 = vpop.f32.mrf.mxu0
      %v1097 = vadd.f32 %v805, %v1096
      %v1098 = vpop.f32.mrf.mxu0
      %v1099 = vpop.f32.mrf.mxu0
      %v1100 = vadd.f32 %v808, %v1099
      %v1101 = vpop.f32.mrf.mxu0
      %1102 = vmatprep.mubr.bf16.mxu0 0
      %1103 = vmatmul.mubr.bf16.gmra.mxu0 %v985
      %v1104 = vpop.f32.mrf.mxu0
      %v1105 = vadd.f32 %v813, %v1104
      %v1106 = vpop.f32.mrf.mxu0
      %v1107 = vpop.f32.mrf.mxu0
      %v1108 = vadd.f32 %v816, %v1107
      %v1109 = vpop.f32.mrf.mxu0
      %1110 = vmatprep.mubr.bf16.mxu0 0
      %1111 = vmatmul.mubr.bf16.gmra.mxu0 %v988
      %v1112 = vpop.f32.mrf.mxu0
      %v1113 = vadd.f32 %v821, %v1112
      %v1114 = vpop.f32.mrf.mxu0
      %v1115 = vpop.f32.mrf.mxu0
      %v1116 = vadd.f32 %v824, %v1115
      %v1117 = vpop.f32.mrf.mxu0
      %1118 = vmatprep.mubr.bf16.mxu0 0
      %1119 = vmatmul.mubr.bf16.gmra.mxu0 %v991
      %v1120 = vpop.f32.mrf.mxu0
      %v1121 = vadd.f32 %v829, %v1120
      %v1122 = vpop.f32.mrf.mxu0
      %v1123 = vpop.f32.mrf.mxu0
      %v1124 = vadd.f32 %v832, %v1123
      %v1125 = vpop.f32.mrf.mxu0
      %1126 = vmatprep.mubr.bf16.mxu0 0
      %1127 = vmatmul.mubr.bf16.gmra.mxu0 %v994
      %v1128 = vpop.f32.mrf.mxu0
      %v1129 = vadd.f32 %v837, %v1128
      %v1130 = vpop.f32.mrf.mxu0
      %v1131 = vpop.f32.mrf.mxu0
      %v1132 = vadd.f32 %v840, %v1131
      %v1133 = vpop.f32.mrf.mxu0
      %1134 = vmatprep.mubr.bf16.mxu0 0
      %1135 = vmatmul.mubr.bf16.gmra.mxu0 %v997
      %v1136 = vpop.f32.mrf.mxu0
      %v1137 = vadd.f32 %v845, %v1136
      %v1138 = vpop.f32.mrf.mxu0
      %v1139 = vpop.f32.mrf.mxu0
      %v1140 = vadd.f32 %v848, %v1139
      %v1141 = vpop.f32.mrf.mxu0
      %1142 = vmatprep.mubr.bf16.mxu0 0
      %1143 = vmatmul.mubr.bf16.gmra.mxu0 %v1000
      %v1144 = vpop.f32.mrf.mxu0
      %v1145 = vadd.f32 %v853, %v1144
      %v1146 = vpop.f32.mrf.mxu0
      %v1147 = vpop.f32.mrf.mxu0
      %v1148 = vadd.f32 %v856, %v1147
      %v1149 = vpop.f32.mrf.mxu0
      %1150 = vmatprep.mubr.bf16.mxu0 0
      %1151 = vmatmul.mubr.bf16.gmra.mxu0 %v1003
      %v1152 = vpop.f32.mrf.mxu0
      %v1153 = vadd.f32 %v861, %v1152
      %v1154 = vpop.f32.mrf.mxu0
      %v1155 = vpop.f32.mrf.mxu0
      %v1156 = vadd.f32 %v864, %v1155
      %v1157 = vpop.f32.mrf.mxu0
      %1158 = vmatprep.mubr.bf16.mxu0 0
      %1159 = vmatmul.mubr.bf16.gmra.mxu0 %v1006
      %v1160 = vpop.f32.mrf.mxu0
      %v1161 = vadd.f32 %v869, %v1160
      %v1162 = vpop.f32.mrf.mxu0
      %v1163 = vpop.f32.mrf.mxu0
      %v1164 = vadd.f32 %v872, %v1163
      %v1165 = vpop.f32.mrf.mxu0
      %1166 = vmatprep.mubr.bf16.mxu0 0
      %1167 = vmatmul.mubr.bf16.gmra.mxu0 %v1009
      %v1168 = vpop.f32.mrf.mxu0
      %v1169 = vadd.f32 %v877, %v1168
      %v1170 = vpop.f32.mrf.mxu0
      %v1171 = vpop.f32.mrf.mxu0
      %v1172 = vadd.f32 %v880, %v1171
      %v1173 = vpop.f32.mrf.mxu0
      %1174 = vdwg.mxu0
      %v1175 = vld [vmem:[%s172] sm:$0xe]
      %v1176 = vld [vmem:[%s172 + $0xc] sm:$0xe]
      %v1177 = vld [vmem:[%s172 + $0x18] sm:$0xe]
      %v1178 = vld [vmem:[%s172 + $0x24] sm:$0xe]
      %v1179 = vld [vmem:[%s172 + $0x30] sm:$0xe]
      %v1180 = vld [vmem:[%s172 + $0x3c] sm:$0xe]
      %v1181 = vld [vmem:[%s172 + $0x48] sm:$0xe]
      %v1182 = vld [vmem:[%s172 + $0x54] sm:$0xe]
      %v1183 = vld [vmem:[%s172 + $0x60] sm:$0xe]
      %v1184 = vld [vmem:[%s172 + $0x6c] sm:$0xe]
      %v1185 = vld [vmem:[%s172 + $0x78] sm:$0xe]
      %v1186 = vld [vmem:[%s172 + $0x84] sm:$0xe]
      %v1187 = vld [vmem:[%s172 + $0x90] sm:$0xe]
      %v1188 = vld [vmem:[%s172 + $0x9c] sm:$0xe]
      %v1189 = vld [vmem:[%s172 + $0xa8] sm:$0xe]
      %v1190 = vld [vmem:[%s172 + $0xb4] sm:$0xe]
      %vm1223 = vcmask 1042432
      %vm1224 = vcmask 1046532
      %vm1225 = vmor %vm1223, %vm1224
      %v1226 = vrot.slane %v1175, 5
      %v1227 = vrot.slane %v1226, 4
      %v1228 = vrot.slane %v184, 5
      %v1229 = vsel %vm1225, %v1227, %v1228
      %v1230 = vrot.slane %v1228, 4
      %v1231 = vrot.slane %v216, 5
      %v1232 = vsel %vm1225, %v1230, %v1231
      %v1233 = vrot.slane %v1176, 5
      %v1234 = vrot.slane %v1233, 4
      %v1235 = vrot.slane %v186, 5
      %v1236 = vsel %vm1225, %v1234, %v1235
      %v1237 = vrot.slane %v1235, 4
      %v1238 = vrot.slane %v217, 5
      %v1239 = vsel %vm1225, %v1237, %v1238
      %v1240 = vrot.slane %v1177, 5
      %v1241 = vrot.slane %v1240, 4
      %v1242 = vrot.slane %v188, 5
      %v1243 = vsel %vm1225, %v1241, %v1242
      %v1244 = vrot.slane %v1242, 4
      %v1245 = vrot.slane %v218, 5
      %v1246 = vsel %vm1225, %v1244, %v1245
      %v1247 = vrot.slane %v1178, 5
      %v1248 = vrot.slane %v1247, 4
      %v1249 = vrot.slane %v190, 5
      %v1250 = vsel %vm1225, %v1248, %v1249
      %v1251 = vrot.slane %v1249, 4
      %v1252 = vrot.slane %v219, 5
      %v1253 = vsel %vm1225, %v1251, %v1252
      %v1254 = vrot.slane %v1179, 5
      %v1255 = vrot.slane %v1254, 4
      %v1256 = vrot.slane %v192, 5
      %v1257 = vsel %vm1225, %v1255, %v1256
      %v1258 = vrot.slane %v1256, 4
      %v1259 = vrot.slane %v220, 5
      %v1260 = vsel %vm1225, %v1258, %v1259
      %v1261 = vrot.slane %v1180, 5
      %v1262 = vrot.slane %v1261, 4
      %v1263 = vrot.slane %v194, 5
      %v1264 = vsel %vm1225, %v1262, %v1263
      %v1265 = vrot.slane %v1263, 4
      %v1266 = vrot.slane %v221, 5
      %v1267 = vsel %vm1225, %v1265, %v1266
      %v1268 = vrot.slane %v1181, 5
      %v1269 = vrot.slane %v1268, 4
      %v1270 = vrot.slane %v196, 5
      %v1271 = vsel %vm1225, %v1269, %v1270
      %v1272 = vrot.slane %v1270, 4
      %v1273 = vrot.slane %v222, 5
      %v1274 = vsel %vm1225, %v1272, %v1273
      %v1275 = vrot.slane %v1182, 5
      %v1276 = vrot.slane %v1275, 4
      %v1277 = vrot.slane %v198, 5
      %v1278 = vsel %vm1225, %v1276, %v1277
      %v1279 = vrot.slane %v1277, 4
      %v1280 = vrot.slane %v223, 5
      %v1281 = vsel %vm1225, %v1279, %v1280
      %v1282 = vrot.slane %v1183, 5
      %v1283 = vrot.slane %v1282, 4
      %v1284 = vrot.slane %v200, 5
      %v1285 = vsel %vm1225, %v1283, %v1284
      %v1286 = vrot.slane %v1284, 4
      %v1287 = vrot.slane %v224, 5
      %v1288 = vsel %vm1225, %v1286, %v1287
      %v1289 = vrot.slane %v1184, 5
      %v1290 = vrot.slane %v1289, 4
      %v1291 = vrot.slane %v202, 5
      %v1292 = vsel %vm1225, %v1290, %v1291
      %v1293 = vrot.slane %v1291, 4
      %v1294 = vrot.slane %v225, 5
      %v1295 = vsel %vm1225, %v1293, %v1294
      %v1296 = vrot.slane %v1185, 5
      %v1297 = vrot.slane %v1296, 4
      %v1298 = vrot.slane %v204, 5
      %v1299 = vsel %vm1225, %v1297, %v1298
      %v1300 = vrot.slane %v1298, 4
      %v1301 = vrot.slane %v226, 5
      %v1302 = vsel %vm1225, %v1300, %v1301
      %v1303 = vrot.slane %v1186, 5
      %v1304 = vrot.slane %v1303, 4
      %v1305 = vrot.slane %v206, 5
      %v1306 = vsel %vm1225, %v1304, %v1305
      %v1307 = vrot.slane %v1305, 4
      %v1308 = vrot.slane %v227, 5
      %v1309 = vsel %vm1225, %v1307, %v1308
      %v1310 = vrot.slane %v1187, 5
      %v1311 = vrot.slane %v1310, 4
      %v1312 = vrot.slane %v208, 5
      %v1313 = vsel %vm1225, %v1311, %v1312
      %v1314 = vrot.slane %v1312, 4
      %v1315 = vrot.slane %v228, 5
      %v1316 = vsel %vm1225, %v1314, %v1315
      %v1317 = vrot.slane %v1188, 5
      %v1318 = vrot.slane %v1317, 4
      %v1319 = vrot.slane %v210, 5
      %v1320 = vsel %vm1225, %v1318, %v1319
      %v1321 = vrot.slane %v1319, 4
      %v1322 = vrot.slane %v229, 5
      %v1323 = vsel %vm1225, %v1321, %v1322
      %v1324 = vrot.slane %v1189, 5
      %v1325 = vrot.slane %v1324, 4
      %v1326 = vrot.slane %v212, 5
      %v1327 = vsel %vm1225, %v1325, %v1326
      %v1328 = vrot.slane %v1326, 4
      %v1329 = vrot.slane %v230, 5
      %v1330 = vsel %vm1225, %v1328, %v1329
      %v1331 = vrot.slane %v1190, 5
      %v1332 = vrot.slane %v1331, 4
      %v1333 = vrot.slane %v214, 5
      %v1334 = vsel %vm1225, %v1332, %v1333
      %v1335 = vrot.slane %v1333, 4
      %v1336 = vrot.slane %v231, 5
      %v1337 = vsel %vm1225, %v1335, %v1336
      %s1338 = scalar_lea.vmem %s1, 4
      %v1339 = vld [vmem:[%s1338] sm:$0x3]
      %v1340 = vunpack.c.l.b16 %v1229
      %v1341 = vunpack.c.l.b16 %v1232
      %v1342 = vunpack.c.l.b16 %v1236
      %v1343 = vunpack.c.l.b16 %v1239
      %v1344 = vunpack.c.l.b16 %v1243
      %v1345 = vunpack.c.l.b16 %v1246
      %v1346 = vunpack.c.l.b16 %v1250
      %v1347 = vunpack.c.l.b16 %v1253
      %v1348 = vunpack.c.l.b16 %v1257
      %v1349 = vunpack.c.l.b16 %v1260
      %v1350 = vunpack.c.l.b16 %v1264
      %v1351 = vunpack.c.l.b16 %v1267
      %v1352 = vunpack.c.l.b16 %v1271
      %v1353 = vunpack.c.l.b16 %v1274
      %v1354 = vunpack.c.l.b16 %v1278
      %v1355 = vunpack.c.l.b16 %v1281
      %v1356 = vunpack.c.l.b16 %v1285
      %v1357 = vunpack.c.l.b16 %v1288
      %v1358 = vunpack.c.l.b16 %v1292
      %v1359 = vunpack.c.l.b16 %v1295
      %v1360 = vunpack.c.l.b16 %v1299
      %v1361 = vunpack.c.l.b16 %v1302
      %v1362 = vunpack.c.l.b16 %v1306
      %v1363 = vunpack.c.l.b16 %v1309
      %v1364 = vunpack.c.l.b16 %v1313
      %v1365 = vunpack.c.l.b16 %v1316
      %v1366 = vunpack.c.l.b16 %v1320
      %v1367 = vunpack.c.l.b16 %v1323
      %v1368 = vunpack.c.l.b16 %v1327
      %v1369 = vunpack.c.l.b16 %v1330
      %v1370 = vunpack.c.l.b16 %v1334
      %v1371 = vunpack.c.l.b16 %v1337
      %v1372 = vpack.c.b16 %v1341, %v1340
      %v1373 = vpack.c.b16 %v1343, %v1342
      %v1374 = vpack.c.b16 %v1345, %v1344
      %v1375 = vpack.c.b16 %v1347, %v1346
      %v1376 = vpack.c.b16 %v1349, %v1348
      %v1377 = vpack.c.b16 %v1351, %v1350
      %v1378 = vpack.c.b16 %v1353, %v1352
      %v1379 = vpack.c.b16 %v1355, %v1354
      %v1380 = vpack.c.b16 %v1357, %v1356
      %v1381 = vpack.c.b16 %v1359, %v1358
      %v1382 = vpack.c.b16 %v1361, %v1360
      %v1383 = vpack.c.b16 %v1363, %v1362
      %v1384 = vpack.c.b16 %v1365, %v1364
      %v1385 = vpack.c.b16 %v1367, %v1366
      %v1386 = vpack.c.b16 %v1369, %v1368
      %v1387 = vpack.c.b16 %v1371, %v1370
      %v1389 = vsel %vm669, %v1372, 0
      %v1392 = vsel %vm669, %v1373, 0
      %v1395 = vsel %vm669, %v1374, 0
      %v1398 = vsel %vm669, %v1375, 0
      %v1401 = vsel %vm669, %v1376, 0
      %v1404 = vsel %vm669, %v1377, 0
      %v1407 = vsel %vm669, %v1378, 0
      %v1410 = vsel %vm669, %v1379, 0
      %v1413 = vsel %vm669, %v1380, 0
      %v1416 = vsel %vm669, %v1381, 0
      %v1419 = vsel %vm669, %v1382, 0
      %v1422 = vsel %vm669, %v1383, 0
      %v1425 = vsel %vm669, %v1384, 0
      %v1428 = vsel %vm669, %v1385, 0
      %v1431 = vsel %vm669, %v1386, 0
      %v1434 = vsel %vm669, %v1387, 0
      %v1437 = vsel %vm718, %v1339, 0
      %1439 = vmatprep.subr.bf16.mxu0 0
      %1440 = vmatpush1.bf16.msra.mxu0 0
      %1441 = vmatprep.subr.bf16.mxu0 0
      %1442 = vmatpush1.bf16.msra.mxu0 0
      %1443 = vmatprep.subr.bf16.mxu0 0
      %1444 = vmatpush1.bf16.msra.mxu0 0
      %1445 = vmatprep.subr.bf16.mxu0 0
      %1446 = vmatpush1.bf16.msra.mxu0 0
      %1447 = vmatprep.subr.bf16.mxu0 0
      %1448 = vmatpush1.bf16.msra.mxu0 0
      %1449 = vmatprep.subr.bf16.mxu0 0
      %1450 = vmatpush1.bf16.msra.mxu0 0
      %1451 = vmatprep.subr.bf16.mxu0 0
      %1452 = vmatpush1.bf16.msra.mxu0 0
      %1453 = vmatprep.subr.bf16.mxu0 0
      %1454 = vmatpush1.bf16.msra.mxu0 %v1437
      %1455 = vmatprep.subr.bf16.mxu0 0
      %1456 = vmatpush2.bf16.msra.mxu0 0
      %1457 = vmatprep.subr.bf16.mxu0 0
      %1458 = vmatpush2.bf16.msra.mxu0 0
      %1459 = vmatprep.subr.bf16.mxu0 0
      %1460 = vmatpush2.bf16.msra.mxu0 0
      %1461 = vmatprep.subr.bf16.mxu0 0
      %1462 = vmatpush2.bf16.msra.mxu0 0
      %1463 = vmatprep.subr.bf16.mxu0 0
      %1464 = vmatpush2.bf16.msra.mxu0 0
      %1465 = vmatprep.subr.bf16.mxu0 0
      %1466 = vmatpush2.bf16.msra.mxu0 0
      %1467 = vmatprep.subr.bf16.mxu0 0
      %1468 = vmatpush2.bf16.msra.mxu0 0
      %1469 = vmatprep.subr.bf16.mxu0 0
      %1470 = vmatpush2.bf16.msra.mxu0 0
      %1471 = vmatprep.mubr.bf16.mxu0 0
      %1472 = vmatmul.mubr.bf16.gmra.mxu0 %v1389
      %v1473 = vpop.f32.mrf.mxu0
      %v1474 = vadd.f32 0.0, %v1473
      %v1475 = vpop.f32.mrf.mxu0
      %v1476 = vpop.f32.mrf.mxu0
      %v1477 = vadd.f32 0.0, %v1476
      %v1478 = vpop.f32.mrf.mxu0
      %1479 = vmatprep.mubr.bf16.mxu0 0
      %1480 = vmatmul.mubr.bf16.gmra.mxu0 %v1392
      %v1481 = vpop.f32.mrf.mxu0
      %v1482 = vadd.f32 0.0, %v1481
      %v1483 = vpop.f32.mrf.mxu0
      %v1484 = vpop.f32.mrf.mxu0
      %v1485 = vadd.f32 0.0, %v1484
      %v1486 = vpop.f32.mrf.mxu0
      %1487 = vmatprep.mubr.bf16.mxu0 0
      %1488 = vmatmul.mubr.bf16.gmra.mxu0 %v1395
      %v1489 = vpop.f32.mrf.mxu0
      %v1490 = vadd.f32 0.0, %v1489
      %v1491 = vpop.f32.mrf.mxu0
      %v1492 = vpop.f32.mrf.mxu0
      %v1493 = vadd.f32 0.0, %v1492
      %v1494 = vpop.f32.mrf.mxu0
      %1495 = vmatprep.mubr.bf16.mxu0 0
      %1496 = vmatmul.mubr.bf16.gmra.mxu0 %v1398
      %v1497 = vpop.f32.mrf.mxu0
      %v1498 = vadd.f32 0.0, %v1497
      %v1499 = vpop.f32.mrf.mxu0
      %v1500 = vpop.f32.mrf.mxu0
      %v1501 = vadd.f32 0.0, %v1500
      %v1502 = vpop.f32.mrf.mxu0
      %1503 = vmatprep.mubr.bf16.mxu0 0
      %1504 = vmatmul.mubr.bf16.gmra.mxu0 %v1401
      %v1505 = vpop.f32.mrf.mxu0
      %v1506 = vadd.f32 0.0, %v1505
      %v1507 = vpop.f32.mrf.mxu0
      %v1508 = vpop.f32.mrf.mxu0
      %v1509 = vadd.f32 0.0, %v1508
      %v1510 = vpop.f32.mrf.mxu0
      %1511 = vmatprep.mubr.bf16.mxu0 0
      %1512 = vmatmul.mubr.bf16.gmra.mxu0 %v1404
      %v1513 = vpop.f32.mrf.mxu0
      %v1514 = vadd.f32 0.0, %v1513
      %v1515 = vpop.f32.mrf.mxu0
      %v1516 = vpop.f32.mrf.mxu0
      %v1517 = vadd.f32 0.0, %v1516
      %v1518 = vpop.f32.mrf.mxu0
      %1519 = vmatprep.mubr.bf16.mxu0 0
      %1520 = vmatmul.mubr.bf16.gmra.mxu0 %v1407
      %v1521 = vpop.f32.mrf.mxu0
      %v1522 = vadd.f32 0.0, %v1521
      %v1523 = vpop.f32.mrf.mxu0
      %v1524 = vpop.f32.mrf.mxu0
      %v1525 = vadd.f32 0.0, %v1524
      %v1526 = vpop.f32.mrf.mxu0
      %1527 = vmatprep.mubr.bf16.mxu0 0
      %1528 = vmatmul.mubr.bf16.gmra.mxu0 %v1410
      %v1529 = vpop.f32.mrf.mxu0
      %v1530 = vadd.f32 0.0, %v1529
      %v1531 = vpop.f32.mrf.mxu0
      %v1532 = vpop.f32.mrf.mxu0
      %v1533 = vadd.f32 0.0, %v1532
      %v1534 = vpop.f32.mrf.mxu0
      %1535 = vmatprep.mubr.bf16.mxu0 0
      %1536 = vmatmul.mubr.bf16.gmra.mxu0 %v1413
      %v1537 = vpop.f32.mrf.mxu0
      %v1538 = vadd.f32 0.0, %v1537
      %v1539 = vpop.f32.mrf.mxu0
      %v1540 = vpop.f32.mrf.mxu0
      %v1541 = vadd.f32 0.0, %v1540
      %v1542 = vpop.f32.mrf.mxu0
      %1543 = vmatprep.mubr.bf16.mxu0 0
      %1544 = vmatmul.mubr.bf16.gmra.mxu0 %v1416
      %v1545 = vpop.f32.mrf.mxu0
      %v1546 = vadd.f32 0.0, %v1545
      %v1547 = vpop.f32.mrf.mxu0
      %v1548 = vpop.f32.mrf.mxu0
      %v1549 = vadd.f32 0.0, %v1548
      %v1550 = vpop.f32.mrf.mxu0
      %1551 = vmatprep.mubr.bf16.mxu0 0
      %1552 = vmatmul.mubr.bf16.gmra.mxu0 %v1419
      %v1553 = vpop.f32.mrf.mxu0
      %v1554 = vadd.f32 0.0, %v1553
      %v1555 = vpop.f32.mrf.mxu0
      %v1556 = vpop.f32.mrf.mxu0
      %v1557 = vadd.f32 0.0, %v1556
      %v1558 = vpop.f32.mrf.mxu0
      %1559 = vmatprep.mubr.bf16.mxu0 0
      %1560 = vmatmul.mubr.bf16.gmra.mxu0 %v1422
      %v1561 = vpop.f32.mrf.mxu0
      %v1562 = vadd.f32 0.0, %v1561
      %v1563 = vpop.f32.mrf.mxu0
      %v1564 = vpop.f32.mrf.mxu0
      %v1565 = vadd.f32 0.0, %v1564
      %v1566 = vpop.f32.mrf.mxu0
      %1567 = vmatprep.mubr.bf16.mxu0 0
      %1568 = vmatmul.mubr.bf16.gmra.mxu0 %v1425
      %v1569 = vpop.f32.mrf.mxu0
      %v1570 = vadd.f32 0.0, %v1569
      %v1571 = vpop.f32.mrf.mxu0
      %v1572 = vpop.f32.mrf.mxu0
      %v1573 = vadd.f32 0.0, %v1572
      %v1574 = vpop.f32.mrf.mxu0
      %1575 = vmatprep.mubr.bf16.mxu0 0
      %1576 = vmatmul.mubr.bf16.gmra.mxu0 %v1428
      %v1577 = vpop.f32.mrf.mxu0
      %v1578 = vadd.f32 0.0, %v1577
      %v1579 = vpop.f32.mrf.mxu0
      %v1580 = vpop.f32.mrf.mxu0
      %v1581 = vadd.f32 0.0, %v1580
      %v1582 = vpop.f32.mrf.mxu0
      %1583 = vmatprep.mubr.bf16.mxu0 0
      %1584 = vmatmul.mubr.bf16.gmra.mxu0 %v1431
      %v1585 = vpop.f32.mrf.mxu0
      %v1586 = vadd.f32 0.0, %v1585
      %v1587 = vpop.f32.mrf.mxu0
      %v1588 = vpop.f32.mrf.mxu0
      %v1589 = vadd.f32 0.0, %v1588
      %v1590 = vpop.f32.mrf.mxu0
      %1591 = vmatprep.mubr.bf16.mxu0 0
      %1592 = vmatmul.mubr.bf16.gmra.mxu0 %v1434
      %v1593 = vpop.f32.mrf.mxu0
      %v1594 = vadd.f32 0.0, %v1593
      %v1595 = vpop.f32.mrf.mxu0
      %v1596 = vpop.f32.mrf.mxu0
      %v1597 = vadd.f32 0.0, %v1596
      %v1598 = vpop.f32.mrf.mxu0
      %1599 = vdwg.mxu0
      %v1600 = vadd.f32 %v1049, %v1474
      %v1601 = vadd.f32 %v1052, %v1477
      %v1602 = vadd.f32 %v1057, %v1482
      %v1603 = vadd.f32 %v1060, %v1485
      %v1604 = vadd.f32 %v1065, %v1490
      %v1605 = vadd.f32 %v1068, %v1493
      %v1606 = vadd.f32 %v1073, %v1498
      %v1607 = vadd.f32 %v1076, %v1501
      %v1608 = vadd.f32 %v1081, %v1506
      %v1609 = vadd.f32 %v1084, %v1509
      %v1610 = vadd.f32 %v1089, %v1514
      %v1611 = vadd.f32 %v1092, %v1517
      %v1612 = vadd.f32 %v1097, %v1522
      %v1613 = vadd.f32 %v1100, %v1525
      %v1614 = vadd.f32 %v1105, %v1530
      %v1615 = vadd.f32 %v1108, %v1533
      %v1616 = vadd.f32 %v1113, %v1538
      %v1617 = vadd.f32 %v1116, %v1541
      %v1618 = vadd.f32 %v1121, %v1546
      %v1619 = vadd.f32 %v1124, %v1549
      %v1620 = vadd.f32 %v1129, %v1554
      %v1621 = vadd.f32 %v1132, %v1557
      %v1622 = vadd.f32 %v1137, %v1562
      %v1623 = vadd.f32 %v1140, %v1565
      %v1624 = vadd.f32 %v1145, %v1570
      %v1625 = vadd.f32 %v1148, %v1573
      %v1626 = vadd.f32 %v1153, %v1578
      %v1627 = vadd.f32 %v1156, %v1581
      %v1628 = vadd.f32 %v1161, %v1586
      %v1629 = vadd.f32 %v1164, %v1589
      %v1630 = vadd.f32 %v1169, %v1594
      %v1631 = vadd.f32 %v1172, %v1597
      %s1632 = scalar_lea.vmem %s172, 12
      %v1633 = vld [vmem:[%s1632] sm:$0xf]
      %v1634 = vld [vmem:[%s1632 + $0x4] sm:$0xf]
      %v1635 = vld [vmem:[%s1632 + $0xc] sm:$0xf]
      %v1636 = vld [vmem:[%s1632 + $0x10] sm:$0xf]
      %v1637 = vld [vmem:[%s1632 + $0x18] sm:$0xf]
      %v1638 = vld [vmem:[%s1632 + $0x1c] sm:$0xf]
      %v1639 = vld [vmem:[%s1632 + $0x24] sm:$0xf]
      %v1640 = vld [vmem:[%s1632 + $0x28] sm:$0xf]
      %v1641 = vld [vmem:[%s1632 + $0x30] sm:$0xf]
      %v1642 = vld [vmem:[%s1632 + $0x34] sm:$0xf]
      %v1643 = vld [vmem:[%s1632 + $0x3c] sm:$0xf]
      %v1644 = vld [vmem:[%s1632 + $0x40] sm:$0xf]
      %v1645 = vld [vmem:[%s1632 + $0x48] sm:$0xf]
      %v1646 = vld [vmem:[%s1632 + $0x4c] sm:$0xf]
      %v1647 = vld [vmem:[%s1632 + $0x54] sm:$0xf]
      %v1648 = vld [vmem:[%s1632 + $0x58] sm:$0xf]
      %v1649 = vld [vmem:[%s1632 + $0x60] sm:$0xf]
      %v1650 = vld [vmem:[%s1632 + $0x64] sm:$0xf]
      %v1651 = vld [vmem:[%s1632 + $0x6c] sm:$0xf]
      %v1652 = vld [vmem:[%s1632 + $0x70] sm:$0xf]
      %v1653 = vld [vmem:[%s1632 + $0x78] sm:$0xf]
      %v1654 = vld [vmem:[%s1632 + $0x7c] sm:$0xf]
      %v1655 = vld [vmem:[%s1632 + $0x84] sm:$0xf]
      %v1656 = vld [vmem:[%s1632 + $0x88] sm:$0xf]
      %v1657 = vld [vmem:[%s1632 + $0x90] sm:$0xf]
      %v1658 = vld [vmem:[%s1632 + $0x94] sm:$0xf]
      %v1659 = vld [vmem:[%s1632 + $0x9c] sm:$0xf]
      %v1660 = vld [vmem:[%s1632 + $0xa0] sm:$0xf]
      %v1661 = vld [vmem:[%s1632 + $0xa8] sm:$0xf]
      %v1662 = vld [vmem:[%s1632 + $0xac] sm:$0xf]
      %v1663 = vld [vmem:[%s1632 + $0xb4] sm:$0xf]
      %v1664 = vld [vmem:[%s1632 + $0xb8] sm:$0xf]
      %s1665 = scalar_lea.vmem %s1, 6
      %v1666 = vld [vmem:[%s1665] sm:$0x3]
      %v1699 = vunpack.c.l.b16 %v1633
      %v1700 = vunpack.c.l.b16 %v1634
      %v1701 = vunpack.c.l.b16 %v1635
      %v1702 = vunpack.c.l.b16 %v1636
      %v1703 = vunpack.c.l.b16 %v1637
      %v1704 = vunpack.c.l.b16 %v1638
      %v1705 = vunpack.c.l.b16 %v1639
      %v1706 = vunpack.c.l.b16 %v1640
      %v1707 = vunpack.c.l.b16 %v1641
      %v1708 = vunpack.c.l.b16 %v1642
      %v1709 = vunpack.c.l.b16 %v1643
      %v1710 = vunpack.c.l.b16 %v1644
      %v1711 = vunpack.c.l.b16 %v1645
      %v1712 = vunpack.c.l.b16 %v1646
      %v1713 = vunpack.c.l.b16 %v1647
      %v1714 = vunpack.c.l.b16 %v1648
      %v1715 = vunpack.c.l.b16 %v1649
      %v1716 = vunpack.c.l.b16 %v1650
      %v1717 = vunpack.c.l.b16 %v1651
      %v1718 = vunpack.c.l.b16 %v1652
      %v1719 = vunpack.c.l.b16 %v1653
      %v1720 = vunpack.c.l.b16 %v1654
      %v1721 = vunpack.c.l.b16 %v1655
      %v1722 = vunpack.c.l.b16 %v1656
      %v1723 = vunpack.c.l.b16 %v1657
      %v1724 = vunpack.c.l.b16 %v1658
      %v1725 = vunpack.c.l.b16 %v1659
      %v1726 = vunpack.c.l.b16 %v1660
      %v1727 = vunpack.c.l.b16 %v1661
      %v1728 = vunpack.c.l.b16 %v1662
      %v1729 = vunpack.c.l.b16 %v1663
      %v1730 = vunpack.c.l.b16 %v1664
      %v1731 = vpack.c.b16 %v1700, %v1699
      %v1732 = vpack.c.b16 %v1702, %v1701
      %v1733 = vpack.c.b16 %v1704, %v1703
      %v1734 = vpack.c.b16 %v1706, %v1705
      %v1735 = vpack.c.b16 %v1708, %v1707
      %v1736 = vpack.c.b16 %v1710, %v1709
      %v1737 = vpack.c.b16 %v1712, %v1711
      %v1738 = vpack.c.b16 %v1714, %v1713
      %v1739 = vpack.c.b16 %v1716, %v1715
      %v1740 = vpack.c.b16 %v1718, %v1717
      %v1741 = vpack.c.b16 %v1720, %v1719
      %v1742 = vpack.c.b16 %v1722, %v1721
      %v1743 = vpack.c.b16 %v1724, %v1723
      %v1744 = vpack.c.b16 %v1726, %v1725
      %v1745 = vpack.c.b16 %v1728, %v1727
      %v1746 = vpack.c.b16 %v1730, %v1729
      %v1748 = vsel %vm669, %v1731, 0
      %v1751 = vsel %vm669, %v1732, 0
      %v1754 = vsel %vm669, %v1733, 0
      %v1757 = vsel %vm669, %v1734, 0
      %v1760 = vsel %vm669, %v1735, 0
      %v1763 = vsel %vm669, %v1736, 0
      %v1766 = vsel %vm669, %v1737, 0
      %v1769 = vsel %vm669, %v1738, 0
      %v1772 = vsel %vm669, %v1739, 0
      %v1775 = vsel %vm669, %v1740, 0
      %v1778 = vsel %vm669, %v1741, 0
      %v1781 = vsel %vm669, %v1742, 0
      %v1784 = vsel %vm669, %v1743, 0
      %v1787 = vsel %vm669, %v1744, 0
      %v1790 = vsel %vm669, %v1745, 0
      %v1793 = vsel %vm669, %v1746, 0
      %v1796 = vsel %vm718, %v1666, 0
      %1798 = vmatprep.subr.bf16.mxu0 0
      %1799 = vmatpush1.bf16.msra.mxu0 0
      %1800 = vmatprep.subr.bf16.mxu0 0
      %1801 = vmatpush1.bf16.msra.mxu0 0
      %1802 = vmatprep.subr.bf16.mxu0 0
      %1803 = vmatpush1.bf16.msra.mxu0 0
      %1804 = vmatprep.subr.bf16.mxu0 0
      %1805 = vmatpush1.bf16.msra.mxu0 0
      %1806 = vmatprep.subr.bf16.mxu0 0
      %1807 = vmatpush1.bf16.msra.mxu0 0
      %1808 = vmatprep.subr.bf16.mxu0 0
      %1809 = vmatpush1.bf16.msra.mxu0 0
      %1810 = vmatprep.subr.bf16.mxu0 0
      %1811 = vmatpush1.bf16.msra.mxu0 0
      %1812 = vmatprep.subr.bf16.mxu0 0
      %1813 = vmatpush1.bf16.msra.mxu0 %v1796
      %1814 = vmatprep.subr.bf16.mxu0 0
      %1815 = vmatpush2.bf16.msra.mxu0 0
      %1816 = vmatprep.subr.bf16.mxu0 0
      %1817 = vmatpush2.bf16.msra.mxu0 0
      %1818 = vmatprep.subr.bf16.mxu0 0
      %1819 = vmatpush2.bf16.msra.mxu0 0
      %1820 = vmatprep.subr.bf16.mxu0 0
      %1821 = vmatpush2.bf16.msra.mxu0 0
      %1822 = vmatprep.subr.bf16.mxu0 0
      %1823 = vmatpush2.bf16.msra.mxu0 0
      %1824 = vmatprep.subr.bf16.mxu0 0
      %1825 = vmatpush2.bf16.msra.mxu0 0
      %1826 = vmatprep.subr.bf16.mxu0 0
      %1827 = vmatpush2.bf16.msra.mxu0 0
      %1828 = vmatprep.subr.bf16.mxu0 0
      %1829 = vmatpush2.bf16.msra.mxu0 0
      %1830 = vmatprep.mubr.bf16.mxu0 0
      %1831 = vmatmul.mubr.bf16.gmra.mxu0 %v1748
      %v1832 = vpop.f32.mrf.mxu0
      %v1833 = vadd.f32 0.0, %v1832
      %v1834 = vpop.f32.mrf.mxu0
      %v1835 = vpop.f32.mrf.mxu0
      %v1836 = vadd.f32 0.0, %v1835
      %v1837 = vpop.f32.mrf.mxu0
      %1838 = vmatprep.mubr.bf16.mxu0 0
      %1839 = vmatmul.mubr.bf16.gmra.mxu0 %v1751
      %v1840 = vpop.f32.mrf.mxu0
      %v1841 = vadd.f32 0.0, %v1840
      %v1842 = vpop.f32.mrf.mxu0
      %v1843 = vpop.f32.mrf.mxu0
      %v1844 = vadd.f32 0.0, %v1843
      %v1845 = vpop.f32.mrf.mxu0
      %1846 = vmatprep.mubr.bf16.mxu0 0
      %1847 = vmatmul.mubr.bf16.gmra.mxu0 %v1754
      %v1848 = vpop.f32.mrf.mxu0
      %v1849 = vadd.f32 0.0, %v1848
      %v1850 = vpop.f32.mrf.mxu0
      %v1851 = vpop.f32.mrf.mxu0
      %v1852 = vadd.f32 0.0, %v1851
      %v1853 = vpop.f32.mrf.mxu0
      %1854 = vmatprep.mubr.bf16.mxu0 0
      %1855 = vmatmul.mubr.bf16.gmra.mxu0 %v1757
      %v1856 = vpop.f32.mrf.mxu0
      %v1857 = vadd.f32 0.0, %v1856
      %v1858 = vpop.f32.mrf.mxu0
      %v1859 = vpop.f32.mrf.mxu0
      %v1860 = vadd.f32 0.0, %v1859
      %v1861 = vpop.f32.mrf.mxu0
      %1862 = vmatprep.mubr.bf16.mxu0 0
      %1863 = vmatmul.mubr.bf16.gmra.mxu0 %v1760
      %v1864 = vpop.f32.mrf.mxu0
      %v1865 = vadd.f32 0.0, %v1864
      %v1866 = vpop.f32.mrf.mxu0
      %v1867 = vpop.f32.mrf.mxu0
      %v1868 = vadd.f32 0.0, %v1867
      %v1869 = vpop.f32.mrf.mxu0
      %1870 = vmatprep.mubr.bf16.mxu0 0
      %1871 = vmatmul.mubr.bf16.gmra.mxu0 %v1763
      %v1872 = vpop.f32.mrf.mxu0
      %v1873 = vadd.f32 0.0, %v1872
      %v1874 = vpop.f32.mrf.mxu0
      %v1875 = vpop.f32.mrf.mxu0
      %v1876 = vadd.f32 0.0, %v1875
      %v1877 = vpop.f32.mrf.mxu0
      %1878 = vmatprep.mubr.bf16.mxu0 0
      %1879 = vmatmul.mubr.bf16.gmra.mxu0 %v1766
      %v1880 = vpop.f32.mrf.mxu0
      %v1881 = vadd.f32 0.0, %v1880
      %v1882 = vpop.f32.mrf.mxu0
      %v1883 = vpop.f32.mrf.mxu0
      %v1884 = vadd.f32 0.0, %v1883
      %v1885 = vpop.f32.mrf.mxu0
      %1886 = vmatprep.mubr.bf16.mxu0 0
      %1887 = vmatmul.mubr.bf16.gmra.mxu0 %v1769
      %v1888 = vpop.f32.mrf.mxu0
      %v1889 = vadd.f32 0.0, %v1888
      %v1890 = vpop.f32.mrf.mxu0
      %v1891 = vpop.f32.mrf.mxu0
      %v1892 = vadd.f32 0.0, %v1891
      %v1893 = vpop.f32.mrf.mxu0
      %1894 = vmatprep.mubr.bf16.mxu0 0
      %1895 = vmatmul.mubr.bf16.gmra.mxu0 %v1772
      %v1896 = vpop.f32.mrf.mxu0
      %v1897 = vadd.f32 0.0, %v1896
      %v1898 = vpop.f32.mrf.mxu0
      %v1899 = vpop.f32.mrf.mxu0
      %v1900 = vadd.f32 0.0, %v1899
      %v1901 = vpop.f32.mrf.mxu0
      %1902 = vmatprep.mubr.bf16.mxu0 0
      %1903 = vmatmul.mubr.bf16.gmra.mxu0 %v1775
      %v1904 = vpop.f32.mrf.mxu0
      %v1905 = vadd.f32 0.0, %v1904
      %v1906 = vpop.f32.mrf.mxu0
      %v1907 = vpop.f32.mrf.mxu0
      %v1908 = vadd.f32 0.0, %v1907
      %v1909 = vpop.f32.mrf.mxu0
      %1910 = vmatprep.mubr.bf16.mxu0 0
      %1911 = vmatmul.mubr.bf16.gmra.mxu0 %v1778
      %v1912 = vpop.f32.mrf.mxu0
      %v1913 = vadd.f32 0.0, %v1912
      %v1914 = vpop.f32.mrf.mxu0
      %v1915 = vpop.f32.mrf.mxu0
      %v1916 = vadd.f32 0.0, %v1915
      %v1917 = vpop.f32.mrf.mxu0
      %1918 = vmatprep.mubr.bf16.mxu0 0
      %1919 = vmatmul.mubr.bf16.gmra.mxu0 %v1781
      %v1920 = vpop.f32.mrf.mxu0
      %v1921 = vadd.f32 0.0, %v1920
      %v1922 = vpop.f32.mrf.mxu0
      %v1923 = vpop.f32.mrf.mxu0
      %v1924 = vadd.f32 0.0, %v1923
      %v1925 = vpop.f32.mrf.mxu0
      %1926 = vmatprep.mubr.bf16.mxu0 0
      %1927 = vmatmul.mubr.bf16.gmra.mxu0 %v1784
      %v1928 = vpop.f32.mrf.mxu0
      %v1929 = vadd.f32 0.0, %v1928
      %v1930 = vpop.f32.mrf.mxu0
      %v1931 = vpop.f32.mrf.mxu0
      %v1932 = vadd.f32 0.0, %v1931
      %v1933 = vpop.f32.mrf.mxu0
      %1934 = vmatprep.mubr.bf16.mxu0 0
      %1935 = vmatmul.mubr.bf16.gmra.mxu0 %v1787
      %v1936 = vpop.f32.mrf.mxu0
      %v1937 = vadd.f32 0.0, %v1936
      %v1938 = vpop.f32.mrf.mxu0
      %v1939 = vpop.f32.mrf.mxu0
      %v1940 = vadd.f32 0.0, %v1939
      %v1941 = vpop.f32.mrf.mxu0
      %1942 = vmatprep.mubr.bf16.mxu0 0
      %1943 = vmatmul.mubr.bf16.gmra.mxu0 %v1790
      %v1944 = vpop.f32.mrf.mxu0
      %v1945 = vadd.f32 0.0, %v1944
      %v1946 = vpop.f32.mrf.mxu0
      %v1947 = vpop.f32.mrf.mxu0
      %v1948 = vadd.f32 0.0, %v1947
      %v1949 = vpop.f32.mrf.mxu0
      %1950 = vmatprep.mubr.bf16.mxu0 0
      %1951 = vmatmul.mubr.bf16.gmra.mxu0 %v1793
      %v1952 = vpop.f32.mrf.mxu0
      %v1953 = vadd.f32 0.0, %v1952
      %v1954 = vpop.f32.mrf.mxu0
      %v1955 = vpop.f32.mrf.mxu0
      %v1956 = vadd.f32 0.0, %v1955
      %v1957 = vpop.f32.mrf.mxu0
      %1958 = vdwg.mxu0
      %v1959 = vadd.f32 %v1600, %v1833
      %v1960 = vadd.f32 %v1601, %v1836
      %v1961 = vadd.f32 %v1602, %v1841
      %v1962 = vadd.f32 %v1603, %v1844
      %v1963 = vadd.f32 %v1604, %v1849
      %v1964 = vadd.f32 %v1605, %v1852
      %v1965 = vadd.f32 %v1606, %v1857
      %v1966 = vadd.f32 %v1607, %v1860
      %v1967 = vadd.f32 %v1608, %v1865
      %v1968 = vadd.f32 %v1609, %v1868
      %v1969 = vadd.f32 %v1610, %v1873
      %v1970 = vadd.f32 %v1611, %v1876
      %v1971 = vadd.f32 %v1612, %v1881
      %v1972 = vadd.f32 %v1613, %v1884
      %v1973 = vadd.f32 %v1614, %v1889
      %v1974 = vadd.f32 %v1615, %v1892
      %v1975 = vadd.f32 %v1616, %v1897
      %v1976 = vadd.f32 %v1617, %v1900
      %v1977 = vadd.f32 %v1618, %v1905
      %v1978 = vadd.f32 %v1619, %v1908
      %v1979 = vadd.f32 %v1620, %v1913
      %v1980 = vadd.f32 %v1621, %v1916
      %v1981 = vadd.f32 %v1622, %v1921
      %v1982 = vadd.f32 %v1623, %v1924
      %v1983 = vadd.f32 %v1624, %v1929
      %v1984 = vadd.f32 %v1625, %v1932
      %v1985 = vadd.f32 %v1626, %v1937
      %v1986 = vadd.f32 %v1627, %v1940
      %v1987 = vadd.f32 %v1628, %v1945
      %v1988 = vadd.f32 %v1629, %v1948
      %v1989 = vadd.f32 %v1630, %v1953
      %v1990 = vadd.f32 %v1631, %v1956
      %v1991 = vld [vmem:[%s1632] sm:$0xf]
      %v1992 = vld [vmem:[%s1632 + $0x4] sm:$0xf]
      %v1993 = vld [vmem:[%s1632 + $0x8] sm:$0x1]
      %v1994 = vld [vmem:[%s1632 + $0xc] sm:$0xf]
      %v1995 = vld [vmem:[%s1632 + $0x10] sm:$0xf]
      %v1996 = vld [vmem:[%s1632 + $0x14] sm:$0x1]
      %v1997 = vld [vmem:[%s1632 + $0x18] sm:$0xf]
      %v1998 = vld [vmem:[%s1632 + $0x1c] sm:$0xf]
      %v1999 = vld [vmem:[%s1632 + $0x20] sm:$0x1]
      %v2000 = vld [vmem:[%s1632 + $0x24] sm:$0xf]
      %v2001 = vld [vmem:[%s1632 + $0x28] sm:$0xf]
      %v2002 = vld [vmem:[%s1632 + $0x2c] sm:$0x1]
      %v2003 = vld [vmem:[%s1632 + $0x30] sm:$0xf]
      %v2004 = vld [vmem:[%s1632 + $0x34] sm:$0xf]
      %v2005 = vld [vmem:[%s1632 + $0x38] sm:$0x1]
      %v2006 = vld [vmem:[%s1632 + $0x3c] sm:$0xf]
      %v2007 = vld [vmem:[%s1632 + $0x40] sm:$0xf]
      %v2008 = vld [vmem:[%s1632 + $0x44] sm:$0x1]
      %v2009 = vld [vmem:[%s1632 + $0x48] sm:$0xf]
      %v2010 = vld [vmem:[%s1632 + $0x4c] sm:$0xf]
      %v2011 = vld [vmem:[%s1632 + $0x50] sm:$0x1]
      %v2012 = vld [vmem:[%s1632 + $0x54] sm:$0xf]
      %v2013 = vld [vmem:[%s1632 + $0x58] sm:$0xf]
      %v2014 = vld [vmem:[%s1632 + $0x5c] sm:$0x1]
      %v2015 = vld [vmem:[%s1632 + $0x60] sm:$0xf]
      %v2016 = vld [vmem:[%s1632 + $0x64] sm:$0xf]
      %v2017 = vld [vmem:[%s1632 + $0x68] sm:$0x1]
      %v2018 = vld [vmem:[%s1632 + $0x6c] sm:$0xf]
      %v2019 = vld [vmem:[%s1632 + $0x70] sm:$0xf]
      %v2020 = vld [vmem:[%s1632 + $0x74] sm:$0x1]
      %v2021 = vld [vmem:[%s1632 + $0x78] sm:$0xf]
      %v2022 = vld [vmem:[%s1632 + $0x7c] sm:$0xf]
      %v2023 = vld [vmem:[%s1632 + $0x80] sm:$0x1]
      %v2024 = vld [vmem:[%s1632 + $0x84] sm:$0xf]
      %v2025 = vld [vmem:[%s1632 + $0x88] sm:$0xf]
      %v2026 = vld [vmem:[%s1632 + $0x8c] sm:$0x1]
      %v2027 = vld [vmem:[%s1632 + $0x90] sm:$0xf]
      %v2028 = vld [vmem:[%s1632 + $0x94] sm:$0xf]
      %v2029 = vld [vmem:[%s1632 + $0x98] sm:$0x1]
      %v2030 = vld [vmem:[%s1632 + $0x9c] sm:$0xf]
      %v2031 = vld [vmem:[%s1632 + $0xa0] sm:$0xf]
      %v2032 = vld [vmem:[%s1632 + $0xa4] sm:$0x1]
      %v2033 = vld [vmem:[%s1632 + $0xa8] sm:$0xf]
      %v2034 = vld [vmem:[%s1632 + $0xac] sm:$0xf]
      %v2035 = vld [vmem:[%s1632 + $0xb0] sm:$0x1]
      %v2036 = vld [vmem:[%s1632 + $0xb4] sm:$0xf]
      %v2037 = vld [vmem:[%s1632 + $0xb8] sm:$0xf]
      %v2038 = vld [vmem:[%s1632 + $0xbc] sm:$0x1]
      %v2040 = vshrl.u32 %v1991, 16
      %v2042 = vrot.slane %v2040, 4
      %v2043 = vshll.u32 %v1991, 16
      %v2045 = vrot.slane %v2043, 5
      %v2046 = vor.u32 %v2042, %v2045
      %v2047 = vrot.slane %v2046, 4
      %v2049 = vshll.u32 %v1992, 16
      %v2051 = vrot.slane %v2049, 5
      %v2052 = vsel %vm234, %v2047, %v2051
      %v2053 = vshrl.u32 %v1992, 16
      %v2055 = vrot.slane %v2053, 4
      %v2056 = vor.u32 %v2055, %v2051
      %v2057 = vrot.slane %v2056, 4
      %v2059 = vshll.u32 %v1993, 16
      %v2061 = vrot.slane %v2059, 5
      %v2062 = vsel %vm234, %v2057, %v2061
      %v2064 = vshrl.u32 %v1994, 16
      %v2066 = vrot.slane %v2064, 4
      %v2067 = vshll.u32 %v1994, 16
      %v2069 = vrot.slane %v2067, 5
      %v2070 = vor.u32 %v2066, %v2069
      %v2071 = vrot.slane %v2070, 4
      %v2073 = vshll.u32 %v1995, 16
      %v2075 = vrot.slane %v2073, 5
      %v2076 = vsel %vm234, %v2071, %v2075
      %v2077 = vshrl.u32 %v1995, 16
      %v2079 = vrot.slane %v2077, 4
      %v2080 = vor.u32 %v2079, %v2075
      %v2081 = vrot.slane %v2080, 4
      %v2083 = vshll.u32 %v1996, 16
      %v2085 = vrot.slane %v2083, 5
      %v2086 = vsel %vm234, %v2081, %v2085
      %v2088 = vshrl.u32 %v1997, 16
      %v2090 = vrot.slane %v2088, 4
      %v2091 = vshll.u32 %v1997, 16
      %v2093 = vrot.slane %v2091, 5
      %v2094 = vor.u32 %v2090, %v2093
      %v2095 = vrot.slane %v2094, 4
      %v2097 = vshll.u32 %v1998, 16
      %v2099 = vrot.slane %v2097, 5
      %v2100 = vsel %vm234, %v2095, %v2099
      %v2101 = vshrl.u32 %v1998, 16
      %v2103 = vrot.slane %v2101, 4
      %v2104 = vor.u32 %v2103, %v2099
      %v2105 = vrot.slane %v2104, 4
      %v2107 = vshll.u32 %v1999, 16
      %v2109 = vrot.slane %v2107, 5
      %v2110 = vsel %vm234, %v2105, %v2109
      %v2112 = vshrl.u32 %v2000, 16
      %v2114 = vrot.slane %v2112, 4
      %v2115 = vshll.u32 %v2000, 16
      %v2117 = vrot.slane %v2115, 5
      %v2118 = vor.u32 %v2114, %v2117
      %v2119 = vrot.slane %v2118, 4
      %v2121 = vshll.u32 %v2001, 16
      %v2123 = vrot.slane %v2121, 5
      %v2124 = vsel %vm234, %v2119, %v2123
      %v2125 = vshrl.u32 %v2001, 16
      %v2127 = vrot.slane %v2125, 4
      %v2128 = vor.u32 %v2127, %v2123
      %v2129 = vrot.slane %v2128, 4
      %v2131 = vshll.u32 %v2002, 16
      %v2133 = vrot.slane %v2131, 5
      %v2134 = vsel %vm234, %v2129, %v2133
      %v2136 = vshrl.u32 %v2003, 16
      %v2138 = vrot.slane %v2136, 4
      %v2139 = vshll.u32 %v2003, 16
      %v2141 = vrot.slane %v2139, 5
      %v2142 = vor.u32 %v2138, %v2141
      %v2143 = vrot.slane %v2142, 4
      %v2145 = vshll.u32 %v2004, 16
      %v2147 = vrot.slane %v2145, 5
      %v2148 = vsel %vm234, %v2143, %v2147
      %v2149 = vshrl.u32 %v2004, 16
      %v2151 = vrot.slane %v2149, 4
      %v2152 = vor.u32 %v2151, %v2147
      %v2153 = vrot.slane %v2152, 4
      %v2155 = vshll.u32 %v2005, 16
      %v2157 = vrot.slane %v2155, 5
      %v2158 = vsel %vm234, %v2153, %v2157
      %v2160 = vshrl.u32 %v2006, 16
      %v2162 = vrot.slane %v2160, 4
      %v2163 = vshll.u32 %v2006, 16
      %v2165 = vrot.slane %v2163, 5
      %v2166 = vor.u32 %v2162, %v2165
      %v2167 = vrot.slane %v2166, 4
      %v2169 = vshll.u32 %v2007, 16
      %v2171 = vrot.slane %v2169, 5
      %v2172 = vsel %vm234, %v2167, %v2171
      %v2173 = vshrl.u32 %v2007, 16
      %v2175 = vrot.slane %v2173, 4
      %v2176 = vor.u32 %v2175, %v2171
      %v2177 = vrot.slane %v2176, 4
      %v2179 = vshll.u32 %v2008, 16
      %v2181 = vrot.slane %v2179, 5
      %v2182 = vsel %vm234, %v2177, %v2181
      %v2184 = vshrl.u32 %v2009, 16
      %v2186 = vrot.slane %v2184, 4
      %v2187 = vshll.u32 %v2009, 16
      %v2189 = vrot.slane %v2187, 5
      %v2190 = vor.u32 %v2186, %v2189
      %v2191 = vrot.slane %v2190, 4
      %v2193 = vshll.u32 %v2010, 16
      %v2195 = vrot.slane %v2193, 5
      %v2196 = vsel %vm234, %v2191, %v2195
      %v2197 = vshrl.u32 %v2010, 16
      %v2199 = vrot.slane %v2197, 4
      %v2200 = vor.u32 %v2199, %v2195
      %v2201 = vrot.slane %v2200, 4
      %v2203 = vshll.u32 %v2011, 16
      %v2205 = vrot.slane %v2203, 5
      %v2206 = vsel %vm234, %v2201, %v2205
      %v2208 = vshrl.u32 %v2012, 16
      %v2210 = vrot.slane %v2208, 4
      %v2211 = vshll.u32 %v2012, 16
      %v2213 = vrot.slane %v2211, 5
      %v2214 = vor.u32 %v2210, %v2213
      %v2215 = vrot.slane %v2214, 4
      %v2217 = vshll.u32 %v2013, 16
      %v2219 = vrot.slane %v2217, 5
      %v2220 = vsel %vm234, %v2215, %v2219
      %v2221 = vshrl.u32 %v2013, 16
      %v2223 = vrot.slane %v2221, 4
      %v2224 = vor.u32 %v2223, %v2219
      %v2225 = vrot.slane %v2224, 4
      %v2227 = vshll.u32 %v2014, 16
      %v2229 = vrot.slane %v2227, 5
      %v2230 = vsel %vm234, %v2225, %v2229
      %v2232 = vshrl.u32 %v2015, 16
      %v2234 = vrot.slane %v2232, 4
      %v2235 = vshll.u32 %v2015, 16
      %v2237 = vrot.slane %v2235, 5
      %v2238 = vor.u32 %v2234, %v2237
      %v2239 = vrot.slane %v2238, 4
      %v2241 = vshll.u32 %v2016, 16
      %v2243 = vrot.slane %v2241, 5
      %v2244 = vsel %vm234, %v2239, %v2243
      %v2245 = vshrl.u32 %v2016, 16
      %v2247 = vrot.slane %v2245, 4
      %v2248 = vor.u32 %v2247, %v2243
      %v2249 = vrot.slane %v2248, 4
      %v2251 = vshll.u32 %v2017, 16
      %v2253 = vrot.slane %v2251, 5
      %v2254 = vsel %vm234, %v2249, %v2253
      %v2256 = vshrl.u32 %v2018, 16
      %v2258 = vrot.slane %v2256, 4
      %v2259 = vshll.u32 %v2018, 16
      %v2261 = vrot.slane %v2259, 5
      %v2262 = vor.u32 %v2258, %v2261
      %v2263 = vrot.slane %v2262, 4
      %v2265 = vshll.u32 %v2019, 16
      %v2267 = vrot.slane %v2265, 5
      %v2268 = vsel %vm234, %v2263, %v2267
      %v2269 = vshrl.u32 %v2019, 16
      %v2271 = vrot.slane %v2269, 4
      %v2272 = vor.u32 %v2271, %v2267
      %v2273 = vrot.slane %v2272, 4
      %v2275 = vshll.u32 %v2020, 16
      %v2277 = vrot.slane %v2275, 5
      %v2278 = vsel %vm234, %v2273, %v2277
      %v2280 = vshrl.u32 %v2021, 16
      %v2282 = vrot.slane %v2280, 4
      %v2283 = vshll.u32 %v2021, 16
      %v2285 = vrot.slane %v2283, 5
      %v2286 = vor.u32 %v2282, %v2285
      %v2287 = vrot.slane %v2286, 4
      %v2289 = vshll.u32 %v2022, 16
      %v2291 = vrot.slane %v2289, 5
      %v2292 = vsel %vm234, %v2287, %v2291
      %v2293 = vshrl.u32 %v2022, 16
      %v2295 = vrot.slane %v2293, 4
      %v2296 = vor.u32 %v2295, %v2291
      %v2297 = vrot.slane %v2296, 4
      %v2299 = vshll.u32 %v2023, 16
      %v2301 = vrot.slane %v2299, 5
      %v2302 = vsel %vm234, %v2297, %v2301
      %v2304 = vshrl.u32 %v2024, 16
      %v2306 = vrot.slane %v2304, 4
      %v2307 = vshll.u32 %v2024, 16
      %v2309 = vrot.slane %v2307, 5
      %v2310 = vor.u32 %v2306, %v2309
      %v2311 = vrot.slane %v2310, 4
      %v2313 = vshll.u32 %v2025, 16
      %v2315 = vrot.slane %v2313, 5
      %v2316 = vsel %vm234, %v2311, %v2315
      %v2317 = vshrl.u32 %v2025, 16
      %v2319 = vrot.slane %v2317, 4
      %v2320 = vor.u32 %v2319, %v2315
      %v2321 = vrot.slane %v2320, 4
      %v2323 = vshll.u32 %v2026, 16
      %v2325 = vrot.slane %v2323, 5
      %v2326 = vsel %vm234, %v2321, %v2325
      %v2328 = vshrl.u32 %v2027, 16
      %v2330 = vrot.slane %v2328, 4
      %v2331 = vshll.u32 %v2027, 16
      %v2333 = vrot.slane %v2331, 5
      %v2334 = vor.u32 %v2330, %v2333
      %v2335 = vrot.slane %v2334, 4
      %v2337 = vshll.u32 %v2028, 16
      %v2339 = vrot.slane %v2337, 5
      %v2340 = vsel %vm234, %v2335, %v2339
      %v2341 = vshrl.u32 %v2028, 16
      %v2343 = vrot.slane %v2341, 4
      %v2344 = vor.u32 %v2343, %v2339
      %v2345 = vrot.slane %v2344, 4
      %v2347 = vshll.u32 %v2029, 16
      %v2349 = vrot.slane %v2347, 5
      %v2350 = vsel %vm234, %v2345, %v2349
      %v2352 = vshrl.u32 %v2030, 16
      %v2354 = vrot.slane %v2352, 4
      %v2355 = vshll.u32 %v2030, 16
      %v2357 = vrot.slane %v2355, 5
      %v2358 = vor.u32 %v2354, %v2357
      %v2359 = vrot.slane %v2358, 4
      %v2361 = vshll.u32 %v2031, 16
      %v2363 = vrot.slane %v2361, 5
      %v2364 = vsel %vm234, %v2359, %v2363
      %v2365 = vshrl.u32 %v2031, 16
      %v2367 = vrot.slane %v2365, 4
      %v2368 = vor.u32 %v2367, %v2363
      %v2369 = vrot.slane %v2368, 4
      %v2371 = vshll.u32 %v2032, 16
      %v2373 = vrot.slane %v2371, 5
      %v2374 = vsel %vm234, %v2369, %v2373
      %v2376 = vshrl.u32 %v2033, 16
      %v2378 = vrot.slane %v2376, 4
      %v2379 = vshll.u32 %v2033, 16
      %v2381 = vrot.slane %v2379, 5
      %v2382 = vor.u32 %v2378, %v2381
      %v2383 = vrot.slane %v2382, 4
      %v2385 = vshll.u32 %v2034, 16
      %v2387 = vrot.slane %v2385, 5
      %v2388 = vsel %vm234, %v2383, %v2387
      %v2389 = vshrl.u32 %v2034, 16
      %v2391 = vrot.slane %v2389, 4
      %v2392 = vor.u32 %v2391, %v2387
      %v2393 = vrot.slane %v2392, 4
      %v2395 = vshll.u32 %v2035, 16
      %v2397 = vrot.slane %v2395, 5
      %v2398 = vsel %vm234, %v2393, %v2397
      %v2400 = vshrl.u32 %v2036, 16
      %v2402 = vrot.slane %v2400, 4
      %v2403 = vshll.u32 %v2036, 16
      %v2405 = vrot.slane %v2403, 5
      %v2406 = vor.u32 %v2402, %v2405
      %v2407 = vrot.slane %v2406, 4
      %v2409 = vshll.u32 %v2037, 16
      %v2411 = vrot.slane %v2409, 5
      %v2412 = vsel %vm234, %v2407, %v2411
      %v2413 = vshrl.u32 %v2037, 16
      %v2415 = vrot.slane %v2413, 4
      %v2416 = vor.u32 %v2415, %v2411
      %v2417 = vrot.slane %v2416, 4
      %v2419 = vshll.u32 %v2038, 16
      %v2421 = vrot.slane %v2419, 5
      %v2422 = vsel %vm234, %v2417, %v2421
      %s2423 = scalar_lea.vmem %s1, 8
      %v2424 = vld [vmem:[%s2423] sm:$0x3]
      %v2425 = vunpack.c.l.b16 %v2052
      %v2426 = vunpack.c.l.b16 %v2062
      %v2427 = vunpack.c.l.b16 %v2076
      %v2428 = vunpack.c.l.b16 %v2086
      %v2429 = vunpack.c.l.b16 %v2100
      %v2430 = vunpack.c.l.b16 %v2110
      %v2431 = vunpack.c.l.b16 %v2124
      %v2432 = vunpack.c.l.b16 %v2134
      %v2433 = vunpack.c.l.b16 %v2148
      %v2434 = vunpack.c.l.b16 %v2158
      %v2435 = vunpack.c.l.b16 %v2172
      %v2436 = vunpack.c.l.b16 %v2182
      %v2437 = vunpack.c.l.b16 %v2196
      %v2438 = vunpack.c.l.b16 %v2206
      %v2439 = vunpack.c.l.b16 %v2220
      %v2440 = vunpack.c.l.b16 %v2230
      %v2441 = vunpack.c.l.b16 %v2244
      %v2442 = vunpack.c.l.b16 %v2254
      %v2443 = vunpack.c.l.b16 %v2268
      %v2444 = vunpack.c.l.b16 %v2278
      %v2445 = vunpack.c.l.b16 %v2292
      %v2446 = vunpack.c.l.b16 %v2302
      %v2447 = vunpack.c.l.b16 %v2316
      %v2448 = vunpack.c.l.b16 %v2326
      %v2449 = vunpack.c.l.b16 %v2340
      %v2450 = vunpack.c.l.b16 %v2350
      %v2451 = vunpack.c.l.b16 %v2364
      %v2452 = vunpack.c.l.b16 %v2374
      %v2453 = vunpack.c.l.b16 %v2388
      %v2454 = vunpack.c.l.b16 %v2398
      %v2455 = vunpack.c.l.b16 %v2412
      %v2456 = vunpack.c.l.b16 %v2422
      %v2457 = vpack.c.b16 %v2426, %v2425
      %v2458 = vpack.c.b16 %v2428, %v2427
      %v2459 = vpack.c.b16 %v2430, %v2429
      %v2460 = vpack.c.b16 %v2432, %v2431
      %v2461 = vpack.c.b16 %v2434, %v2433
      %v2462 = vpack.c.b16 %v2436, %v2435
      %v2463 = vpack.c.b16 %v2438, %v2437
      %v2464 = vpack.c.b16 %v2440, %v2439
      %v2465 = vpack.c.b16 %v2442, %v2441
      %v2466 = vpack.c.b16 %v2444, %v2443
      %v2467 = vpack.c.b16 %v2446, %v2445
      %v2468 = vpack.c.b16 %v2448, %v2447
      %v2469 = vpack.c.b16 %v2450, %v2449
      %v2470 = vpack.c.b16 %v2452, %v2451
      %v2471 = vpack.c.b16 %v2454, %v2453
      %v2472 = vpack.c.b16 %v2456, %v2455
      %v2474 = vsel %vm669, %v2457, 0
      %v2477 = vsel %vm669, %v2458, 0
      %v2480 = vsel %vm669, %v2459, 0
      %v2483 = vsel %vm669, %v2460, 0
      %v2486 = vsel %vm669, %v2461, 0
      %v2489 = vsel %vm669, %v2462, 0
      %v2492 = vsel %vm669, %v2463, 0
      %v2495 = vsel %vm669, %v2464, 0
      %v2498 = vsel %vm669, %v2465, 0
      %v2501 = vsel %vm669, %v2466, 0
      %v2504 = vsel %vm669, %v2467, 0
      %v2507 = vsel %vm669, %v2468, 0
      %v2510 = vsel %vm669, %v2469, 0
      %v2513 = vsel %vm669, %v2470, 0
      %v2516 = vsel %vm669, %v2471, 0
      %v2519 = vsel %vm669, %v2472, 0
      %v2522 = vsel %vm718, %v2424, 0
      %2524 = vmatprep.subr.bf16.mxu0 0
      %2525 = vmatpush1.bf16.msra.mxu0 0
      %2526 = vmatprep.subr.bf16.mxu0 0
      %2527 = vmatpush1.bf16.msra.mxu0 0
      %2528 = vmatprep.subr.bf16.mxu0 0
      %2529 = vmatpush1.bf16.msra.mxu0 0
      %2530 = vmatprep.subr.bf16.mxu0 0
      %2531 = vmatpush1.bf16.msra.mxu0 0
      %2532 = vmatprep.subr.bf16.mxu0 0
      %2533 = vmatpush1.bf16.msra.mxu0 0
      %2534 = vmatprep.subr.bf16.mxu0 0
      %2535 = vmatpush1.bf16.msra.mxu0 0
      %2536 = vmatprep.subr.bf16.mxu0 0
      %2537 = vmatpush1.bf16.msra.mxu0 0
      %2538 = vmatprep.subr.bf16.mxu0 0
      %2539 = vmatpush1.bf16.msra.mxu0 %v2522
      %2540 = vmatprep.subr.bf16.mxu0 0
      %2541 = vmatpush2.bf16.msra.mxu0 0
      %2542 = vmatprep.subr.bf16.mxu0 0
      %2543 = vmatpush2.bf16.msra.mxu0 0
      %2544 = vmatprep.subr.bf16.mxu0 0
      %2545 = vmatpush2.bf16.msra.mxu0 0
      %2546 = vmatprep.subr.bf16.mxu0 0
      %2547 = vmatpush2.bf16.msra.mxu0 0
      %2548 = vmatprep.subr.bf16.mxu0 0
      %2549 = vmatpush2.bf16.msra.mxu0 0
      %2550 = vmatprep.subr.bf16.mxu0 0
      %2551 = vmatpush2.bf16.msra.mxu0 0
      %2552 = vmatprep.subr.bf16.mxu0 0
      %2553 = vmatpush2.bf16.msra.mxu0 0
      %2554 = vmatprep.subr.bf16.mxu0 0
      %2555 = vmatpush2.bf16.msra.mxu0 0
      %2556 = vmatprep.mubr.bf16.mxu0 0
      %2557 = vmatmul.mubr.bf16.gmra.mxu0 %v2474
      %v2558 = vpop.f32.mrf.mxu0
      %v2559 = vadd.f32 0.0, %v2558
      %v2560 = vpop.f32.mrf.mxu0
      %v2561 = vpop.f32.mrf.mxu0
      %v2562 = vadd.f32 0.0, %v2561
      %v2563 = vpop.f32.mrf.mxu0
      %2564 = vmatprep.mubr.bf16.mxu0 0
      %2565 = vmatmul.mubr.bf16.gmra.mxu0 %v2477
      %v2566 = vpop.f32.mrf.mxu0
      %v2567 = vadd.f32 0.0, %v2566
      %v2568 = vpop.f32.mrf.mxu0
      %v2569 = vpop.f32.mrf.mxu0
      %v2570 = vadd.f32 0.0, %v2569
      %v2571 = vpop.f32.mrf.mxu0
      %2572 = vmatprep.mubr.bf16.mxu0 0
      %2573 = vmatmul.mubr.bf16.gmra.mxu0 %v2480
      %v2574 = vpop.f32.mrf.mxu0
      %v2575 = vadd.f32 0.0, %v2574
      %v2576 = vpop.f32.mrf.mxu0
      %v2577 = vpop.f32.mrf.mxu0
      %v2578 = vadd.f32 0.0, %v2577
      %v2579 = vpop.f32.mrf.mxu0
      %2580 = vmatprep.mubr.bf16.mxu0 0
      %2581 = vmatmul.mubr.bf16.gmra.mxu0 %v2483
      %v2582 = vpop.f32.mrf.mxu0
      %v2583 = vadd.f32 0.0, %v2582
      %v2584 = vpop.f32.mrf.mxu0
      %v2585 = vpop.f32.mrf.mxu0
      %v2586 = vadd.f32 0.0, %v2585
      %v2587 = vpop.f32.mrf.mxu0
      %2588 = vmatprep.mubr.bf16.mxu0 0
      %2589 = vmatmul.mubr.bf16.gmra.mxu0 %v2486
      %v2590 = vpop.f32.mrf.mxu0
      %v2591 = vadd.f32 0.0, %v2590
      %v2592 = vpop.f32.mrf.mxu0
      %v2593 = vpop.f32.mrf.mxu0
      %v2594 = vadd.f32 0.0, %v2593
      %v2595 = vpop.f32.mrf.mxu0
      %2596 = vmatprep.mubr.bf16.mxu0 0
      %2597 = vmatmul.mubr.bf16.gmra.mxu0 %v2489
      %v2598 = vpop.f32.mrf.mxu0
      %v2599 = vadd.f32 0.0, %v2598
      %v2600 = vpop.f32.mrf.mxu0
      %v2601 = vpop.f32.mrf.mxu0
      %v2602 = vadd.f32 0.0, %v2601
      %v2603 = vpop.f32.mrf.mxu0
      %2604 = vmatprep.mubr.bf16.mxu0 0
      %2605 = vmatmul.mubr.bf16.gmra.mxu0 %v2492
      %v2606 = vpop.f32.mrf.mxu0
      %v2607 = vadd.f32 0.0, %v2606
      %v2608 = vpop.f32.mrf.mxu0
      %v2609 = vpop.f32.mrf.mxu0
      %v2610 = vadd.f32 0.0, %v2609
      %v2611 = vpop.f32.mrf.mxu0
      %2612 = vmatprep.mubr.bf16.mxu0 0
      %2613 = vmatmul.mubr.bf16.gmra.mxu0 %v2495
      %v2614 = vpop.f32.mrf.mxu0
      %v2615 = vadd.f32 0.0, %v2614
      %v2616 = vpop.f32.mrf.mxu0
      %v2617 = vpop.f32.mrf.mxu0
      %v2618 = vadd.f32 0.0, %v2617
      %v2619 = vpop.f32.mrf.mxu0
      %2620 = vmatprep.mubr.bf16.mxu0 0
      %2621 = vmatmul.mubr.bf16.gmra.mxu0 %v2498
      %v2622 = vpop.f32.mrf.mxu0
      %v2623 = vadd.f32 0.0, %v2622
      %v2624 = vpop.f32.mrf.mxu0
      %v2625 = vpop.f32.mrf.mxu0
      %v2626 = vadd.f32 0.0, %v2625
      %v2627 = vpop.f32.mrf.mxu0
      %2628 = vmatprep.mubr.bf16.mxu0 0
      %2629 = vmatmul.mubr.bf16.gmra.mxu0 %v2501
      %v2630 = vpop.f32.mrf.mxu0
      %v2631 = vadd.f32 0.0, %v2630
      %v2632 = vpop.f32.mrf.mxu0
      %v2633 = vpop.f32.mrf.mxu0
      %v2634 = vadd.f32 0.0, %v2633
      %v2635 = vpop.f32.mrf.mxu0
      %2636 = vmatprep.mubr.bf16.mxu0 0
      %2637 = vmatmul.mubr.bf16.gmra.mxu0 %v2504
      %v2638 = vpop.f32.mrf.mxu0
      %v2639 = vadd.f32 0.0, %v2638
      %v2640 = vpop.f32.mrf.mxu0
      %v2641 = vpop.f32.mrf.mxu0
      %v2642 = vadd.f32 0.0, %v2641
      %v2643 = vpop.f32.mrf.mxu0
      %2644 = vmatprep.mubr.bf16.mxu0 0
      %2645 = vmatmul.mubr.bf16.gmra.mxu0 %v2507
      %v2646 = vpop.f32.mrf.mxu0
      %v2647 = vadd.f32 0.0, %v2646
      %v2648 = vpop.f32.mrf.mxu0
      %v2649 = vpop.f32.mrf.mxu0
      %v2650 = vadd.f32 0.0, %v2649
      %v2651 = vpop.f32.mrf.mxu0
      %2652 = vmatprep.mubr.bf16.mxu0 0
      %2653 = vmatmul.mubr.bf16.gmra.mxu0 %v2510
      %v2654 = vpop.f32.mrf.mxu0
      %v2655 = vadd.f32 0.0, %v2654
      %v2656 = vpop.f32.mrf.mxu0
      %v2657 = vpop.f32.mrf.mxu0
      %v2658 = vadd.f32 0.0, %v2657
      %v2659 = vpop.f32.mrf.mxu0
      %2660 = vmatprep.mubr.bf16.mxu0 0
      %2661 = vmatmul.mubr.bf16.gmra.mxu0 %v2513
      %v2662 = vpop.f32.mrf.mxu0
      %v2663 = vadd.f32 0.0, %v2662
      %v2664 = vpop.f32.mrf.mxu0
      %v2665 = vpop.f32.mrf.mxu0
      %v2666 = vadd.f32 0.0, %v2665
      %v2667 = vpop.f32.mrf.mxu0
      %2668 = vmatprep.mubr.bf16.mxu0 0
      %2669 = vmatmul.mubr.bf16.gmra.mxu0 %v2516
      %v2670 = vpop.f32.mrf.mxu0
      %v2671 = vadd.f32 0.0, %v2670
      %v2672 = vpop.f32.mrf.mxu0
      %v2673 = vpop.f32.mrf.mxu0
      %v2674 = vadd.f32 0.0, %v2673
      %v2675 = vpop.f32.mrf.mxu0
      %2676 = vmatprep.mubr.bf16.mxu0 0
      %2677 = vmatmul.mubr.bf16.gmra.mxu0 %v2519
      %v2678 = vpop.f32.mrf.mxu0
      %v2679 = vadd.f32 0.0, %v2678
      %v2680 = vpop.f32.mrf.mxu0
      %v2681 = vpop.f32.mrf.mxu0
      %v2682 = vadd.f32 0.0, %v2681
      %v2683 = vpop.f32.mrf.mxu0
      %2684 = vdwg.mxu0
      %v2685 = vadd.f32 %v1959, %v2559
      %v2686 = vadd.f32 %v1960, %v2562
      %v2687 = vadd.f32 %v1961, %v2567
      %v2688 = vadd.f32 %v1962, %v2570
      %v2689 = vadd.f32 %v1963, %v2575
      %v2690 = vadd.f32 %v1964, %v2578
      %v2691 = vadd.f32 %v1965, %v2583
      %v2692 = vadd.f32 %v1966, %v2586
      %v2693 = vadd.f32 %v1967, %v2591
      %v2694 = vadd.f32 %v1968, %v2594
      %v2695 = vadd.f32 %v1969, %v2599
      %v2696 = vadd.f32 %v1970, %v2602
      %v2697 = vadd.f32 %v1971, %v2607
      %v2698 = vadd.f32 %v1972, %v2610
      %v2699 = vadd.f32 %v1973, %v2615
      %v2700 = vadd.f32 %v1974, %v2618
      %v2701 = vadd.f32 %v1975, %v2623
      %v2702 = vadd.f32 %v1976, %v2626
      %v2703 = vadd.f32 %v1977, %v2631
      %v2704 = vadd.f32 %v1978, %v2634
      %v2705 = vadd.f32 %v1979, %v2639
      %v2706 = vadd.f32 %v1980, %v2642
      %v2707 = vadd.f32 %v1981, %v2647
      %v2708 = vadd.f32 %v1982, %v2650
      %v2709 = vadd.f32 %v1983, %v2655
      %v2710 = vadd.f32 %v1984, %v2658
      %v2711 = vadd.f32 %v1985, %v2663
      %v2712 = vadd.f32 %v1986, %v2666
      %v2713 = vadd.f32 %v1987, %v2671
      %v2714 = vadd.f32 %v1988, %v2674
      %v2715 = vadd.f32 %v1989, %v2679
      %v2716 = vadd.f32 %v1990, %v2682
      %v2717 = vld [vmem:[%s1632] sm:$0xe]
      %v2718 = vld [vmem:[%s1632 + $0xc] sm:$0xe]
      %v2719 = vld [vmem:[%s1632 + $0x18] sm:$0xe]
      %v2720 = vld [vmem:[%s1632 + $0x24] sm:$0xe]
      %v2721 = vld [vmem:[%s1632 + $0x30] sm:$0xe]
      %v2722 = vld [vmem:[%s1632 + $0x3c] sm:$0xe]
      %v2723 = vld [vmem:[%s1632 + $0x48] sm:$0xe]
      %v2724 = vld [vmem:[%s1632 + $0x54] sm:$0xe]
      %v2725 = vld [vmem:[%s1632 + $0x60] sm:$0xe]
      %v2726 = vld [vmem:[%s1632 + $0x6c] sm:$0xe]
      %v2727 = vld [vmem:[%s1632 + $0x78] sm:$0xe]
      %v2728 = vld [vmem:[%s1632 + $0x84] sm:$0xe]
      %v2729 = vld [vmem:[%s1632 + $0x90] sm:$0xe]
      %v2730 = vld [vmem:[%s1632 + $0x9c] sm:$0xe]
      %v2731 = vld [vmem:[%s1632 + $0xa8] sm:$0xe]
      %v2732 = vld [vmem:[%s1632 + $0xb4] sm:$0xe]
      %v2781 = vrot.slane %v2717, 5
      %v2782 = vrot.slane %v2781, 4
      %v2783 = vrot.slane %v1992, 5
      %v2784 = vsel %vm1225, %v2782, %v2783
      %v2785 = vrot.slane %v2783, 4
      %v2786 = vrot.slane %v1993, 5
      %v2787 = vsel %vm1225, %v2785, %v2786
      %v2788 = vrot.slane %v2718, 5
      %v2789 = vrot.slane %v2788, 4
      %v2790 = vrot.slane %v1995, 5
      %v2791 = vsel %vm1225, %v2789, %v2790
      %v2792 = vrot.slane %v2790, 4
      %v2793 = vrot.slane %v1996, 5
      %v2794 = vsel %vm1225, %v2792, %v2793
      %v2795 = vrot.slane %v2719, 5
      %v2796 = vrot.slane %v2795, 4
      %v2797 = vrot.slane %v1998, 5
      %v2798 = vsel %vm1225, %v2796, %v2797
      %v2799 = vrot.slane %v2797, 4
      %v2800 = vrot.slane %v1999, 5
      %v2801 = vsel %vm1225, %v2799, %v2800
      %v2802 = vrot.slane %v2720, 5
      %v2803 = vrot.slane %v2802, 4
      %v2804 = vrot.slane %v2001, 5
      %v2805 = vsel %vm1225, %v2803, %v2804
      %v2806 = vrot.slane %v2804, 4
      %v2807 = vrot.slane %v2002, 5
      %v2808 = vsel %vm1225, %v2806, %v2807
      %v2809 = vrot.slane %v2721, 5
      %v2810 = vrot.slane %v2809, 4
      %v2811 = vrot.slane %v2004, 5
      %v2812 = vsel %vm1225, %v2810, %v2811
      %v2813 = vrot.slane %v2811, 4
      %v2814 = vrot.slane %v2005, 5
      %v2815 = vsel %vm1225, %v2813, %v2814
      %v2816 = vrot.slane %v2722, 5
      %v2817 = vrot.slane %v2816, 4
      %v2818 = vrot.slane %v2007, 5
      %v2819 = vsel %vm1225, %v2817, %v2818
      %v2820 = vrot.slane %v2818, 4
      %v2821 = vrot.slane %v2008, 5
      %v2822 = vsel %vm1225, %v2820, %v2821
      %v2823 = vrot.slane %v2723, 5
      %v2824 = vrot.slane %v2823, 4
      %v2825 = vrot.slane %v2010, 5
      %v2826 = vsel %vm1225, %v2824, %v2825
      %v2827 = vrot.slane %v2825, 4
      %v2828 = vrot.slane %v2011, 5
      %v2829 = vsel %vm1225, %v2827, %v2828
      %v2830 = vrot.slane %v2724, 5
      %v2831 = vrot.slane %v2830, 4
      %v2832 = vrot.slane %v2013, 5
      %v2833 = vsel %vm1225, %v2831, %v2832
      %v2834 = vrot.slane %v2832, 4
      %v2835 = vrot.slane %v2014, 5
      %v2836 = vsel %vm1225, %v2834, %v2835
      %v2837 = vrot.slane %v2725, 5
      %v2838 = vrot.slane %v2837, 4
      %v2839 = vrot.slane %v2016, 5
      %v2840 = vsel %vm1225, %v2838, %v2839
      %v2841 = vrot.slane %v2839, 4
      %v2842 = vrot.slane %v2017, 5
      %v2843 = vsel %vm1225, %v2841, %v2842
      %v2844 = vrot.slane %v2726, 5
      %v2845 = vrot.slane %v2844, 4
      %v2846 = vrot.slane %v2019, 5
      %v2847 = vsel %vm1225, %v2845, %v2846
      %v2848 = vrot.slane %v2846, 4
      %v2849 = vrot.slane %v2020, 5
      %v2850 = vsel %vm1225, %v2848, %v2849
      %v2851 = vrot.slane %v2727, 5
      %v2852 = vrot.slane %v2851, 4
      %v2853 = vrot.slane %v2022, 5
      %v2854 = vsel %vm1225, %v2852, %v2853
      %v2855 = vrot.slane %v2853, 4
      %v2856 = vrot.slane %v2023, 5
      %v2857 = vsel %vm1225, %v2855, %v2856
      %v2858 = vrot.slane %v2728, 5
      %v2859 = vrot.slane %v2858, 4
      %v2860 = vrot.slane %v2025, 5
      %v2861 = vsel %vm1225, %v2859, %v2860
      %v2862 = vrot.slane %v2860, 4
      %v2863 = vrot.slane %v2026, 5
      %v2864 = vsel %vm1225, %v2862, %v2863
      %v2865 = vrot.slane %v2729, 5
      %v2866 = vrot.slane %v2865, 4
      %v2867 = vrot.slane %v2028, 5
      %v2868 = vsel %vm1225, %v2866, %v2867
      %v2869 = vrot.slane %v2867, 4
      %v2870 = vrot.slane %v2029, 5
      %v2871 = vsel %vm1225, %v2869, %v2870
      %v2872 = vrot.slane %v2730, 5
      %v2873 = vrot.slane %v2872, 4
      %v2874 = vrot.slane %v2031, 5
      %v2875 = vsel %vm1225, %v2873, %v2874
      %v2876 = vrot.slane %v2874, 4
      %v2877 = vrot.slane %v2032, 5
      %v2878 = vsel %vm1225, %v2876, %v2877
      %v2879 = vrot.slane %v2731, 5
      %v2880 = vrot.slane %v2879, 4
      %v2881 = vrot.slane %v2034, 5
      %v2882 = vsel %vm1225, %v2880, %v2881
      %v2883 = vrot.slane %v2881, 4
      %v2884 = vrot.slane %v2035, 5
      %v2885 = vsel %vm1225, %v2883, %v2884
      %v2886 = vrot.slane %v2732, 5
      %v2887 = vrot.slane %v2886, 4
      %v2888 = vrot.slane %v2037, 5
      %v2889 = vsel %vm1225, %v2887, %v2888
      %v2890 = vrot.slane %v2888, 4
      %v2891 = vrot.slane %v2038, 5
      %v2892 = vsel %vm1225, %v2890, %v2891
      %s2893 = scalar_lea.vmem %s1, 10
      %v2894 = vld [vmem:[%s2893] sm:$0x3]
      %v2895 = vunpack.c.l.b16 %v2784
      %v2896 = vunpack.c.l.b16 %v2787
      %v2897 = vunpack.c.l.b16 %v2791
      %v2898 = vunpack.c.l.b16 %v2794
      %v2899 = vunpack.c.l.b16 %v2798
      %v2900 = vunpack.c.l.b16 %v2801
      %v2901 = vunpack.c.l.b16 %v2805
      %v2902 = vunpack.c.l.b16 %v2808
      %v2903 = vunpack.c.l.b16 %v2812
      %v2904 = vunpack.c.l.b16 %v2815
      %v2905 = vunpack.c.l.b16 %v2819
      %v2906 = vunpack.c.l.b16 %v2822
      %v2907 = vunpack.c.l.b16 %v2826
      %v2908 = vunpack.c.l.b16 %v2829
      %v2909 = vunpack.c.l.b16 %v2833
      %v2910 = vunpack.c.l.b16 %v2836
      %v2911 = vunpack.c.l.b16 %v2840
      %v2912 = vunpack.c.l.b16 %v2843
      %v2913 = vunpack.c.l.b16 %v2847
      %v2914 = vunpack.c.l.b16 %v2850
      %v2915 = vunpack.c.l.b16 %v2854
      %v2916 = vunpack.c.l.b16 %v2857
      %v2917 = vunpack.c.l.b16 %v2861
      %v2918 = vunpack.c.l.b16 %v2864
      %v2919 = vunpack.c.l.b16 %v2868
      %v2920 = vunpack.c.l.b16 %v2871
      %v2921 = vunpack.c.l.b16 %v2875
      %v2922 = vunpack.c.l.b16 %v2878
      %v2923 = vunpack.c.l.b16 %v2882
      %v2924 = vunpack.c.l.b16 %v2885
      %v2925 = vunpack.c.l.b16 %v2889
      %v2926 = vunpack.c.l.b16 %v2892
      %v2927 = vpack.c.b16 %v2896, %v2895
      %v2928 = vpack.c.b16 %v2898, %v2897
      %v2929 = vpack.c.b16 %v2900, %v2899
      %v2930 = vpack.c.b16 %v2902, %v2901
      %v2931 = vpack.c.b16 %v2904, %v2903
      %v2932 = vpack.c.b16 %v2906, %v2905
      %v2933 = vpack.c.b16 %v2908, %v2907
      %v2934 = vpack.c.b16 %v2910, %v2909
      %v2935 = vpack.c.b16 %v2912, %v2911
      %v2936 = vpack.c.b16 %v2914, %v2913
      %v2937 = vpack.c.b16 %v2916, %v2915
      %v2938 = vpack.c.b16 %v2918, %v2917
      %v2939 = vpack.c.b16 %v2920, %v2919
      %v2940 = vpack.c.b16 %v2922, %v2921
      %v2941 = vpack.c.b16 %v2924, %v2923
      %v2942 = vpack.c.b16 %v2926, %v2925
      %v2944 = vsel %vm669, %v2927, 0
      %v2947 = vsel %vm669, %v2928, 0
      %v2950 = vsel %vm669, %v2929, 0
      %v2953 = vsel %vm669, %v2930, 0
      %v2956 = vsel %vm669, %v2931, 0
      %v2959 = vsel %vm669, %v2932, 0
      %v2962 = vsel %vm669, %v2933, 0
      %v2965 = vsel %vm669, %v2934, 0
      %v2968 = vsel %vm669, %v2935, 0
      %v2971 = vsel %vm669, %v2936, 0
      %v2974 = vsel %vm669, %v2937, 0
      %v2977 = vsel %vm669, %v2938, 0
      %v2980 = vsel %vm669, %v2939, 0
      %v2983 = vsel %vm669, %v2940, 0
      %v2986 = vsel %vm669, %v2941, 0
      %v2989 = vsel %vm669, %v2942, 0
      %v2992 = vsel %vm718, %v2894, 0
      %2994 = vmatprep.subr.bf16.mxu0 0
      %2995 = vmatpush1.bf16.msra.mxu0 0
      %2996 = vmatprep.subr.bf16.mxu0 0
      %2997 = vmatpush1.bf16.msra.mxu0 0
      %2998 = vmatprep.subr.bf16.mxu0 0
      %2999 = vmatpush1.bf16.msra.mxu0 0
      %3000 = vmatprep.subr.bf16.mxu0 0
      %3001 = vmatpush1.bf16.msra.mxu0 0
      %3002 = vmatprep.subr.bf16.mxu0 0
      %3003 = vmatpush1.bf16.msra.mxu0 0
      %3004 = vmatprep.subr.bf16.mxu0 0
      %3005 = vmatpush1.bf16.msra.mxu0 0
      %3006 = vmatprep.subr.bf16.mxu0 0
      %3007 = vmatpush1.bf16.msra.mxu0 0
      %3008 = vmatprep.subr.bf16.mxu0 0
      %3009 = vmatpush1.bf16.msra.mxu0 %v2992
      %3010 = vmatprep.subr.bf16.mxu0 0
      %3011 = vmatpush2.bf16.msra.mxu0 0
      %3012 = vmatprep.subr.bf16.mxu0 0
      %3013 = vmatpush2.bf16.msra.mxu0 0
      %3014 = vmatprep.subr.bf16.mxu0 0
      %3015 = vmatpush2.bf16.msra.mxu0 0
      %3016 = vmatprep.subr.bf16.mxu0 0
      %3017 = vmatpush2.bf16.msra.mxu0 0
      %3018 = vmatprep.subr.bf16.mxu0 0
      %3019 = vmatpush2.bf16.msra.mxu0 0
      %3020 = vmatprep.subr.bf16.mxu0 0
      %3021 = vmatpush2.bf16.msra.mxu0 0
      %3022 = vmatprep.subr.bf16.mxu0 0
      %3023 = vmatpush2.bf16.msra.mxu0 0
      %3024 = vmatprep.subr.bf16.mxu0 0
      %3025 = vmatpush2.bf16.msra.mxu0 0
      %3026 = vmatprep.mubr.bf16.mxu0 0
      %3027 = vmatmul.mubr.bf16.gmra.mxu0 %v2944
      %v3028 = vpop.f32.mrf.mxu0
      %v3029 = vadd.f32 0.0, %v3028
      %v3030 = vpop.f32.mrf.mxu0
      %v3031 = vpop.f32.mrf.mxu0
      %v3032 = vadd.f32 0.0, %v3031
      %v3033 = vpop.f32.mrf.mxu0
      %3034 = vmatprep.mubr.bf16.mxu0 0
      %3035 = vmatmul.mubr.bf16.gmra.mxu0 %v2947
      %v3036 = vpop.f32.mrf.mxu0
      %v3037 = vadd.f32 0.0, %v3036
      %v3038 = vpop.f32.mrf.mxu0
      %v3039 = vpop.f32.mrf.mxu0
      %v3040 = vadd.f32 0.0, %v3039
      %v3041 = vpop.f32.mrf.mxu0
      %3042 = vmatprep.mubr.bf16.mxu0 0
      %3043 = vmatmul.mubr.bf16.gmra.mxu0 %v2950
      %v3044 = vpop.f32.mrf.mxu0
      %v3045 = vadd.f32 0.0, %v3044
      %v3046 = vpop.f32.mrf.mxu0
      %v3047 = vpop.f32.mrf.mxu0
      %v3048 = vadd.f32 0.0, %v3047
      %v3049 = vpop.f32.mrf.mxu0
      %3050 = vmatprep.mubr.bf16.mxu0 0
      %3051 = vmatmul.mubr.bf16.gmra.mxu0 %v2953
      %v3052 = vpop.f32.mrf.mxu0
      %v3053 = vadd.f32 0.0, %v3052
      %v3054 = vpop.f32.mrf.mxu0
      %v3055 = vpop.f32.mrf.mxu0
      %v3056 = vadd.f32 0.0, %v3055
      %v3057 = vpop.f32.mrf.mxu0
      %3058 = vmatprep.mubr.bf16.mxu0 0
      %3059 = vmatmul.mubr.bf16.gmra.mxu0 %v2956
      %v3060 = vpop.f32.mrf.mxu0
      %v3061 = vadd.f32 0.0, %v3060
      %v3062 = vpop.f32.mrf.mxu0
      %v3063 = vpop.f32.mrf.mxu0
      %v3064 = vadd.f32 0.0, %v3063
      %v3065 = vpop.f32.mrf.mxu0
      %3066 = vmatprep.mubr.bf16.mxu0 0
      %3067 = vmatmul.mubr.bf16.gmra.mxu0 %v2959
      %v3068 = vpop.f32.mrf.mxu0
      %v3069 = vadd.f32 0.0, %v3068
      %v3070 = vpop.f32.mrf.mxu0
      %v3071 = vpop.f32.mrf.mxu0
      %v3072 = vadd.f32 0.0, %v3071
      %v3073 = vpop.f32.mrf.mxu0
      %3074 = vmatprep.mubr.bf16.mxu0 0
      %3075 = vmatmul.mubr.bf16.gmra.mxu0 %v2962
      %v3076 = vpop.f32.mrf.mxu0
      %v3077 = vadd.f32 0.0, %v3076
      %v3078 = vpop.f32.mrf.mxu0
      %v3079 = vpop.f32.mrf.mxu0
      %v3080 = vadd.f32 0.0, %v3079
      %v3081 = vpop.f32.mrf.mxu0
      %3082 = vmatprep.mubr.bf16.mxu0 0
      %3083 = vmatmul.mubr.bf16.gmra.mxu0 %v2965
      %v3084 = vpop.f32.mrf.mxu0
      %v3085 = vadd.f32 0.0, %v3084
      %v3086 = vpop.f32.mrf.mxu0
      %v3087 = vpop.f32.mrf.mxu0
      %v3088 = vadd.f32 0.0, %v3087
      %v3089 = vpop.f32.mrf.mxu0
      %3090 = vmatprep.mubr.bf16.mxu0 0
      %3091 = vmatmul.mubr.bf16.gmra.mxu0 %v2968
      %v3092 = vpop.f32.mrf.mxu0
      %v3093 = vadd.f32 0.0, %v3092
      %v3094 = vpop.f32.mrf.mxu0
      %v3095 = vpop.f32.mrf.mxu0
      %v3096 = vadd.f32 0.0, %v3095
      %v3097 = vpop.f32.mrf.mxu0
      %3098 = vmatprep.mubr.bf16.mxu0 0
      %3099 = vmatmul.mubr.bf16.gmra.mxu0 %v2971
      %v3100 = vpop.f32.mrf.mxu0
      %v3101 = vadd.f32 0.0, %v3100
      %v3102 = vpop.f32.mrf.mxu0
      %v3103 = vpop.f32.mrf.mxu0
      %v3104 = vadd.f32 0.0, %v3103
      %v3105 = vpop.f32.mrf.mxu0
      %3106 = vmatprep.mubr.bf16.mxu0 0
      %3107 = vmatmul.mubr.bf16.gmra.mxu0 %v2974
      %v3108 = vpop.f32.mrf.mxu0
      %v3109 = vadd.f32 0.0, %v3108
      %v3110 = vpop.f32.mrf.mxu0
      %v3111 = vpop.f32.mrf.mxu0
      %v3112 = vadd.f32 0.0, %v3111
      %v3113 = vpop.f32.mrf.mxu0
      %3114 = vmatprep.mubr.bf16.mxu0 0
      %3115 = vmatmul.mubr.bf16.gmra.mxu0 %v2977
      %v3116 = vpop.f32.mrf.mxu0
      %v3117 = vadd.f32 0.0, %v3116
      %v3118 = vpop.f32.mrf.mxu0
      %v3119 = vpop.f32.mrf.mxu0
      %v3120 = vadd.f32 0.0, %v3119
      %v3121 = vpop.f32.mrf.mxu0
      %3122 = vmatprep.mubr.bf16.mxu0 0
      %3123 = vmatmul.mubr.bf16.gmra.mxu0 %v2980
      %v3124 = vpop.f32.mrf.mxu0
      %v3125 = vadd.f32 0.0, %v3124
      %v3126 = vpop.f32.mrf.mxu0
      %v3127 = vpop.f32.mrf.mxu0
      %v3128 = vadd.f32 0.0, %v3127
      %v3129 = vpop.f32.mrf.mxu0
      %3130 = vmatprep.mubr.bf16.mxu0 0
      %3131 = vmatmul.mubr.bf16.gmra.mxu0 %v2983
      %v3132 = vpop.f32.mrf.mxu0
      %v3133 = vadd.f32 0.0, %v3132
      %v3134 = vpop.f32.mrf.mxu0
      %v3135 = vpop.f32.mrf.mxu0
      %v3136 = vadd.f32 0.0, %v3135
      %v3137 = vpop.f32.mrf.mxu0
      %3138 = vmatprep.mubr.bf16.mxu0 0
      %3139 = vmatmul.mubr.bf16.gmra.mxu0 %v2986
      %v3140 = vpop.f32.mrf.mxu0
      %v3141 = vadd.f32 0.0, %v3140
      %v3142 = vpop.f32.mrf.mxu0
      %v3143 = vpop.f32.mrf.mxu0
      %v3144 = vadd.f32 0.0, %v3143
      %v3145 = vpop.f32.mrf.mxu0
      %3146 = vmatprep.mubr.bf16.mxu0 0
      %3147 = vmatmul.mubr.bf16.gmra.mxu0 %v2989
      %v3148 = vpop.f32.mrf.mxu0
      %v3149 = vadd.f32 0.0, %v3148
      %v3150 = vpop.f32.mrf.mxu0
      %v3151 = vpop.f32.mrf.mxu0
      %v3152 = vadd.f32 0.0, %v3151
      %v3153 = vpop.f32.mrf.mxu0
      %3154 = vdwg.mxu0
      %v3155 = vadd.f32 %v2685, %v3029
      %v3156 = vadd.f32 %v2686, %v3032
      %v3157 = vadd.f32 %v2687, %v3037
      %v3158 = vadd.f32 %v2688, %v3040
      %v3159 = vadd.f32 %v2689, %v3045
      %v3160 = vadd.f32 %v2690, %v3048
      %v3161 = vadd.f32 %v2691, %v3053
      %v3162 = vadd.f32 %v2692, %v3056
      %v3163 = vadd.f32 %v2693, %v3061
      %v3164 = vadd.f32 %v2694, %v3064
      %v3165 = vadd.f32 %v2695, %v3069
      %v3166 = vadd.f32 %v2696, %v3072
      %v3167 = vadd.f32 %v2697, %v3077
      %v3168 = vadd.f32 %v2698, %v3080
      %v3169 = vadd.f32 %v2699, %v3085
      %v3170 = vadd.f32 %v2700, %v3088
      %v3171 = vadd.f32 %v2701, %v3093
      %v3172 = vadd.f32 %v2702, %v3096
      %v3173 = vadd.f32 %v2703, %v3101
      %v3174 = vadd.f32 %v2704, %v3104
      %v3175 = vadd.f32 %v2705, %v3109
      %v3176 = vadd.f32 %v2706, %v3112
      %v3177 = vadd.f32 %v2707, %v3117
      %v3178 = vadd.f32 %v2708, %v3120
      %v3179 = vadd.f32 %v2709, %v3125
      %v3180 = vadd.f32 %v2710, %v3128
      %v3181 = vadd.f32 %v2711, %v3133
      %v3182 = vadd.f32 %v2712, %v3136
      %v3183 = vadd.f32 %v2713, %v3141
      %v3184 = vadd.f32 %v2714, %v3144
      %v3185 = vadd.f32 %v2715, %v3149
      %v3186 = vadd.f32 %v2716, %v3152
      %s3187 = scalar_lea.vmem %s172, 24
      %v3188 = vld [vmem:[%s3187] sm:$0xf]
      %v3189 = vld [vmem:[%s3187 + $0x4] sm:$0xf]
      %v3190 = vld [vmem:[%s3187 + $0xc] sm:$0xf]
      %v3191 = vld [vmem:[%s3187 + $0x10] sm:$0xf]
      %v3192 = vld [vmem:[%s3187 + $0x18] sm:$0xf]
      %v3193 = vld [vmem:[%s3187 + $0x1c] sm:$0xf]
      %v3194 = vld [vmem:[%s3187 + $0x24] sm:$0xf]
      %v3195 = vld [vmem:[%s3187 + $0x28] sm:$0xf]
      %v3196 = vld [vmem:[%s3187 + $0x30] sm:$0xf]
      %v3197 = vld [vmem:[%s3187 + $0x34] sm:$0xf]
      %v3198 = vld [vmem:[%s3187 + $0x3c] sm:$0xf]
      %v3199 = vld [vmem:[%s3187 + $0x40] sm:$0xf]
      %v3200 = vld [vmem:[%s3187 + $0x48] sm:$0xf]
      %v3201 = vld [vmem:[%s3187 + $0x4c] sm:$0xf]
      %v3202 = vld [vmem:[%s3187 + $0x54] sm:$0xf]
      %v3203 = vld [vmem:[%s3187 + $0x58] sm:$0xf]
      %v3204 = vld [vmem:[%s3187 + $0x60] sm:$0xf]
      %v3205 = vld [vmem:[%s3187 + $0x64] sm:$0xf]
      %v3206 = vld [vmem:[%s3187 + $0x6c] sm:$0xf]
      %v3207 = vld [vmem:[%s3187 + $0x70] sm:$0xf]
      %v3208 = vld [vmem:[%s3187 + $0x78] sm:$0xf]
      %v3209 = vld [vmem:[%s3187 + $0x7c] sm:$0xf]
      %v3210 = vld [vmem:[%s3187 + $0x84] sm:$0xf]
      %v3211 = vld [vmem:[%s3187 + $0x88] sm:$0xf]
      %v3212 = vld [vmem:[%s3187 + $0x90] sm:$0xf]
      %v3213 = vld [vmem:[%s3187 + $0x94] sm:$0xf]
      %v3214 = vld [vmem:[%s3187 + $0x9c] sm:$0xf]
      %v3215 = vld [vmem:[%s3187 + $0xa0] sm:$0xf]
      %v3216 = vld [vmem:[%s3187 + $0xa8] sm:$0xf]
      %v3217 = vld [vmem:[%s3187 + $0xac] sm:$0xf]
      %v3218 = vld [vmem:[%s3187 + $0xb4] sm:$0xf]
      %v3219 = vld [vmem:[%s3187 + $0xb8] sm:$0xf]
      %s3220 = scalar_lea.vmem %s1, 12
      %v3221 = vld [vmem:[%s3220] sm:$0x3]
      %v3254 = vunpack.c.l.b16 %v3188
      %v3255 = vunpack.c.l.b16 %v3189
      %v3256 = vunpack.c.l.b16 %v3190
      %v3257 = vunpack.c.l.b16 %v3191
      %v3258 = vunpack.c.l.b16 %v3192
      %v3259 = vunpack.c.l.b16 %v3193
      %v3260 = vunpack.c.l.b16 %v3194
      %v3261 = vunpack.c.l.b16 %v3195
      %v3262 = vunpack.c.l.b16 %v3196
      %v3263 = vunpack.c.l.b16 %v3197
      %v3264 = vunpack.c.l.b16 %v3198
      %v3265 = vunpack.c.l.b16 %v3199
      %v3266 = vunpack.c.l.b16 %v3200
      %v3267 = vunpack.c.l.b16 %v3201
      %v3268 = vunpack.c.l.b16 %v3202
      %v3269 = vunpack.c.l.b16 %v3203
      %v3270 = vunpack.c.l.b16 %v3204
      %v3271 = vunpack.c.l.b16 %v3205
      %v3272 = vunpack.c.l.b16 %v3206
      %v3273 = vunpack.c.l.b16 %v3207
      %v3274 = vunpack.c.l.b16 %v3208
      %v3275 = vunpack.c.l.b16 %v3209
      %v3276 = vunpack.c.l.b16 %v3210
      %v3277 = vunpack.c.l.b16 %v3211
      %v3278 = vunpack.c.l.b16 %v3212
      %v3279 = vunpack.c.l.b16 %v3213
      %v3280 = vunpack.c.l.b16 %v3214
      %v3281 = vunpack.c.l.b16 %v3215
      %v3282 = vunpack.c.l.b16 %v3216
      %v3283 = vunpack.c.l.b16 %v3217
      %v3284 = vunpack.c.l.b16 %v3218
      %v3285 = vunpack.c.l.b16 %v3219
      %v3286 = vpack.c.b16 %v3255, %v3254
      %v3287 = vpack.c.b16 %v3257, %v3256
      %v3288 = vpack.c.b16 %v3259, %v3258
      %v3289 = vpack.c.b16 %v3261, %v3260
      %v3290 = vpack.c.b16 %v3263, %v3262
      %v3291 = vpack.c.b16 %v3265, %v3264
      %v3292 = vpack.c.b16 %v3267, %v3266
      %v3293 = vpack.c.b16 %v3269, %v3268
      %v3294 = vpack.c.b16 %v3271, %v3270
      %v3295 = vpack.c.b16 %v3273, %v3272
      %v3296 = vpack.c.b16 %v3275, %v3274
      %v3297 = vpack.c.b16 %v3277, %v3276
      %v3298 = vpack.c.b16 %v3279, %v3278
      %v3299 = vpack.c.b16 %v3281, %v3280
      %v3300 = vpack.c.b16 %v3283, %v3282
      %v3301 = vpack.c.b16 %v3285, %v3284
      %v3303 = vsel %vm669, %v3286, 0
      %v3306 = vsel %vm669, %v3287, 0
      %v3309 = vsel %vm669, %v3288, 0
      %v3312 = vsel %vm669, %v3289, 0
      %v3315 = vsel %vm669, %v3290, 0
      %v3318 = vsel %vm669, %v3291, 0
      %v3321 = vsel %vm669, %v3292, 0
      %v3324 = vsel %vm669, %v3293, 0
      %v3327 = vsel %vm669, %v3294, 0
      %v3330 = vsel %vm669, %v3295, 0
      %v3333 = vsel %vm669, %v3296, 0
      %v3336 = vsel %vm669, %v3297, 0
      %v3339 = vsel %vm669, %v3298, 0
      %v3342 = vsel %vm669, %v3299, 0
      %v3345 = vsel %vm669, %v3300, 0
      %v3348 = vsel %vm669, %v3301, 0
      %v3351 = vsel %vm718, %v3221, 0
      %3353 = vmatprep.subr.bf16.mxu0 0
      %3354 = vmatpush1.bf16.msra.mxu0 0
      %3355 = vmatprep.subr.bf16.mxu0 0
      %3356 = vmatpush1.bf16.msra.mxu0 0
      %3357 = vmatprep.subr.bf16.mxu0 0
      %3358 = vmatpush1.bf16.msra.mxu0 0
      %3359 = vmatprep.subr.bf16.mxu0 0
      %3360 = vmatpush1.bf16.msra.mxu0 0
      %3361 = vmatprep.subr.bf16.mxu0 0
      %3362 = vmatpush1.bf16.msra.mxu0 0
      %3363 = vmatprep.subr.bf16.mxu0 0
      %3364 = vmatpush1.bf16.msra.mxu0 0
      %3365 = vmatprep.subr.bf16.mxu0 0
      %3366 = vmatpush1.bf16.msra.mxu0 0
      %3367 = vmatprep.subr.bf16.mxu0 0
      %3368 = vmatpush1.bf16.msra.mxu0 %v3351
      %3369 = vmatprep.subr.bf16.mxu0 0
      %3370 = vmatpush2.bf16.msra.mxu0 0
      %3371 = vmatprep.subr.bf16.mxu0 0
      %3372 = vmatpush2.bf16.msra.mxu0 0
      %3373 = vmatprep.subr.bf16.mxu0 0
      %3374 = vmatpush2.bf16.msra.mxu0 0
      %3375 = vmatprep.subr.bf16.mxu0 0
      %3376 = vmatpush2.bf16.msra.mxu0 0
      %3377 = vmatprep.subr.bf16.mxu0 0
      %3378 = vmatpush2.bf16.msra.mxu0 0
      %3379 = vmatprep.subr.bf16.mxu0 0
      %3380 = vmatpush2.bf16.msra.mxu0 0
      %3381 = vmatprep.subr.bf16.mxu0 0
      %3382 = vmatpush2.bf16.msra.mxu0 0
      %3383 = vmatprep.subr.bf16.mxu0 0
      %3384 = vmatpush2.bf16.msra.mxu0 0
      %3385 = vmatprep.mubr.bf16.mxu0 0
      %3386 = vmatmul.mubr.bf16.gmra.mxu0 %v3303
      %v3387 = vpop.f32.mrf.mxu0
      %v3388 = vadd.f32 0.0, %v3387
      %v3389 = vpop.f32.mrf.mxu0
      %v3390 = vpop.f32.mrf.mxu0
      %v3391 = vadd.f32 0.0, %v3390
      %v3392 = vpop.f32.mrf.mxu0
      %3393 = vmatprep.mubr.bf16.mxu0 0
      %3394 = vmatmul.mubr.bf16.gmra.mxu0 %v3306
      %v3395 = vpop.f32.mrf.mxu0
      %v3396 = vadd.f32 0.0, %v3395
      %v3397 = vpop.f32.mrf.mxu0
      %v3398 = vpop.f32.mrf.mxu0
      %v3399 = vadd.f32 0.0, %v3398
      %v3400 = vpop.f32.mrf.mxu0
      %3401 = vmatprep.mubr.bf16.mxu0 0
      %3402 = vmatmul.mubr.bf16.gmra.mxu0 %v3309
      %v3403 = vpop.f32.mrf.mxu0
      %v3404 = vadd.f32 0.0, %v3403
      %v3405 = vpop.f32.mrf.mxu0
      %v3406 = vpop.f32.mrf.mxu0
      %v3407 = vadd.f32 0.0, %v3406
      %v3408 = vpop.f32.mrf.mxu0
      %3409 = vmatprep.mubr.bf16.mxu0 0
      %3410 = vmatmul.mubr.bf16.gmra.mxu0 %v3312
      %v3411 = vpop.f32.mrf.mxu0
      %v3412 = vadd.f32 0.0, %v3411
      %v3413 = vpop.f32.mrf.mxu0
      %v3414 = vpop.f32.mrf.mxu0
      %v3415 = vadd.f32 0.0, %v3414
      %v3416 = vpop.f32.mrf.mxu0
      %3417 = vmatprep.mubr.bf16.mxu0 0
      %3418 = vmatmul.mubr.bf16.gmra.mxu0 %v3315
      %v3419 = vpop.f32.mrf.mxu0
      %v3420 = vadd.f32 0.0, %v3419
      %v3421 = vpop.f32.mrf.mxu0
      %v3422 = vpop.f32.mrf.mxu0
      %v3423 = vadd.f32 0.0, %v3422
      %v3424 = vpop.f32.mrf.mxu0
      %3425 = vmatprep.mubr.bf16.mxu0 0
      %3426 = vmatmul.mubr.bf16.gmra.mxu0 %v3318
      %v3427 = vpop.f32.mrf.mxu0
      %v3428 = vadd.f32 0.0, %v3427
      %v3429 = vpop.f32.mrf.mxu0
      %v3430 = vpop.f32.mrf.mxu0
      %v3431 = vadd.f32 0.0, %v3430
      %v3432 = vpop.f32.mrf.mxu0
      %3433 = vmatprep.mubr.bf16.mxu0 0
      %3434 = vmatmul.mubr.bf16.gmra.mxu0 %v3321
      %v3435 = vpop.f32.mrf.mxu0
      %v3436 = vadd.f32 0.0, %v3435
      %v3437 = vpop.f32.mrf.mxu0
      %v3438 = vpop.f32.mrf.mxu0
      %v3439 = vadd.f32 0.0, %v3438
      %v3440 = vpop.f32.mrf.mxu0
      %3441 = vmatprep.mubr.bf16.mxu0 0
      %3442 = vmatmul.mubr.bf16.gmra.mxu0 %v3324
      %v3443 = vpop.f32.mrf.mxu0
      %v3444 = vadd.f32 0.0, %v3443
      %v3445 = vpop.f32.mrf.mxu0
      %v3446 = vpop.f32.mrf.mxu0
      %v3447 = vadd.f32 0.0, %v3446
      %v3448 = vpop.f32.mrf.mxu0
      %3449 = vmatprep.mubr.bf16.mxu0 0
      %3450 = vmatmul.mubr.bf16.gmra.mxu0 %v3327
      %v3451 = vpop.f32.mrf.mxu0
      %v3452 = vadd.f32 0.0, %v3451
      %v3453 = vpop.f32.mrf.mxu0
      %v3454 = vpop.f32.mrf.mxu0
      %v3455 = vadd.f32 0.0, %v3454
      %v3456 = vpop.f32.mrf.mxu0
      %3457 = vmatprep.mubr.bf16.mxu0 0
      %3458 = vmatmul.mubr.bf16.gmra.mxu0 %v3330
      %v3459 = vpop.f32.mrf.mxu0
      %v3460 = vadd.f32 0.0, %v3459
      %v3461 = vpop.f32.mrf.mxu0
      %v3462 = vpop.f32.mrf.mxu0
      %v3463 = vadd.f32 0.0, %v3462
      %v3464 = vpop.f32.mrf.mxu0
      %3465 = vmatprep.mubr.bf16.mxu0 0
      %3466 = vmatmul.mubr.bf16.gmra.mxu0 %v3333
      %v3467 = vpop.f32.mrf.mxu0
      %v3468 = vadd.f32 0.0, %v3467
      %v3469 = vpop.f32.mrf.mxu0
      %v3470 = vpop.f32.mrf.mxu0
      %v3471 = vadd.f32 0.0, %v3470
      %v3472 = vpop.f32.mrf.mxu0
      %3473 = vmatprep.mubr.bf16.mxu0 0
      %3474 = vmatmul.mubr.bf16.gmra.mxu0 %v3336
      %v3475 = vpop.f32.mrf.mxu0
      %v3476 = vadd.f32 0.0, %v3475
      %v3477 = vpop.f32.mrf.mxu0
      %v3478 = vpop.f32.mrf.mxu0
      %v3479 = vadd.f32 0.0, %v3478
      %v3480 = vpop.f32.mrf.mxu0
      %3481 = vmatprep.mubr.bf16.mxu0 0
      %3482 = vmatmul.mubr.bf16.gmra.mxu0 %v3339
      %v3483 = vpop.f32.mrf.mxu0
      %v3484 = vadd.f32 0.0, %v3483
      %v3485 = vpop.f32.mrf.mxu0
      %v3486 = vpop.f32.mrf.mxu0
      %v3487 = vadd.f32 0.0, %v3486
      %v3488 = vpop.f32.mrf.mxu0
      %3489 = vmatprep.mubr.bf16.mxu0 0
      %3490 = vmatmul.mubr.bf16.gmra.mxu0 %v3342
      %v3491 = vpop.f32.mrf.mxu0
      %v3492 = vadd.f32 0.0, %v3491
      %v3493 = vpop.f32.mrf.mxu0
      %v3494 = vpop.f32.mrf.mxu0
      %v3495 = vadd.f32 0.0, %v3494
      %v3496 = vpop.f32.mrf.mxu0
      %3497 = vmatprep.mubr.bf16.mxu0 0
      %3498 = vmatmul.mubr.bf16.gmra.mxu0 %v3345
      %v3499 = vpop.f32.mrf.mxu0
      %v3500 = vadd.f32 0.0, %v3499
      %v3501 = vpop.f32.mrf.mxu0
      %v3502 = vpop.f32.mrf.mxu0
      %v3503 = vadd.f32 0.0, %v3502
      %v3504 = vpop.f32.mrf.mxu0
      %3505 = vmatprep.mubr.bf16.mxu0 0
      %3506 = vmatmul.mubr.bf16.gmra.mxu0 %v3348
      %v3507 = vpop.f32.mrf.mxu0
      %v3508 = vadd.f32 0.0, %v3507
      %v3509 = vpop.f32.mrf.mxu0
      %v3510 = vpop.f32.mrf.mxu0
      %v3511 = vadd.f32 0.0, %v3510
      %v3512 = vpop.f32.mrf.mxu0
      %3513 = vdwg.mxu0
      %v3514 = vadd.f32 %v3155, %v3388
      %v3515 = vadd.f32 %v3156, %v3391
      %v3516 = vadd.f32 %v3157, %v3396
      %v3517 = vadd.f32 %v3158, %v3399
      %v3518 = vadd.f32 %v3159, %v3404
      %v3519 = vadd.f32 %v3160, %v3407
      %v3520 = vadd.f32 %v3161, %v3412
      %v3521 = vadd.f32 %v3162, %v3415
      %v3522 = vadd.f32 %v3163, %v3420
      %v3523 = vadd.f32 %v3164, %v3423
      %v3524 = vadd.f32 %v3165, %v3428
      %v3525 = vadd.f32 %v3166, %v3431
      %v3526 = vadd.f32 %v3167, %v3436
      %v3527 = vadd.f32 %v3168, %v3439
      %v3528 = vadd.f32 %v3169, %v3444
      %v3529 = vadd.f32 %v3170, %v3447
      %v3530 = vadd.f32 %v3171, %v3452
      %v3531 = vadd.f32 %v3172, %v3455
      %v3532 = vadd.f32 %v3173, %v3460
      %v3533 = vadd.f32 %v3174, %v3463
      %v3534 = vadd.f32 %v3175, %v3468
      %v3535 = vadd.f32 %v3176, %v3471
      %v3536 = vadd.f32 %v3177, %v3476
      %v3537 = vadd.f32 %v3178, %v3479
      %v3538 = vadd.f32 %v3179, %v3484
      %v3539 = vadd.f32 %v3180, %v3487
      %v3540 = vadd.f32 %v3181, %v3492
      %v3541 = vadd.f32 %v3182, %v3495
      %v3542 = vadd.f32 %v3183, %v3500
      %v3543 = vadd.f32 %v3184, %v3503
      %v3544 = vadd.f32 %v3185, %v3508
      %v3545 = vadd.f32 %v3186, %v3511
      %v3546 = vld [vmem:[%s3187] sm:$0xf]
      %v3547 = vld [vmem:[%s3187 + $0x4] sm:$0xf]
      %v3548 = vld [vmem:[%s3187 + $0x8] sm:$0x1]
      %v3549 = vld [vmem:[%s3187 + $0xc] sm:$0xf]
      %v3550 = vld [vmem:[%s3187 + $0x10] sm:$0xf]
      %v3551 = vld [vmem:[%s3187 + $0x14] sm:$0x1]
      %v3552 = vld [vmem:[%s3187 + $0x18] sm:$0xf]
      %v3553 = vld [vmem:[%s3187 + $0x1c] sm:$0xf]
      %v3554 = vld [vmem:[%s3187 + $0x20] sm:$0x1]
      %v3555 = vld [vmem:[%s3187 + $0x24] sm:$0xf]
      %v3556 = vld [vmem:[%s3187 + $0x28] sm:$0xf]
      %v3557 = vld [vmem:[%s3187 + $0x2c] sm:$0x1]
      %v3558 = vld [vmem:[%s3187 + $0x30] sm:$0xf]
      %v3559 = vld [vmem:[%s3187 + $0x34] sm:$0xf]
      %v3560 = vld [vmem:[%s3187 + $0x38] sm:$0x1]
      %v3561 = vld [vmem:[%s3187 + $0x3c] sm:$0xf]
      %v3562 = vld [vmem:[%s3187 + $0x40] sm:$0xf]
      %v3563 = vld [vmem:[%s3187 + $0x44] sm:$0x1]
      %v3564 = vld [vmem:[%s3187 + $0x48] sm:$0xf]
      %v3565 = vld [vmem:[%s3187 + $0x4c] sm:$0xf]
      %v3566 = vld [vmem:[%s3187 + $0x50] sm:$0x1]
      %v3567 = vld [vmem:[%s3187 + $0x54] sm:$0xf]
      %v3568 = vld [vmem:[%s3187 + $0x58] sm:$0xf]
      %v3569 = vld [vmem:[%s3187 + $0x5c] sm:$0x1]
      %v3570 = vld [vmem:[%s3187 + $0x60] sm:$0xf]
      %v3571 = vld [vmem:[%s3187 + $0x64] sm:$0xf]
      %v3572 = vld [vmem:[%s3187 + $0x68] sm:$0x1]
      %v3573 = vld [vmem:[%s3187 + $0x6c] sm:$0xf]
      %v3574 = vld [vmem:[%s3187 + $0x70] sm:$0xf]
      %v3575 = vld [vmem:[%s3187 + $0x74] sm:$0x1]
      %v3576 = vld [vmem:[%s3187 + $0x78] sm:$0xf]
      %v3577 = vld [vmem:[%s3187 + $0x7c] sm:$0xf]
      %v3578 = vld [vmem:[%s3187 + $0x80] sm:$0x1]
      %v3579 = vld [vmem:[%s3187 + $0x84] sm:$0xf]
      %v3580 = vld [vmem:[%s3187 + $0x88] sm:$0xf]
      %v3581 = vld [vmem:[%s3187 + $0x8c] sm:$0x1]
      %v3582 = vld [vmem:[%s3187 + $0x90] sm:$0xf]
      %v3583 = vld [vmem:[%s3187 + $0x94] sm:$0xf]
      %v3584 = vld [vmem:[%s3187 + $0x98] sm:$0x1]
      %v3585 = vld [vmem:[%s3187 + $0x9c] sm:$0xf]
      %v3586 = vld [vmem:[%s3187 + $0xa0] sm:$0xf]
      %v3587 = vld [vmem:[%s3187 + $0xa4] sm:$0x1]
      %v3588 = vld [vmem:[%s3187 + $0xa8] sm:$0xf]
      %v3589 = vld [vmem:[%s3187 + $0xac] sm:$0xf]
      %v3590 = vld [vmem:[%s3187 + $0xb0] sm:$0x1]
      %v3591 = vld [vmem:[%s3187 + $0xb4] sm:$0xf]
      %v3592 = vld [vmem:[%s3187 + $0xb8] sm:$0xf]
      %v3593 = vld [vmem:[%s3187 + $0xbc] sm:$0x1]
      %v3595 = vshrl.u32 %v3546, 16
      %v3597 = vrot.slane %v3595, 4
      %v3598 = vshll.u32 %v3546, 16
      %v3600 = vrot.slane %v3598, 5
      %v3601 = vor.u32 %v3597, %v3600
      %v3602 = vrot.slane %v3601, 4
      %v3604 = vshll.u32 %v3547, 16
      %v3606 = vrot.slane %v3604, 5
      %v3607 = vsel %vm234, %v3602, %v3606
      %v3608 = vshrl.u32 %v3547, 16
      %v3610 = vrot.slane %v3608, 4
      %v3611 = vor.u32 %v3610, %v3606
      %v3612 = vrot.slane %v3611, 4
      %v3614 = vshll.u32 %v3548, 16
      %v3616 = vrot.slane %v3614, 5
      %v3617 = vsel %vm234, %v3612, %v3616
      %v3619 = vshrl.u32 %v3549, 16
      %v3621 = vrot.slane %v3619, 4
      %v3622 = vshll.u32 %v3549, 16
      %v3624 = vrot.slane %v3622, 5
      %v3625 = vor.u32 %v3621, %v3624
      %v3626 = vrot.slane %v3625, 4
      %v3628 = vshll.u32 %v3550, 16
      %v3630 = vrot.slane %v3628, 5
      %v3631 = vsel %vm234, %v3626, %v3630
      %v3632 = vshrl.u32 %v3550, 16
      %v3634 = vrot.slane %v3632, 4
      %v3635 = vor.u32 %v3634, %v3630
      %v3636 = vrot.slane %v3635, 4
      %v3638 = vshll.u32 %v3551, 16
      %v3640 = vrot.slane %v3638, 5
      %v3641 = vsel %vm234, %v3636, %v3640
      %v3643 = vshrl.u32 %v3552, 16
      %v3645 = vrot.slane %v3643, 4
      %v3646 = vshll.u32 %v3552, 16
      %v3648 = vrot.slane %v3646, 5
      %v3649 = vor.u32 %v3645, %v3648
      %v3650 = vrot.slane %v3649, 4
      %v3652 = vshll.u32 %v3553, 16
      %v3654 = vrot.slane %v3652, 5
      %v3655 = vsel %vm234, %v3650, %v3654
      %v3656 = vshrl.u32 %v3553, 16
      %v3658 = vrot.slane %v3656, 4
      %v3659 = vor.u32 %v3658, %v3654
      %v3660 = vrot.slane %v3659, 4
      %v3662 = vshll.u32 %v3554, 16
      %v3664 = vrot.slane %v3662, 5
      %v3665 = vsel %vm234, %v3660, %v3664
      %v3667 = vshrl.u32 %v3555, 16
      %v3669 = vrot.slane %v3667, 4
      %v3670 = vshll.u32 %v3555, 16
      %v3672 = vrot.slane %v3670, 5
      %v3673 = vor.u32 %v3669, %v3672
      %v3674 = vrot.slane %v3673, 4
      %v3676 = vshll.u32 %v3556, 16
      %v3678 = vrot.slane %v3676, 5
      %v3679 = vsel %vm234, %v3674, %v3678
      %v3680 = vshrl.u32 %v3556, 16
      %v3682 = vrot.slane %v3680, 4
      %v3683 = vor.u32 %v3682, %v3678
      %v3684 = vrot.slane %v3683, 4
      %v3686 = vshll.u32 %v3557, 16
      %v3688 = vrot.slane %v3686, 5
      %v3689 = vsel %vm234, %v3684, %v3688
      %v3691 = vshrl.u32 %v3558, 16
      %v3693 = vrot.slane %v3691, 4
      %v3694 = vshll.u32 %v3558, 16
      %v3696 = vrot.slane %v3694, 5
      %v3697 = vor.u32 %v3693, %v3696
      %v3698 = vrot.slane %v3697, 4
      %v3700 = vshll.u32 %v3559, 16
      %v3702 = vrot.slane %v3700, 5
      %v3703 = vsel %vm234, %v3698, %v3702
      %v3704 = vshrl.u32 %v3559, 16
      %v3706 = vrot.slane %v3704, 4
      %v3707 = vor.u32 %v3706, %v3702
      %v3708 = vrot.slane %v3707, 4
      %v3710 = vshll.u32 %v3560, 16
      %v3712 = vrot.slane %v3710, 5
      %v3713 = vsel %vm234, %v3708, %v3712
      %v3715 = vshrl.u32 %v3561, 16
      %v3717 = vrot.slane %v3715, 4
      %v3718 = vshll.u32 %v3561, 16
      %v3720 = vrot.slane %v3718, 5
      %v3721 = vor.u32 %v3717, %v3720
      %v3722 = vrot.slane %v3721, 4
      %v3724 = vshll.u32 %v3562, 16
      %v3726 = vrot.slane %v3724, 5
      %v3727 = vsel %vm234, %v3722, %v3726
      %v3728 = vshrl.u32 %v3562, 16
      %v3730 = vrot.slane %v3728, 4
      %v3731 = vor.u32 %v3730, %v3726
      %v3732 = vrot.slane %v3731, 4
      %v3734 = vshll.u32 %v3563, 16
      %v3736 = vrot.slane %v3734, 5
      %v3737 = vsel %vm234, %v3732, %v3736
      %v3739 = vshrl.u32 %v3564, 16
      %v3741 = vrot.slane %v3739, 4
      %v3742 = vshll.u32 %v3564, 16
      %v3744 = vrot.slane %v3742, 5
      %v3745 = vor.u32 %v3741, %v3744
      %v3746 = vrot.slane %v3745, 4
      %v3748 = vshll.u32 %v3565, 16
      %v3750 = vrot.slane %v3748, 5
      %v3751 = vsel %vm234, %v3746, %v3750
      %v3752 = vshrl.u32 %v3565, 16
      %v3754 = vrot.slane %v3752, 4
      %v3755 = vor.u32 %v3754, %v3750
      %v3756 = vrot.slane %v3755, 4
      %v3758 = vshll.u32 %v3566, 16
      %v3760 = vrot.slane %v3758, 5
      %v3761 = vsel %vm234, %v3756, %v3760
      %v3763 = vshrl.u32 %v3567, 16
      %v3765 = vrot.slane %v3763, 4
      %v3766 = vshll.u32 %v3567, 16
      %v3768 = vrot.slane %v3766, 5
      %v3769 = vor.u32 %v3765, %v3768
      %v3770 = vrot.slane %v3769, 4
      %v3772 = vshll.u32 %v3568, 16
      %v3774 = vrot.slane %v3772, 5
      %v3775 = vsel %vm234, %v3770, %v3774
      %v3776 = vshrl.u32 %v3568, 16
      %v3778 = vrot.slane %v3776, 4
      %v3779 = vor.u32 %v3778, %v3774
      %v3780 = vrot.slane %v3779, 4
      %v3782 = vshll.u32 %v3569, 16
      %v3784 = vrot.slane %v3782, 5
      %v3785 = vsel %vm234, %v3780, %v3784
      %v3787 = vshrl.u32 %v3570, 16
      %v3789 = vrot.slane %v3787, 4
      %v3790 = vshll.u32 %v3570, 16
      %v3792 = vrot.slane %v3790, 5
      %v3793 = vor.u32 %v3789, %v3792
      %v3794 = vrot.slane %v3793, 4
      %v3796 = vshll.u32 %v3571, 16
      %v3798 = vrot.slane %v3796, 5
      %v3799 = vsel %vm234, %v3794, %v3798
      %v3800 = vshrl.u32 %v3571, 16
      %v3802 = vrot.slane %v3800, 4
      %v3803 = vor.u32 %v3802, %v3798
      %v3804 = vrot.slane %v3803, 4
      %v3806 = vshll.u32 %v3572, 16
      %v3808 = vrot.slane %v3806, 5
      %v3809 = vsel %vm234, %v3804, %v3808
      %v3811 = vshrl.u32 %v3573, 16
      %v3813 = vrot.slane %v3811, 4
      %v3814 = vshll.u32 %v3573, 16
      %v3816 = vrot.slane %v3814, 5
      %v3817 = vor.u32 %v3813, %v3816
      %v3818 = vrot.slane %v3817, 4
      %v3820 = vshll.u32 %v3574, 16
      %v3822 = vrot.slane %v3820, 5
      %v3823 = vsel %vm234, %v3818, %v3822
      %v3824 = vshrl.u32 %v3574, 16
      %v3826 = vrot.slane %v3824, 4
      %v3827 = vor.u32 %v3826, %v3822
      %v3828 = vrot.slane %v3827, 4
      %v3830 = vshll.u32 %v3575, 16
      %v3832 = vrot.slane %v3830, 5
      %v3833 = vsel %vm234, %v3828, %v3832
      %v3835 = vshrl.u32 %v3576, 16
      %v3837 = vrot.slane %v3835, 4
      %v3838 = vshll.u32 %v3576, 16
      %v3840 = vrot.slane %v3838, 5
      %v3841 = vor.u32 %v3837, %v3840
      %v3842 = vrot.slane %v3841, 4
      %v3844 = vshll.u32 %v3577, 16
      %v3846 = vrot.slane %v3844, 5
      %v3847 = vsel %vm234, %v3842, %v3846
      %v3848 = vshrl.u32 %v3577, 16
      %v3850 = vrot.slane %v3848, 4
      %v3851 = vor.u32 %v3850, %v3846
      %v3852 = vrot.slane %v3851, 4
      %v3854 = vshll.u32 %v3578, 16
      %v3856 = vrot.slane %v3854, 5
      %v3857 = vsel %vm234, %v3852, %v3856
      %v3859 = vshrl.u32 %v3579, 16
      %v3861 = vrot.slane %v3859, 4
      %v3862 = vshll.u32 %v3579, 16
      %v3864 = vrot.slane %v3862, 5
      %v3865 = vor.u32 %v3861, %v3864
      %v3866 = vrot.slane %v3865, 4
      %v3868 = vshll.u32 %v3580, 16
      %v3870 = vrot.slane %v3868, 5
      %v3871 = vsel %vm234, %v3866, %v3870
      %v3872 = vshrl.u32 %v3580, 16
      %v3874 = vrot.slane %v3872, 4
      %v3875 = vor.u32 %v3874, %v3870
      %v3876 = vrot.slane %v3875, 4
      %v3878 = vshll.u32 %v3581, 16
      %v3880 = vrot.slane %v3878, 5
      %v3881 = vsel %vm234, %v3876, %v3880
      %v3883 = vshrl.u32 %v3582, 16
      %v3885 = vrot.slane %v3883, 4
      %v3886 = vshll.u32 %v3582, 16
      %v3888 = vrot.slane %v3886, 5
      %v3889 = vor.u32 %v3885, %v3888
      %v3890 = vrot.slane %v3889, 4
      %v3892 = vshll.u32 %v3583, 16
      %v3894 = vrot.slane %v3892, 5
      %v3895 = vsel %vm234, %v3890, %v3894
      %v3896 = vshrl.u32 %v3583, 16
      %v3898 = vrot.slane %v3896, 4
      %v3899 = vor.u32 %v3898, %v3894
      %v3900 = vrot.slane %v3899, 4
      %v3902 = vshll.u32 %v3584, 16
      %v3904 = vrot.slane %v3902, 5
      %v3905 = vsel %vm234, %v3900, %v3904
      %v3907 = vshrl.u32 %v3585, 16
      %v3909 = vrot.slane %v3907, 4
      %v3910 = vshll.u32 %v3585, 16
      %v3912 = vrot.slane %v3910, 5
      %v3913 = vor.u32 %v3909, %v3912
      %v3914 = vrot.slane %v3913, 4
      %v3916 = vshll.u32 %v3586, 16
      %v3918 = vrot.slane %v3916, 5
      %v3919 = vsel %vm234, %v3914, %v3918
      %v3920 = vshrl.u32 %v3586, 16
      %v3922 = vrot.slane %v3920, 4
      %v3923 = vor.u32 %v3922, %v3918
      %v3924 = vrot.slane %v3923, 4
      %v3926 = vshll.u32 %v3587, 16
      %v3928 = vrot.slane %v3926, 5
      %v3929 = vsel %vm234, %v3924, %v3928
      %v3931 = vshrl.u32 %v3588, 16
      %v3933 = vrot.slane %v3931, 4
      %v3934 = vshll.u32 %v3588, 16
      %v3936 = vrot.slane %v3934, 5
      %v3937 = vor.u32 %v3933, %v3936
      %v3938 = vrot.slane %v3937, 4
      %v3940 = vshll.u32 %v3589, 16
      %v3942 = vrot.slane %v3940, 5
      %v3943 = vsel %vm234, %v3938, %v3942
      %v3944 = vshrl.u32 %v3589, 16
      %v3946 = vrot.slane %v3944, 4
      %v3947 = vor.u32 %v3946, %v3942
      %v3948 = vrot.slane %v3947, 4
      %v3950 = vshll.u32 %v3590, 16
      %v3952 = vrot.slane %v3950, 5
      %v3953 = vsel %vm234, %v3948, %v3952
      %v3955 = vshrl.u32 %v3591, 16
      %v3957 = vrot.slane %v3955, 4
      %v3958 = vshll.u32 %v3591, 16
      %v3960 = vrot.slane %v3958, 5
      %v3961 = vor.u32 %v3957, %v3960
      %v3962 = vrot.slane %v3961, 4
      %v3964 = vshll.u32 %v3592, 16
      %v3966 = vrot.slane %v3964, 5
      %v3967 = vsel %vm234, %v3962, %v3966
      %v3968 = vshrl.u32 %v3592, 16
      %v3970 = vrot.slane %v3968, 4
      %v3971 = vor.u32 %v3970, %v3966
      %v3972 = vrot.slane %v3971, 4
      %v3974 = vshll.u32 %v3593, 16
      %v3976 = vrot.slane %v3974, 5
      %v3977 = vsel %vm234, %v3972, %v3976
      %s3978 = scalar_lea.vmem %s1, 14
      %v3979 = vld [vmem:[%s3978] sm:$0x3]
      %v3980 = vunpack.c.l.b16 %v3607
      %v3981 = vunpack.c.l.b16 %v3617
      %v3982 = vunpack.c.l.b16 %v3631
      %v3983 = vunpack.c.l.b16 %v3641
      %v3984 = vunpack.c.l.b16 %v3655
      %v3985 = vunpack.c.l.b16 %v3665
      %v3986 = vunpack.c.l.b16 %v3679
      %v3987 = vunpack.c.l.b16 %v3689
      %v3988 = vunpack.c.l.b16 %v3703
      %v3989 = vunpack.c.l.b16 %v3713
      %v3990 = vunpack.c.l.b16 %v3727
      %v3991 = vunpack.c.l.b16 %v3737
      %v3992 = vunpack.c.l.b16 %v3751
      %v3993 = vunpack.c.l.b16 %v3761
      %v3994 = vunpack.c.l.b16 %v3775
      %v3995 = vunpack.c.l.b16 %v3785
      %v3996 = vunpack.c.l.b16 %v3799
      %v3997 = vunpack.c.l.b16 %v3809
      %v3998 = vunpack.c.l.b16 %v3823
      %v3999 = vunpack.c.l.b16 %v3833
      %v4000 = vunpack.c.l.b16 %v3847
      %v4001 = vunpack.c.l.b16 %v3857
      %v4002 = vunpack.c.l.b16 %v3871
      %v4003 = vunpack.c.l.b16 %v3881
      %v4004 = vunpack.c.l.b16 %v3895
      %v4005 = vunpack.c.l.b16 %v3905
      %v4006 = vunpack.c.l.b16 %v3919
      %v4007 = vunpack.c.l.b16 %v3929
      %v4008 = vunpack.c.l.b16 %v3943
      %v4009 = vunpack.c.l.b16 %v3953
      %v4010 = vunpack.c.l.b16 %v3967
      %v4011 = vunpack.c.l.b16 %v3977
      %v4012 = vpack.c.b16 %v3981, %v3980
      %v4013 = vpack.c.b16 %v3983, %v3982
      %v4014 = vpack.c.b16 %v3985, %v3984
      %v4015 = vpack.c.b16 %v3987, %v3986
      %v4016 = vpack.c.b16 %v3989, %v3988
      %v4017 = vpack.c.b16 %v3991, %v3990
      %v4018 = vpack.c.b16 %v3993, %v3992
      %v4019 = vpack.c.b16 %v3995, %v3994
      %v4020 = vpack.c.b16 %v3997, %v3996
      %v4021 = vpack.c.b16 %v3999, %v3998
      %v4022 = vpack.c.b16 %v4001, %v4000
      %v4023 = vpack.c.b16 %v4003, %v4002
      %v4024 = vpack.c.b16 %v4005, %v4004
      %v4025 = vpack.c.b16 %v4007, %v4006
      %v4026 = vpack.c.b16 %v4009, %v4008
      %v4027 = vpack.c.b16 %v4011, %v4010
      %v4029 = vsel %vm669, %v4012, 0
      %v4032 = vsel %vm669, %v4013, 0
      %v4035 = vsel %vm669, %v4014, 0
      %v4038 = vsel %vm669, %v4015, 0
      %v4041 = vsel %vm669, %v4016, 0
      %v4044 = vsel %vm669, %v4017, 0
      %v4047 = vsel %vm669, %v4018, 0
      %v4050 = vsel %vm669, %v4019, 0
      %v4053 = vsel %vm669, %v4020, 0
      %v4056 = vsel %vm669, %v4021, 0
      %v4059 = vsel %vm669, %v4022, 0
      %v4062 = vsel %vm669, %v4023, 0
      %v4065 = vsel %vm669, %v4024, 0
      %v4068 = vsel %vm669, %v4025, 0
      %v4071 = vsel %vm669, %v4026, 0
      %v4074 = vsel %vm669, %v4027, 0
      %v4077 = vsel %vm718, %v3979, 0
      %4079 = vmatprep.subr.bf16.mxu0 0
      %4080 = vmatpush1.bf16.msra.mxu0 0
      %4081 = vmatprep.subr.bf16.mxu0 0
      %4082 = vmatpush1.bf16.msra.mxu0 0
      %4083 = vmatprep.subr.bf16.mxu0 0
      %4084 = vmatpush1.bf16.msra.mxu0 0
      %4085 = vmatprep.subr.bf16.mxu0 0
      %4086 = vmatpush1.bf16.msra.mxu0 0
      %4087 = vmatprep.subr.bf16.mxu0 0
      %4088 = vmatpush1.bf16.msra.mxu0 0
      %4089 = vmatprep.subr.bf16.mxu0 0
      %4090 = vmatpush1.bf16.msra.mxu0 0
      %4091 = vmatprep.subr.bf16.mxu0 0
      %4092 = vmatpush1.bf16.msra.mxu0 0
      %4093 = vmatprep.subr.bf16.mxu0 0
      %4094 = vmatpush1.bf16.msra.mxu0 %v4077
      %4095 = vmatprep.subr.bf16.mxu0 0
      %4096 = vmatpush2.bf16.msra.mxu0 0
      %4097 = vmatprep.subr.bf16.mxu0 0
      %4098 = vmatpush2.bf16.msra.mxu0 0
      %4099 = vmatprep.subr.bf16.mxu0 0
      %4100 = vmatpush2.bf16.msra.mxu0 0
      %4101 = vmatprep.subr.bf16.mxu0 0
      %4102 = vmatpush2.bf16.msra.mxu0 0
      %4103 = vmatprep.subr.bf16.mxu0 0
      %4104 = vmatpush2.bf16.msra.mxu0 0
      %4105 = vmatprep.subr.bf16.mxu0 0
      %4106 = vmatpush2.bf16.msra.mxu0 0
      %4107 = vmatprep.subr.bf16.mxu0 0
      %4108 = vmatpush2.bf16.msra.mxu0 0
      %4109 = vmatprep.subr.bf16.mxu0 0
      %4110 = vmatpush2.bf16.msra.mxu0 0
      %4111 = vmatprep.mubr.bf16.mxu0 0
      %4112 = vmatmul.mubr.bf16.gmra.mxu0 %v4029
      %v4113 = vpop.f32.mrf.mxu0
      %v4114 = vadd.f32 0.0, %v4113
      %v4115 = vpop.f32.mrf.mxu0
      %v4116 = vpop.f32.mrf.mxu0
      %v4117 = vadd.f32 0.0, %v4116
      %v4118 = vpop.f32.mrf.mxu0
      %4119 = vmatprep.mubr.bf16.mxu0 0
      %4120 = vmatmul.mubr.bf16.gmra.mxu0 %v4032
      %v4121 = vpop.f32.mrf.mxu0
      %v4122 = vadd.f32 0.0, %v4121
      %v4123 = vpop.f32.mrf.mxu0
      %v4124 = vpop.f32.mrf.mxu0
      %v4125 = vadd.f32 0.0, %v4124
      %v4126 = vpop.f32.mrf.mxu0
      %4127 = vmatprep.mubr.bf16.mxu0 0
      %4128 = vmatmul.mubr.bf16.gmra.mxu0 %v4035
      %v4129 = vpop.f32.mrf.mxu0
      %v4130 = vadd.f32 0.0, %v4129
      %v4131 = vpop.f32.mrf.mxu0
      %v4132 = vpop.f32.mrf.mxu0
      %v4133 = vadd.f32 0.0, %v4132
      %v4134 = vpop.f32.mrf.mxu0
      %4135 = vmatprep.mubr.bf16.mxu0 0
      %4136 = vmatmul.mubr.bf16.gmra.mxu0 %v4038
      %v4137 = vpop.f32.mrf.mxu0
      %v4138 = vadd.f32 0.0, %v4137
      %v4139 = vpop.f32.mrf.mxu0
      %v4140 = vpop.f32.mrf.mxu0
      %v4141 = vadd.f32 0.0, %v4140
      %v4142 = vpop.f32.mrf.mxu0
      %4143 = vmatprep.mubr.bf16.mxu0 0
      %4144 = vmatmul.mubr.bf16.gmra.mxu0 %v4041
      %v4145 = vpop.f32.mrf.mxu0
      %v4146 = vadd.f32 0.0, %v4145
      %v4147 = vpop.f32.mrf.mxu0
      %v4148 = vpop.f32.mrf.mxu0
      %v4149 = vadd.f32 0.0, %v4148
      %v4150 = vpop.f32.mrf.mxu0
      %4151 = vmatprep.mubr.bf16.mxu0 0
      %4152 = vmatmul.mubr.bf16.gmra.mxu0 %v4044
      %v4153 = vpop.f32.mrf.mxu0
      %v4154 = vadd.f32 0.0, %v4153
      %v4155 = vpop.f32.mrf.mxu0
      %v4156 = vpop.f32.mrf.mxu0
      %v4157 = vadd.f32 0.0, %v4156
      %v4158 = vpop.f32.mrf.mxu0
      %4159 = vmatprep.mubr.bf16.mxu0 0
      %4160 = vmatmul.mubr.bf16.gmra.mxu0 %v4047
      %v4161 = vpop.f32.mrf.mxu0
      %v4162 = vadd.f32 0.0, %v4161
      %v4163 = vpop.f32.mrf.mxu0
      %v4164 = vpop.f32.mrf.mxu0
      %v4165 = vadd.f32 0.0, %v4164
      %v4166 = vpop.f32.mrf.mxu0
      %4167 = vmatprep.mubr.bf16.mxu0 0
      %4168 = vmatmul.mubr.bf16.gmra.mxu0 %v4050
      %v4169 = vpop.f32.mrf.mxu0
      %v4170 = vadd.f32 0.0, %v4169
      %v4171 = vpop.f32.mrf.mxu0
      %v4172 = vpop.f32.mrf.mxu0
      %v4173 = vadd.f32 0.0, %v4172
      %v4174 = vpop.f32.mrf.mxu0
      %4175 = vmatprep.mubr.bf16.mxu0 0
      %4176 = vmatmul.mubr.bf16.gmra.mxu0 %v4053
      %v4177 = vpop.f32.mrf.mxu0
      %v4178 = vadd.f32 0.0, %v4177
      %v4179 = vpop.f32.mrf.mxu0
      %v4180 = vpop.f32.mrf.mxu0
      %v4181 = vadd.f32 0.0, %v4180
      %v4182 = vpop.f32.mrf.mxu0
      %4183 = vmatprep.mubr.bf16.mxu0 0
      %4184 = vmatmul.mubr.bf16.gmra.mxu0 %v4056
      %v4185 = vpop.f32.mrf.mxu0
      %v4186 = vadd.f32 0.0, %v4185
      %v4187 = vpop.f32.mrf.mxu0
      %v4188 = vpop.f32.mrf.mxu0
      %v4189 = vadd.f32 0.0, %v4188
      %v4190 = vpop.f32.mrf.mxu0
      %4191 = vmatprep.mubr.bf16.mxu0 0
      %4192 = vmatmul.mubr.bf16.gmra.mxu0 %v4059
      %v4193 = vpop.f32.mrf.mxu0
      %v4194 = vadd.f32 0.0, %v4193
      %v4195 = vpop.f32.mrf.mxu0
      %v4196 = vpop.f32.mrf.mxu0
      %v4197 = vadd.f32 0.0, %v4196
      %v4198 = vpop.f32.mrf.mxu0
      %4199 = vmatprep.mubr.bf16.mxu0 0
      %4200 = vmatmul.mubr.bf16.gmra.mxu0 %v4062
      %v4201 = vpop.f32.mrf.mxu0
      %v4202 = vadd.f32 0.0, %v4201
      %v4203 = vpop.f32.mrf.mxu0
      %v4204 = vpop.f32.mrf.mxu0
      %v4205 = vadd.f32 0.0, %v4204
      %v4206 = vpop.f32.mrf.mxu0
      %4207 = vmatprep.mubr.bf16.mxu0 0
      %4208 = vmatmul.mubr.bf16.gmra.mxu0 %v4065
      %v4209 = vpop.f32.mrf.mxu0
      %v4210 = vadd.f32 0.0, %v4209
      %v4211 = vpop.f32.mrf.mxu0
      %v4212 = vpop.f32.mrf.mxu0
      %v4213 = vadd.f32 0.0, %v4212
      %v4214 = vpop.f32.mrf.mxu0
      %4215 = vmatprep.mubr.bf16.mxu0 0
      %4216 = vmatmul.mubr.bf16.gmra.mxu0 %v4068
      %v4217 = vpop.f32.mrf.mxu0
      %v4218 = vadd.f32 0.0, %v4217
      %v4219 = vpop.f32.mrf.mxu0
      %v4220 = vpop.f32.mrf.mxu0
      %v4221 = vadd.f32 0.0, %v4220
      %v4222 = vpop.f32.mrf.mxu0
      %4223 = vmatprep.mubr.bf16.mxu0 0
      %4224 = vmatmul.mubr.bf16.gmra.mxu0 %v4071
      %v4225 = vpop.f32.mrf.mxu0
      %v4226 = vadd.f32 0.0, %v4225
      %v4227 = vpop.f32.mrf.mxu0
      %v4228 = vpop.f32.mrf.mxu0
      %v4229 = vadd.f32 0.0, %v4228
      %v4230 = vpop.f32.mrf.mxu0
      %4231 = vmatprep.mubr.bf16.mxu0 0
      %4232 = vmatmul.mubr.bf16.gmra.mxu0 %v4074
      %v4233 = vpop.f32.mrf.mxu0
      %v4234 = vadd.f32 0.0, %v4233
      %v4235 = vpop.f32.mrf.mxu0
      %v4236 = vpop.f32.mrf.mxu0
      %v4237 = vadd.f32 0.0, %v4236
      %v4238 = vpop.f32.mrf.mxu0
      %4239 = vdwg.mxu0
      %v4240 = vadd.f32 %v3514, %v4114
      %v4241 = vadd.f32 %v3515, %v4117
      %v4242 = vadd.f32 %v3516, %v4122
      %v4243 = vadd.f32 %v3517, %v4125
      %v4244 = vadd.f32 %v3518, %v4130
      %v4245 = vadd.f32 %v3519, %v4133
      %v4246 = vadd.f32 %v3520, %v4138
      %v4247 = vadd.f32 %v3521, %v4141
      %v4248 = vadd.f32 %v3522, %v4146
      %v4249 = vadd.f32 %v3523, %v4149
      %v4250 = vadd.f32 %v3524, %v4154
      %v4251 = vadd.f32 %v3525, %v4157
      %v4252 = vadd.f32 %v3526, %v4162
      %v4253 = vadd.f32 %v3527, %v4165
      %v4254 = vadd.f32 %v3528, %v4170
      %v4255 = vadd.f32 %v3529, %v4173
      %v4256 = vadd.f32 %v3530, %v4178
      %v4257 = vadd.f32 %v3531, %v4181
      %v4258 = vadd.f32 %v3532, %v4186
      %v4259 = vadd.f32 %v3533, %v4189
      %v4260 = vadd.f32 %v3534, %v4194
      %v4261 = vadd.f32 %v3535, %v4197
      %v4262 = vadd.f32 %v3536, %v4202
      %v4263 = vadd.f32 %v3537, %v4205
      %v4264 = vadd.f32 %v3538, %v4210
      %v4265 = vadd.f32 %v3539, %v4213
      %v4266 = vadd.f32 %v3540, %v4218
      %v4267 = vadd.f32 %v3541, %v4221
      %v4268 = vadd.f32 %v3542, %v4226
      %v4269 = vadd.f32 %v3543, %v4229
      %v4270 = vadd.f32 %v3544, %v4234
      %v4271 = vadd.f32 %v3545, %v4237
      %v4272 = vld [vmem:[%s3187] sm:$0xe]
      %v4273 = vld [vmem:[%s3187 + $0xc] sm:$0xe]
      %v4274 = vld [vmem:[%s3187 + $0x18] sm:$0xe]
      %v4275 = vld [vmem:[%s3187 + $0x24] sm:$0xe]
      %v4276 = vld [vmem:[%s3187 + $0x30] sm:$0xe]
      %v4277 = vld [vmem:[%s3187 + $0x3c] sm:$0xe]
      %v4278 = vld [vmem:[%s3187 + $0x48] sm:$0xe]
      %v4279 = vld [vmem:[%s3187 + $0x54] sm:$0xe]
      %v4280 = vld [vmem:[%s3187 + $0x60] sm:$0xe]
      %v4281 = vld [vmem:[%s3187 + $0x6c] sm:$0xe]
      %v4282 = vld [vmem:[%s3187 + $0x78] sm:$0xe]
      %v4283 = vld [vmem:[%s3187 + $0x84] sm:$0xe]
      %v4284 = vld [vmem:[%s3187 + $0x90] sm:$0xe]
      %v4285 = vld [vmem:[%s3187 + $0x9c] sm:$0xe]
      %v4286 = vld [vmem:[%s3187 + $0xa8] sm:$0xe]
      %v4287 = vld [vmem:[%s3187 + $0xb4] sm:$0xe]
      %v4336 = vrot.slane %v4272, 5
      %v4337 = vrot.slane %v4336, 4
      %v4338 = vrot.slane %v3547, 5
      %v4339 = vsel %vm1225, %v4337, %v4338
      %v4340 = vrot.slane %v4338, 4
      %v4341 = vrot.slane %v3548, 5
      %v4342 = vsel %vm1225, %v4340, %v4341
      %v4343 = vrot.slane %v4273, 5
      %v4344 = vrot.slane %v4343, 4
      %v4345 = vrot.slane %v3550, 5
      %v4346 = vsel %vm1225, %v4344, %v4345
      %v4347 = vrot.slane %v4345, 4
      %v4348 = vrot.slane %v3551, 5
      %v4349 = vsel %vm1225, %v4347, %v4348
      %v4350 = vrot.slane %v4274, 5
      %v4351 = vrot.slane %v4350, 4
      %v4352 = vrot.slane %v3553, 5
      %v4353 = vsel %vm1225, %v4351, %v4352
      %v4354 = vrot.slane %v4352, 4
      %v4355 = vrot.slane %v3554, 5
      %v4356 = vsel %vm1225, %v4354, %v4355
      %v4357 = vrot.slane %v4275, 5
      %v4358 = vrot.slane %v4357, 4
      %v4359 = vrot.slane %v3556, 5
      %v4360 = vsel %vm1225, %v4358, %v4359
      %v4361 = vrot.slane %v4359, 4
      %v4362 = vrot.slane %v3557, 5
      %v4363 = vsel %vm1225, %v4361, %v4362
      %v4364 = vrot.slane %v4276, 5
      %v4365 = vrot.slane %v4364, 4
      %v4366 = vrot.slane %v3559, 5
      %v4367 = vsel %vm1225, %v4365, %v4366
      %v4368 = vrot.slane %v4366, 4
      %v4369 = vrot.slane %v3560, 5
      %v4370 = vsel %vm1225, %v4368, %v4369
      %v4371 = vrot.slane %v4277, 5
      %v4372 = vrot.slane %v4371, 4
      %v4373 = vrot.slane %v3562, 5
      %v4374 = vsel %vm1225, %v4372, %v4373
      %v4375 = vrot.slane %v4373, 4
      %v4376 = vrot.slane %v3563, 5
      %v4377 = vsel %vm1225, %v4375, %v4376
      %v4378 = vrot.slane %v4278, 5
      %v4379 = vrot.slane %v4378, 4
      %v4380 = vrot.slane %v3565, 5
      %v4381 = vsel %vm1225, %v4379, %v4380
      %v4382 = vrot.slane %v4380, 4
      %v4383 = vrot.slane %v3566, 5
      %v4384 = vsel %vm1225, %v4382, %v4383
      %v4385 = vrot.slane %v4279, 5
      %v4386 = vrot.slane %v4385, 4
      %v4387 = vrot.slane %v3568, 5
      %v4388 = vsel %vm1225, %v4386, %v4387
      %v4389 = vrot.slane %v4387, 4
      %v4390 = vrot.slane %v3569, 5
      %v4391 = vsel %vm1225, %v4389, %v4390
      %v4392 = vrot.slane %v4280, 5
      %v4393 = vrot.slane %v4392, 4
      %v4394 = vrot.slane %v3571, 5
      %v4395 = vsel %vm1225, %v4393, %v4394
      %v4396 = vrot.slane %v4394, 4
      %v4397 = vrot.slane %v3572, 5
      %v4398 = vsel %vm1225, %v4396, %v4397
      %v4399 = vrot.slane %v4281, 5
      %v4400 = vrot.slane %v4399, 4
      %v4401 = vrot.slane %v3574, 5
      %v4402 = vsel %vm1225, %v4400, %v4401
      %v4403 = vrot.slane %v4401, 4
      %v4404 = vrot.slane %v3575, 5
      %v4405 = vsel %vm1225, %v4403, %v4404
      %v4406 = vrot.slane %v4282, 5
      %v4407 = vrot.slane %v4406, 4
      %v4408 = vrot.slane %v3577, 5
      %v4409 = vsel %vm1225, %v4407, %v4408
      %v4410 = vrot.slane %v4408, 4
      %v4411 = vrot.slane %v3578, 5
      %v4412 = vsel %vm1225, %v4410, %v4411
      %v4413 = vrot.slane %v4283, 5
      %v4414 = vrot.slane %v4413, 4
      %v4415 = vrot.slane %v3580, 5
      %v4416 = vsel %vm1225, %v4414, %v4415
      %v4417 = vrot.slane %v4415, 4
      %v4418 = vrot.slane %v3581, 5
      %v4419 = vsel %vm1225, %v4417, %v4418
      %v4420 = vrot.slane %v4284, 5
      %v4421 = vrot.slane %v4420, 4
      %v4422 = vrot.slane %v3583, 5
      %v4423 = vsel %vm1225, %v4421, %v4422
      %v4424 = vrot.slane %v4422, 4
      %v4425 = vrot.slane %v3584, 5
      %v4426 = vsel %vm1225, %v4424, %v4425
      %v4427 = vrot.slane %v4285, 5
      %v4428 = vrot.slane %v4427, 4
      %v4429 = vrot.slane %v3586, 5
      %v4430 = vsel %vm1225, %v4428, %v4429
      %v4431 = vrot.slane %v4429, 4
      %v4432 = vrot.slane %v3587, 5
      %v4433 = vsel %vm1225, %v4431, %v4432
      %v4434 = vrot.slane %v4286, 5
      %v4435 = vrot.slane %v4434, 4
      %v4436 = vrot.slane %v3589, 5
      %v4437 = vsel %vm1225, %v4435, %v4436
      %v4438 = vrot.slane %v4436, 4
      %v4439 = vrot.slane %v3590, 5
      %v4440 = vsel %vm1225, %v4438, %v4439
      %v4441 = vrot.slane %v4287, 5
      %v4442 = vrot.slane %v4441, 4
      %v4443 = vrot.slane %v3592, 5
      %v4444 = vsel %vm1225, %v4442, %v4443
      %v4445 = vrot.slane %v4443, 4
      %v4446 = vrot.slane %v3593, 5
      %v4447 = vsel %vm1225, %v4445, %v4446
      %s4448 = scalar_lea.vmem %s1, 16
      %v4449 = vld [vmem:[%s4448] sm:$0x3]
      %v4450 = vunpack.c.l.b16 %v4339
      %v4451 = vunpack.c.l.b16 %v4342
      %v4452 = vunpack.c.l.b16 %v4346
      %v4453 = vunpack.c.l.b16 %v4349
      %v4454 = vunpack.c.l.b16 %v4353
      %v4455 = vunpack.c.l.b16 %v4356
      %v4456 = vunpack.c.l.b16 %v4360
      %v4457 = vunpack.c.l.b16 %v4363
      %v4458 = vunpack.c.l.b16 %v4367
      %v4459 = vunpack.c.l.b16 %v4370
      %v4460 = vunpack.c.l.b16 %v4374
      %v4461 = vunpack.c.l.b16 %v4377
      %v4462 = vunpack.c.l.b16 %v4381
      %v4463 = vunpack.c.l.b16 %v4384
      %v4464 = vunpack.c.l.b16 %v4388
      %v4465 = vunpack.c.l.b16 %v4391
      %v4466 = vunpack.c.l.b16 %v4395
      %v4467 = vunpack.c.l.b16 %v4398
      %v4468 = vunpack.c.l.b16 %v4402
      %v4469 = vunpack.c.l.b16 %v4405
      %v4470 = vunpack.c.l.b16 %v4409
      %v4471 = vunpack.c.l.b16 %v4412
      %v4472 = vunpack.c.l.b16 %v4416
      %v4473 = vunpack.c.l.b16 %v4419
      %v4474 = vunpack.c.l.b16 %v4423
      %v4475 = vunpack.c.l.b16 %v4426
      %v4476 = vunpack.c.l.b16 %v4430
      %v4477 = vunpack.c.l.b16 %v4433
      %v4478 = vunpack.c.l.b16 %v4437
      %v4479 = vunpack.c.l.b16 %v4440
      %v4480 = vunpack.c.l.b16 %v4444
      %v4481 = vunpack.c.l.b16 %v4447
      %v4482 = vpack.c.b16 %v4451, %v4450
      %v4483 = vpack.c.b16 %v4453, %v4452
      %v4484 = vpack.c.b16 %v4455, %v4454
      %v4485 = vpack.c.b16 %v4457, %v4456
      %v4486 = vpack.c.b16 %v4459, %v4458
      %v4487 = vpack.c.b16 %v4461, %v4460
      %v4488 = vpack.c.b16 %v4463, %v4462
      %v4489 = vpack.c.b16 %v4465, %v4464
      %v4490 = vpack.c.b16 %v4467, %v4466
      %v4491 = vpack.c.b16 %v4469, %v4468
      %v4492 = vpack.c.b16 %v4471, %v4470
      %v4493 = vpack.c.b16 %v4473, %v4472
      %v4494 = vpack.c.b16 %v4475, %v4474
      %v4495 = vpack.c.b16 %v4477, %v4476
      %v4496 = vpack.c.b16 %v4479, %v4478
      %v4497 = vpack.c.b16 %v4481, %v4480
      %v4499 = vsel %vm669, %v4482, 0
      %v4502 = vsel %vm669, %v4483, 0
      %v4505 = vsel %vm669, %v4484, 0
      %v4508 = vsel %vm669, %v4485, 0
      %v4511 = vsel %vm669, %v4486, 0
      %v4514 = vsel %vm669, %v4487, 0
      %v4517 = vsel %vm669, %v4488, 0
      %v4520 = vsel %vm669, %v4489, 0
      %v4523 = vsel %vm669, %v4490, 0
      %v4526 = vsel %vm669, %v4491, 0
      %v4529 = vsel %vm669, %v4492, 0
      %v4532 = vsel %vm669, %v4493, 0
      %v4535 = vsel %vm669, %v4494, 0
      %v4538 = vsel %vm669, %v4495, 0
      %v4541 = vsel %vm669, %v4496, 0
      %v4544 = vsel %vm669, %v4497, 0
      %v4547 = vsel %vm718, %v4449, 0
      %4549 = vmatprep.subr.bf16.mxu0 0
      %4550 = vmatpush1.bf16.msra.mxu0 0
      %4551 = vmatprep.subr.bf16.mxu0 0
      %4552 = vmatpush1.bf16.msra.mxu0 0
      %4553 = vmatprep.subr.bf16.mxu0 0
      %4554 = vmatpush1.bf16.msra.mxu0 0
      %4555 = vmatprep.subr.bf16.mxu0 0
      %4556 = vmatpush1.bf16.msra.mxu0 0
      %4557 = vmatprep.subr.bf16.mxu0 0
      %4558 = vmatpush1.bf16.msra.mxu0 0
      %4559 = vmatprep.subr.bf16.mxu0 0
      %4560 = vmatpush1.bf16.msra.mxu0 0
      %4561 = vmatprep.subr.bf16.mxu0 0
      %4562 = vmatpush1.bf16.msra.mxu0 0
      %4563 = vmatprep.subr.bf16.mxu0 0
      %4564 = vmatpush1.bf16.msra.mxu0 %v4547
      %4565 = vmatprep.subr.bf16.mxu0 0
      %4566 = vmatpush2.bf16.msra.mxu0 0
      %4567 = vmatprep.subr.bf16.mxu0 0
      %4568 = vmatpush2.bf16.msra.mxu0 0
      %4569 = vmatprep.subr.bf16.mxu0 0
      %4570 = vmatpush2.bf16.msra.mxu0 0
      %4571 = vmatprep.subr.bf16.mxu0 0
      %4572 = vmatpush2.bf16.msra.mxu0 0
      %4573 = vmatprep.subr.bf16.mxu0 0
      %4574 = vmatpush2.bf16.msra.mxu0 0
      %4575 = vmatprep.subr.bf16.mxu0 0
      %4576 = vmatpush2.bf16.msra.mxu0 0
      %4577 = vmatprep.subr.bf16.mxu0 0
      %4578 = vmatpush2.bf16.msra.mxu0 0
      %4579 = vmatprep.subr.bf16.mxu0 0
      %4580 = vmatpush2.bf16.msra.mxu0 0
      %4581 = vmatprep.mubr.bf16.mxu0 0
      %4582 = vmatmul.mubr.bf16.gmra.mxu0 %v4499
      %v4583 = vpop.f32.mrf.mxu0
      %v4584 = vadd.f32 0.0, %v4583
      %v4585 = vpop.f32.mrf.mxu0
      %v4586 = vpop.f32.mrf.mxu0
      %v4587 = vadd.f32 0.0, %v4586
      %v4588 = vpop.f32.mrf.mxu0
      %4589 = vmatprep.mubr.bf16.mxu0 0
      %4590 = vmatmul.mubr.bf16.gmra.mxu0 %v4502
      %v4591 = vpop.f32.mrf.mxu0
      %v4592 = vadd.f32 0.0, %v4591
      %v4593 = vpop.f32.mrf.mxu0
      %v4594 = vpop.f32.mrf.mxu0
      %v4595 = vadd.f32 0.0, %v4594
      %v4596 = vpop.f32.mrf.mxu0
      %4597 = vmatprep.mubr.bf16.mxu0 0
      %4598 = vmatmul.mubr.bf16.gmra.mxu0 %v4505
      %v4599 = vpop.f32.mrf.mxu0
      %v4600 = vadd.f32 0.0, %v4599
      %v4601 = vpop.f32.mrf.mxu0
      %v4602 = vpop.f32.mrf.mxu0
      %v4603 = vadd.f32 0.0, %v4602
      %v4604 = vpop.f32.mrf.mxu0
      %4605 = vmatprep.mubr.bf16.mxu0 0
      %4606 = vmatmul.mubr.bf16.gmra.mxu0 %v4508
      %v4607 = vpop.f32.mrf.mxu0
      %v4608 = vadd.f32 0.0, %v4607
      %v4609 = vpop.f32.mrf.mxu0
      %v4610 = vpop.f32.mrf.mxu0
      %v4611 = vadd.f32 0.0, %v4610
      %v4612 = vpop.f32.mrf.mxu0
      %4613 = vmatprep.mubr.bf16.mxu0 0
      %4614 = vmatmul.mubr.bf16.gmra.mxu0 %v4511
      %v4615 = vpop.f32.mrf.mxu0
      %v4616 = vadd.f32 0.0, %v4615
      %v4617 = vpop.f32.mrf.mxu0
      %v4618 = vpop.f32.mrf.mxu0
      %v4619 = vadd.f32 0.0, %v4618
      %v4620 = vpop.f32.mrf.mxu0
      %4621 = vmatprep.mubr.bf16.mxu0 0
      %4622 = vmatmul.mubr.bf16.gmra.mxu0 %v4514
      %v4623 = vpop.f32.mrf.mxu0
      %v4624 = vadd.f32 0.0, %v4623
      %v4625 = vpop.f32.mrf.mxu0
      %v4626 = vpop.f32.mrf.mxu0
      %v4627 = vadd.f32 0.0, %v4626
      %v4628 = vpop.f32.mrf.mxu0
      %4629 = vmatprep.mubr.bf16.mxu0 0
      %4630 = vmatmul.mubr.bf16.gmra.mxu0 %v4517
      %v4631 = vpop.f32.mrf.mxu0
      %v4632 = vadd.f32 0.0, %v4631
      %v4633 = vpop.f32.mrf.mxu0
      %v4634 = vpop.f32.mrf.mxu0
      %v4635 = vadd.f32 0.0, %v4634
      %v4636 = vpop.f32.mrf.mxu0
      %4637 = vmatprep.mubr.bf16.mxu0 0
      %4638 = vmatmul.mubr.bf16.gmra.mxu0 %v4520
      %v4639 = vpop.f32.mrf.mxu0
      %v4640 = vadd.f32 0.0, %v4639
      %v4641 = vpop.f32.mrf.mxu0
      %v4642 = vpop.f32.mrf.mxu0
      %v4643 = vadd.f32 0.0, %v4642
      %v4644 = vpop.f32.mrf.mxu0
      %4645 = vmatprep.mubr.bf16.mxu0 0
      %4646 = vmatmul.mubr.bf16.gmra.mxu0 %v4523
      %v4647 = vpop.f32.mrf.mxu0
      %v4648 = vadd.f32 0.0, %v4647
      %v4649 = vpop.f32.mrf.mxu0
      %v4650 = vpop.f32.mrf.mxu0
      %v4651 = vadd.f32 0.0, %v4650
      %v4652 = vpop.f32.mrf.mxu0
      %4653 = vmatprep.mubr.bf16.mxu0 0
      %4654 = vmatmul.mubr.bf16.gmra.mxu0 %v4526
      %v4655 = vpop.f32.mrf.mxu0
      %v4656 = vadd.f32 0.0, %v4655
      %v4657 = vpop.f32.mrf.mxu0
      %v4658 = vpop.f32.mrf.mxu0
      %v4659 = vadd.f32 0.0, %v4658
      %v4660 = vpop.f32.mrf.mxu0
      %4661 = vmatprep.mubr.bf16.mxu0 0
      %4662 = vmatmul.mubr.bf16.gmra.mxu0 %v4529
      %v4663 = vpop.f32.mrf.mxu0
      %v4664 = vadd.f32 0.0, %v4663
      %v4665 = vpop.f32.mrf.mxu0
      %v4666 = vpop.f32.mrf.mxu0
      %v4667 = vadd.f32 0.0, %v4666
      %v4668 = vpop.f32.mrf.mxu0
      %4669 = vmatprep.mubr.bf16.mxu0 0
      %4670 = vmatmul.mubr.bf16.gmra.mxu0 %v4532
      %v4671 = vpop.f32.mrf.mxu0
      %v4672 = vadd.f32 0.0, %v4671
      %v4673 = vpop.f32.mrf.mxu0
      %v4674 = vpop.f32.mrf.mxu0
      %v4675 = vadd.f32 0.0, %v4674
      %v4676 = vpop.f32.mrf.mxu0
      %4677 = vmatprep.mubr.bf16.mxu0 0
      %4678 = vmatmul.mubr.bf16.gmra.mxu0 %v4535
      %v4679 = vpop.f32.mrf.mxu0
      %v4680 = vadd.f32 0.0, %v4679
      %v4681 = vpop.f32.mrf.mxu0
      %v4682 = vpop.f32.mrf.mxu0
      %v4683 = vadd.f32 0.0, %v4682
      %v4684 = vpop.f32.mrf.mxu0
      %4685 = vmatprep.mubr.bf16.mxu0 0
      %4686 = vmatmul.mubr.bf16.gmra.mxu0 %v4538
      %v4687 = vpop.f32.mrf.mxu0
      %v4688 = vadd.f32 0.0, %v4687
      %v4689 = vpop.f32.mrf.mxu0
      %v4690 = vpop.f32.mrf.mxu0
      %v4691 = vadd.f32 0.0, %v4690
      %v4692 = vpop.f32.mrf.mxu0
      %4693 = vmatprep.mubr.bf16.mxu0 0
      %4694 = vmatmul.mubr.bf16.gmra.mxu0 %v4541
      %v4695 = vpop.f32.mrf.mxu0
      %v4696 = vadd.f32 0.0, %v4695
      %v4697 = vpop.f32.mrf.mxu0
      %v4698 = vpop.f32.mrf.mxu0
      %v4699 = vadd.f32 0.0, %v4698
      %v4700 = vpop.f32.mrf.mxu0
      %4701 = vmatprep.mubr.bf16.mxu0 0
      %4702 = vmatmul.mubr.bf16.gmra.mxu0 %v4544
      %v4703 = vpop.f32.mrf.mxu0
      %v4704 = vadd.f32 0.0, %v4703
      %v4705 = vpop.f32.mrf.mxu0
      %v4706 = vpop.f32.mrf.mxu0
      %v4707 = vadd.f32 0.0, %v4706
      %v4708 = vpop.f32.mrf.mxu0
      %4709 = vdwg.mxu0
      %v4710 = vadd.f32 %v4240, %v4584
      %v4711 = vadd.f32 %v4241, %v4587
      %v4712 = vadd.f32 %v4242, %v4592
      %v4713 = vadd.f32 %v4243, %v4595
      %v4714 = vadd.f32 %v4244, %v4600
      %v4715 = vadd.f32 %v4245, %v4603
      %v4716 = vadd.f32 %v4246, %v4608
      %v4717 = vadd.f32 %v4247, %v4611
      %v4718 = vadd.f32 %v4248, %v4616
      %v4719 = vadd.f32 %v4249, %v4619
      %v4720 = vadd.f32 %v4250, %v4624
      %v4721 = vadd.f32 %v4251, %v4627
      %v4722 = vadd.f32 %v4252, %v4632
      %v4723 = vadd.f32 %v4253, %v4635
      %v4724 = vadd.f32 %v4254, %v4640
      %v4725 = vadd.f32 %v4255, %v4643
      %v4726 = vadd.f32 %v4256, %v4648
      %v4727 = vadd.f32 %v4257, %v4651
      %v4728 = vadd.f32 %v4258, %v4656
      %v4729 = vadd.f32 %v4259, %v4659
      %v4730 = vadd.f32 %v4260, %v4664
      %v4731 = vadd.f32 %v4261, %v4667
      %v4732 = vadd.f32 %v4262, %v4672
      %v4733 = vadd.f32 %v4263, %v4675
      %v4734 = vadd.f32 %v4264, %v4680
      %v4735 = vadd.f32 %v4265, %v4683
      %v4736 = vadd.f32 %v4266, %v4688
      %v4737 = vadd.f32 %v4267, %v4691
      %v4738 = vadd.f32 %v4268, %v4696
      %v4739 = vadd.f32 %v4269, %v4699
      %v4740 = vadd.f32 %v4270, %v4704
      %v4741 = vadd.f32 %v4271, %v4707
      %v4742 = vpack.c.bf16 %v4711, %v4710
      %v4743 = vpack.c.bf16 %v4713, %v4712
      %v4744 = vpack.c.bf16 %v4715, %v4714
      %v4745 = vpack.c.bf16 %v4717, %v4716
      %v4746 = vpack.c.bf16 %v4719, %v4718
      %v4747 = vpack.c.bf16 %v4721, %v4720
      %v4748 = vpack.c.bf16 %v4723, %v4722
      %v4749 = vpack.c.bf16 %v4725, %v4724
      %v4750 = vpack.c.bf16 %v4727, %v4726
      %v4751 = vpack.c.bf16 %v4729, %v4728
      %v4752 = vpack.c.bf16 %v4731, %v4730
      %v4753 = vpack.c.bf16 %v4733, %v4732
      %v4754 = vpack.c.bf16 %v4735, %v4734
      %v4755 = vpack.c.bf16 %v4737, %v4736
      %v4756 = vpack.c.bf16 %v4739, %v4738
      %v4757 = vpack.c.bf16 %v4741, %v4740
      %v4774 = vunpack.c.l.b16 %v4742
      %v4775 = vunpack.c.h.b16 %v4742
      %v4776 = vunpack.c.l.b16 %v4743
      %v4777 = vunpack.c.h.b16 %v4743
      %v4778 = vunpack.c.l.b16 %v4744
      %v4779 = vunpack.c.h.b16 %v4744
      %v4780 = vunpack.c.l.b16 %v4745
      %v4781 = vunpack.c.h.b16 %v4745
      %v4782 = vunpack.c.l.b16 %v4746
      %v4783 = vunpack.c.h.b16 %v4746
      %v4784 = vunpack.c.l.b16 %v4747
      %v4785 = vunpack.c.h.b16 %v4747
      %v4786 = vunpack.c.l.b16 %v4748
      %v4787 = vunpack.c.h.b16 %v4748
      %v4788 = vunpack.c.l.b16 %v4749
      %v4789 = vunpack.c.h.b16 %v4749
      %v4790 = vunpack.c.l.b16 %v4750
      %v4791 = vunpack.c.h.b16 %v4750
      %v4792 = vunpack.c.l.b16 %v4751
      %v4793 = vunpack.c.h.b16 %v4751
      %v4794 = vunpack.c.l.b16 %v4752
      %v4795 = vunpack.c.h.b16 %v4752
      %v4796 = vunpack.c.l.b16 %v4753
      %v4797 = vunpack.c.h.b16 %v4753
      %v4798 = vunpack.c.l.b16 %v4754
      %v4799 = vunpack.c.h.b16 %v4754
      %v4800 = vunpack.c.l.b16 %v4755
      %v4801 = vunpack.c.h.b16 %v4755
      %v4802 = vunpack.c.l.b16 %v4756
      %v4803 = vunpack.c.h.b16 %v4756
      %v4804 = vunpack.c.l.b16 %v4757
      %v4805 = vunpack.c.h.b16 %v4757
      %v4806 = vpack.c.b16 %v4774, %v4774
      %v4807 = vpack.c.b16 %v4775, %v4775
      %v4808 = vpack.c.b16 %v4776, %v4776
      %v4809 = vpack.c.b16 %v4777, %v4777
      %v4810 = vpack.c.b16 %v4778, %v4778
      %v4811 = vpack.c.b16 %v4779, %v4779
      %v4812 = vpack.c.b16 %v4780, %v4780
      %v4813 = vpack.c.b16 %v4781, %v4781
      %v4814 = vpack.c.b16 %v4782, %v4782
      %v4815 = vpack.c.b16 %v4783, %v4783
      %v4816 = vpack.c.b16 %v4784, %v4784
      %v4817 = vpack.c.b16 %v4785, %v4785
      %v4818 = vpack.c.b16 %v4786, %v4786
      %v4819 = vpack.c.b16 %v4787, %v4787
      %v4820 = vpack.c.b16 %v4788, %v4788
      %v4821 = vpack.c.b16 %v4789, %v4789
      %v4822 = vpack.c.b16 %v4790, %v4790
      %v4823 = vpack.c.b16 %v4791, %v4791
      %v4824 = vpack.c.b16 %v4792, %v4792
      %v4825 = vpack.c.b16 %v4793, %v4793
      %v4826 = vpack.c.b16 %v4794, %v4794
      %v4827 = vpack.c.b16 %v4795, %v4795
      %v4828 = vpack.c.b16 %v4796, %v4796
      %v4829 = vpack.c.b16 %v4797, %v4797
      %v4830 = vpack.c.b16 %v4798, %v4798
      %v4831 = vpack.c.b16 %v4799, %v4799
      %v4832 = vpack.c.b16 %v4800, %v4800
      %v4833 = vpack.c.b16 %v4801, %v4801
      %v4834 = vpack.c.b16 %v4802, %v4802
      %v4835 = vpack.c.b16 %v4803, %v4803
      %v4836 = vpack.c.b16 %v4804, %v4804
      %v4837 = vpack.c.b16 %v4805, %v4805
      %4870 = vst [vmem:[%s177] sm:$0xf] %v4806
      %4871 = vst [vmem:[%s177 + $0x4] sm:$0xf] %v4807
      %4872 = vst [vmem:[%s177 + $0x8] sm:$0xf] %v4808
      %4873 = vst [vmem:[%s177 + $0xc] sm:$0xf] %v4809
      %4874 = vst [vmem:[%s177 + $0x10] sm:$0xf] %v4810
      %4875 = vst [vmem:[%s177 + $0x14] sm:$0xf] %v4811
      %4876 = vst [vmem:[%s177 + $0x18] sm:$0xf] %v4812
      %4877 = vst [vmem:[%s177 + $0x1c] sm:$0xf] %v4813
      %4878 = vst [vmem:[%s177 + $0x20] sm:$0xf] %v4814
      %4879 = vst [vmem:[%s177 + $0x24] sm:$0xf] %v4815
      %4880 = vst [vmem:[%s177 + $0x28] sm:$0xf] %v4816
      %4881 = vst [vmem:[%s177 + $0x2c] sm:$0xf] %v4817
      %4882 = vst [vmem:[%s177 + $0x30] sm:$0xf] %v4818
      %4883 = vst [vmem:[%s177 + $0x34] sm:$0xf] %v4819
      %4884 = vst [vmem:[%s177 + $0x38] sm:$0xf] %v4820
      %4885 = vst [vmem:[%s177 + $0x3c] sm:$0xf] %v4821
      %4886 = vst [vmem:[%s177 + $0x40] sm:$0xf] %v4822
      %4887 = vst [vmem:[%s177 + $0x44] sm:$0xf] %v4823
      %4888 = vst [vmem:[%s177 + $0x48] sm:$0xf] %v4824
      %4889 = vst [vmem:[%s177 + $0x4c] sm:$0xf] %v4825
      %4890 = vst [vmem:[%s177 + $0x50] sm:$0xf] %v4826
      %4891 = vst [vmem:[%s177 + $0x54] sm:$0xf] %v4827
      %4892 = vst [vmem:[%s177 + $0x58] sm:$0xf] %v4828
      %4893 = vst [vmem:[%s177 + $0x5c] sm:$0xf] %v4829
      %4894 = vst [vmem:[%s177 + $0x60] sm:$0xf] %v4830
      %4895 = vst [vmem:[%s177 + $0x64] sm:$0xf] %v4831
      %4896 = vst [vmem:[%s177 + $0x68] sm:$0xf] %v4832
      %4897 = vst [vmem:[%s177 + $0x6c] sm:$0xf] %v4833
      %4898 = vst [vmem:[%s177 + $0x70] sm:$0xf] %v4834
      %4899 = vst [vmem:[%s177 + $0x74] sm:$0xf] %v4835
      %4900 = vst [vmem:[%s177 + $0x78] sm:$0xf] %v4836
      %4901 = vst [vmem:[%s177 + $0x7c] sm:$0xf] %v4837
      %v4902 = vadd.f32 %v4710, %v4711
      %v4903 = vadd.f32 %v4902, %v4712
      %v4904 = vadd.f32 %v4903, %v4713
      %v4905 = vadd.f32 %v4904, %v4714
      %v4906 = vadd.f32 %v4905, %v4715
      %v4907 = vadd.f32 %v4906, %v4716
      %v4908 = vadd.f32 %v4907, %v4717
      %v4909 = vadd.f32 %v4908, %v4718
      %v4910 = vadd.f32 %v4909, %v4719
      %v4911 = vadd.f32 %v4910, %v4720
      %v4912 = vadd.f32 %v4911, %v4721
      %v4913 = vadd.f32 %v4912, %v4722
      %v4914 = vadd.f32 %v4913, %v4723
      %v4915 = vadd.f32 %v4914, %v4724
      %v4916 = vadd.f32 %v4915, %v4725
      %v4917 = vadd.f32 %v4916, %v4726
      %v4918 = vadd.f32 %v4917, %v4727
      %v4919 = vadd.f32 %v4918, %v4728
      %v4920 = vadd.f32 %v4919, %v4729
      %v4921 = vadd.f32 %v4920, %v4730
      %v4922 = vadd.f32 %v4921, %v4731
      %v4923 = vadd.f32 %v4922, %v4732
      %v4924 = vadd.f32 %v4923, %v4733
      %v4925 = vadd.f32 %v4924, %v4734
      %v4926 = vadd.f32 %v4925, %v4735
      %v4927 = vadd.f32 %v4926, %v4736
      %v4928 = vadd.f32 %v4927, %v4737
      %v4929 = vadd.f32 %v4928, %v4738
      %v4930 = vadd.f32 %v4929, %v4739
      %v4931 = vadd.f32 %v4930, %v4740
      %v4932 = vadd.f32 %v4931, %v4741
      %v4933 = vrot.slane %v4932, 4
      %v4934 = vadd.f32 %v4932, %v4933
      %v4935 = vrot.slane %v4934, 2
      %v4936 = vadd.f32 %v4934, %v4935
      %v4937 = vrot.slane %v4936, 1
      %v4938 = vadd.f32 %v4936, %v4937
      %4939 = vst [vmem:[%s181] sm:$0x1] %v4938
      %v4940 = vmul.f32 %v4710, %v4710
      %v4941 = vmul.f32 %v4711, %v4711
      %v4942 = vmul.f32 %v4712, %v4712
      %v4943 = vmul.f32 %v4713, %v4713
      %v4944 = vmul.f32 %v4714, %v4714
      %v4945 = vmul.f32 %v4715, %v4715
      %v4946 = vmul.f32 %v4716, %v4716
      %v4947 = vmul.f32 %v4717, %v4717
      %v4948 = vmul.f32 %v4718, %v4718
      %v4949 = vmul.f32 %v4719, %v4719
      %v4950 = vmul.f32 %v4720, %v4720
      %v4951 = vmul.f32 %v4721, %v4721
      %v4952 = vmul.f32 %v4722, %v4722
      %v4953 = vmul.f32 %v4723, %v4723
      %v4954 = vmul.f32 %v4724, %v4724
      %v4955 = vmul.f32 %v4725, %v4725
      %v4956 = vmul.f32 %v4726, %v4726
      %v4957 = vmul.f32 %v4727, %v4727
      %v4958 = vmul.f32 %v4728, %v4728
      %v4959 = vmul.f32 %v4729, %v4729
      %v4960 = vmul.f32 %v4730, %v4730
      %v4961 = vmul.f32 %v4731, %v4731
      %v4962 = vmul.f32 %v4732, %v4732
      %v4963 = vmul.f32 %v4733, %v4733
      %v4964 = vmul.f32 %v4734, %v4734
      %v4965 = vmul.f32 %v4735, %v4735
      %v4966 = vmul.f32 %v4736, %v4736
      %v4967 = vmul.f32 %v4737, %v4737
      %v4968 = vmul.f32 %v4738, %v4738
      %v4969 = vmul.f32 %v4739, %v4739
      %v4970 = vmul.f32 %v4740, %v4740
      %v4971 = vmul.f32 %v4741, %v4741
      %v4972 = vadd.f32 %v4940, %v4941
      %v4973 = vadd.f32 %v4972, %v4942
      %v4974 = vadd.f32 %v4973, %v4943
      %v4975 = vadd.f32 %v4974, %v4944
      %v4976 = vadd.f32 %v4975, %v4945
      %v4977 = vadd.f32 %v4976, %v4946
      %v4978 = vadd.f32 %v4977, %v4947
      %v4979 = vadd.f32 %v4978, %v4948
      %v4980 = vadd.f32 %v4979, %v4949
      %v4981 = vadd.f32 %v4980, %v4950
      %v4982 = vadd.f32 %v4981, %v4951
      %v4983 = vadd.f32 %v4982, %v4952
      %v4984 = vadd.f32 %v4983, %v4953
      %v4985 = vadd.f32 %v4984, %v4954
      %v4986 = vadd.f32 %v4985, %v4955
      %v4987 = vadd.f32 %v4986, %v4956
      %v4988 = vadd.f32 %v4987, %v4957
      %v4989 = vadd.f32 %v4988, %v4958
      %v4990 = vadd.f32 %v4989, %v4959
      %v4991 = vadd.f32 %v4990, %v4960
      %v4992 = vadd.f32 %v4991, %v4961
      %v4993 = vadd.f32 %v4992, %v4962
      %v4994 = vadd.f32 %v4993, %v4963
      %v4995 = vadd.f32 %v4994, %v4964
      %v4996 = vadd.f32 %v4995, %v4965
      %v4997 = vadd.f32 %v4996, %v4966
      %v4998 = vadd.f32 %v4997, %v4967
      %v4999 = vadd.f32 %v4998, %v4968
      %v5000 = vadd.f32 %v4999, %v4969
      %v5001 = vadd.f32 %v5000, %v4970
      %v5002 = vadd.f32 %v5001, %v4971
      %v5003 = vrot.slane %v5002, 4
      %v5004 = vadd.f32 %v5002, %v5003
      %v5005 = vrot.slane %v5004, 2
      %v5006 = vadd.f32 %v5004, %v5005
      %v5007 = vrot.slane %v5006, 1
      %v5008 = vadd.f32 %v5006, %v5007
      %5009 = vst [vmem:[%s181 + $0x1] sm:$0x1] %v5008
      %p5010 = scmp.lt.s32.totalorder %s15, 1
      %s5011 = scalar_select %p5010, %s15, 1
      %s5012 = smul.addr %s5011, 32
      %s5013 = smul.addr %s5012, 4
      %s5014 = scalar_lea.vmem %s2, %s5013
      %p5015 = scmp.lt.s32.totalorder %s15, 1
      %s5016 = scalar_select %p5015, %s15, 1
      %s5017 = smul.addr %s5016, 2
      %s5018 = scalar_lea.vmem %s3, %s5017
      // Predicated region
      $region29: #{resblock_forward.4} parent=27 // pred_check
        %p5019 = pneg %p80
      $region30: #{resblock_forward.4} parent=27 // pred_check_branch
        %5021 = sbr.rel (%p5019) target = $region32
      $region31: #{resblock_forward.4} parent=27 // pred_region
        _
      $region32: #{resblock_forward.4} parent=27 // pred_fallthru
        _
      // Predicated region
      $region33: #{resblock_forward.4} parent=27 // pred_check
        %p5022 = pneg %p106
      $region34: #{resblock_forward.4} parent=27 // pred_check_branch
        %5024 = sbr.rel (%p5022) target = $region36
      $region35: #{resblock_forward.4} parent=27 // pred_region
        _
      $region36: #{resblock_forward.4} parent=27 // pred_fallthru
        _
    $region28: #{resblock_forward.4} parent=5 // pred_fallthru
      _
    %p5025 = scmp.le.s32.totalorder 2, %s10
    // Predicated region
    $region37: #{resblock_forward.4} parent=5 // pred_check
      %p5026 = pneg %p5025
    $region38: #{resblock_forward.4} parent=5 // pred_check_branch
      %5028 = sbr.rel (%p5026) target = $region40
    $region39: #{resblock_forward.4} parent=5 // pred_region
      %s5029 = ssub.s32 %s10, 2
      // Predicated region
      $region41: #{resblock_forward.4} parent=39 // pred_check
        %p5030 = pneg %p86
      $region42: #{resblock_forward.4} parent=39 // pred_check_branch
        %5032 = sbr.rel (%p5030) target = $region44
      $region43: #{resblock_forward.4} parent=39 // pred_region
        %p5033 = scmp.lt.s32.totalorder %s16, 1
        %s5034 = scalar_select %p5033, %s16, 1
        %s5035 = smul.addr %s5034, 32
        %s5036 = smul.addr %s5035, 4
        %s5037 = scalar_lea.vmem %s2, %s5036
      $region44: #{resblock_forward.4} parent=39 // pred_fallthru
        _
      // Predicated region
      $region45: #{resblock_forward.4} parent=39 // pred_check
        %p5038 = pneg %p112
      $region46: #{resblock_forward.4} parent=39 // pred_check_branch
        %5040 = sbr.rel (%p5038) target = $region48
      $region47: #{resblock_forward.4} parent=39 // pred_region
        %p5041 = scmp.lt.s32.totalorder %s16, 1
        %s5042 = scalar_select %p5041, %s16, 1
        %s5043 = smul.addr %s5042, 2
        %s5044 = scalar_lea.vmem %s3, %s5043
      $region48: #{resblock_forward.4} parent=39 // pred_fallthru
        _
    $region40: #{resblock_forward.4} parent=5 // pred_fallthru
      _
  $region6: #{resblock_forward.4} parent=0 // loop_footer
    %s14 = sadd.s32 1, %s10
  $region7: #{resblock_forward.4} parent=0 // loop_footer_branch
    %9 = sbr.rel target = $region3
  $region8: #{resblock_forward.4} parent=0 // loop_exit
    _

</llo_original>
